<compile_context>
chip_gen: v5e
topology: v5e:2x2
jax: 0.10.0
libtpu: 0.0.40
codegen_flags: <defaults>
</compile_context>

<pallas_src>
import jax
import jax.numpy as jnp
from jax import lax
from jax.experimental import pallas as pl
from jax.experimental.pallas import tpu as pltpu


def _round_up(n, m):
    return (n + m - 1) // m * m


def _make_predict_kernel(S, Cin, Cmid_pad):
    """Kernel processing one whole image per grid step."""
    Sp = S + 2                       # padded row width
    R_out = S * Sp                   # output rows incl. 2 garbage columns/row

    def kernel(x_ref, w1_ref, b1_ref, w2_ref, b2_ref, o_ref, acc_ref):
        # x_ref:  (1, Rin, Cin)        zero-padded image, rows flattened (stride Sp)
        # w1_ref: (9, Cin, Cmid_pad)   3x3 taps, BN scale folded in, zero-padded
        # b1_ref: (1, Cmid_pad)        fused conv1 bias + BN shift
        # w2_ref: (Cmid_pad, Cout_pad) 1x1 conv weights, zero-padded
        # b2_ref: (1, Cout_pad)
        # o_ref:  (1, R_out, Cout_pad) lane-dense output
        # acc_ref:(R_out, Cmid_pad)    f32 accumulator scratch
        xw = x_ref[0]                                      # (Rin, Cin)
        acc_ref[...] = jnp.zeros_like(acc_ref)
        for dy in range(3):
            for dx in range(3):
                t = dy * 3 + dx
                off = dy * Sp + dx                         # constant row offset
                xs = xw[off:off + R_out, :]                # (R_out, Cin)
                acc_ref[...] += jnp.dot(
                    xs, w1_ref[t], preferred_element_type=jnp.float32)
        h = acc_ref[...] + b1_ref[...]                     # folded BN bias (f32)
        h = jnp.where(h > 0, h, 0.1 * h)                   # LeakyReLU(0.1), f32
        out = jnp.dot(h.astype(w2_ref.dtype), w2_ref[...],
                      preferred_element_type=jnp.float32) + b2_ref[...]
        o_ref[0] = out.astype(o_ref.dtype)

    return kernel


def predict_pallas(x_nchw, params, num_classes, num_box,
                   compute_dtype=jnp.bfloat16):
    """x_nchw: (B, C, S, S) float32 -> (B, num_box, S, S, 5+num_classes)."""
    w1, b1, gamma, beta, rmean, rvar, w2, b2 = params
    B, Cin, S, _ = x_nchw.shape
    Cmid = w1.shape[-1]
    Cout = w2.shape[-1]
    nattr = 5 + num_classes
    assert Cout == num_box * nattr
    eps = 1e-5

    Sp = S + 2
    R_out = S * Sp
    # Largest tap offset is 2*Sp + 2; give the flattened image enough zero rows.
    Rin = _round_up(R_out + 2 * Sp + 2, 8)
    Cmid_pad = _round_up(Cmid, 128)
    Cout_pad = _round_up(Cout, 128)

    # ---- glue: NCHW -> NHWC, spatial zero-pad, flatten rows (no im2col) ----
    x = jnp.transpose(x_nchw, (0, 2, 3, 1))                       # (B, S, S, Cin)
    xp = jnp.pad(x, ((0, 0), (1, 1), (1, 1), (0, 0)))             # (B, Sp, Sp, Cin)
    xf = xp.reshape(B, Sp * Sp, Cin)
    xf = jnp.pad(xf, ((0, 0), (0, Rin - Sp * Sp), (0, 0)))        # (B, Rin, Cin)
    xf = xf.astype(compute_dtype)

    # ---- glue: fold conv1 bias + eval-mode BN into weights / bias ----
    bn_scale = gamma / jnp.sqrt(rvar + eps)                       # (Cmid,)
    w1_s = w1.reshape(9, Cin, Cmid) * bn_scale                    # scale folded into W1
    fused_bias = beta + (b1 - rmean) * bn_scale                   # (Cmid,)

    w1_p = jnp.zeros((9, Cin, Cmid_pad), jnp.float32).at[:, :, :Cmid].set(w1_s)
    b1_p = jnp.zeros((1, Cmid_pad), jnp.float32).at[0, :Cmid].set(fused_bias)
    w2_p = jnp.zeros((Cmid_pad, Cout_pad), jnp.float32).at[:Cmid, :Cout].set(w2)
    b2_p = jnp.zeros((1, Cout_pad), jnp.float32).at[0, :Cout].set(b2)
    w1_p = w1_p.astype(compute_dtype)
    w2_p = w2_p.astype(compute_dtype)

    kernel = _make_predict_kernel(S, Cin, Cmid_pad)

    out_pad = pl.pallas_call(
        kernel,
        out_shape=jax.ShapeDtypeStruct((B, R_out, Cout_pad), jnp.float32),
        grid_spec=pltpu.PrefetchScalarGridSpec(
            num_scalar_prefetch=0,
            grid=(B,),
            in_specs=[
                pl.BlockSpec((1, Rin, Cin), lambda b: (b, 0, 0)),
                pl.BlockSpec((9, Cin, Cmid_pad), lambda b: (0, 0, 0)),
                pl.BlockSpec((1, Cmid_pad), lambda b: (0, 0)),
                pl.BlockSpec((Cmid_pad, Cout_pad), lambda b: (0, 0)),
                pl.BlockSpec((1, Cout_pad), lambda b: (0, 0)),
            ],
            out_specs=pl.BlockSpec((1, R_out, Cout_pad), lambda b: (b, 0, 0)),
            scratch_shapes=[pltpu.VMEM((R_out, Cmid_pad), jnp.float32)],
        ),
        compiler_params=pltpu.CompilerParams(
            dimension_semantics=("parallel",)),
    )(xf, w1_p, b1_p, w2_p, b2_p)

    # ---- glue: drop padded lanes / garbage width columns, then reproduce
    #            torch's view(B, num_box, 5+C, S, S).permute(0,1,3,4,2) ----
    out = out_pad.reshape(B, S, Sp, Cout_pad)[:, :, :S, :Cout]    # (B, S, S, Cout)
    out = out.reshape(B, S, S, num_box, nattr)
    out = jnp.transpose(out, (0, 3, 1, 2, 4))                     # (B, box, S, S, 5+C)
    return out


def predict_reference(x_nchw, params, num_classes, num_box):
    """Pure-JAX reference (same eval-mode BN folding) for validation."""
    w1, b1, gamma, beta, rmean, rvar, w2, b2 = params
    B, Cin, S, _ = x_nchw.shape
    eps = 1e-5
    x = jnp.transpose(x_nchw, (0, 2, 3, 1))
    h = lax.conv_general_dilated(
        x, w1, window_strides=(1, 1), padding="SAME",
        dimension_numbers=("NHWC", "HWIO", "NHWC")) + b1
    h = (h - rmean) / jnp.sqrt(rvar + eps) * gamma + beta
    h = jnp.where(h > 0, h, 0.1 * h)
    o = lax.conv_general_dilated(
        h, w2.reshape(1, 1, *w2.shape), window_strides=(1, 1), padding="VALID",
        dimension_numbers=("NHWC", "HWIO", "NHWC")) + b2
    nattr = 5 + num_classes
    o = o.reshape(B, S, S, num_box, nattr)
    return jnp.transpose(o, (0, 3, 1, 2, 4))


if __name__ == "__main__":
    B, channels, S = 2, 8, 16
    num_classes, num_box = 3, 3
    Cmid = channels * 2
    Cout = (5 + num_classes) * num_box

    key = jax.random.PRNGKey(0)
    ks = jax.random.split(key, 8)
    # Deterministic synthetic parameters (HWIO conv layout).
    w1 = jax.random.normal(ks[0], (3, 3, channels, Cmid), jnp.float32) * 0.1
    b1 = jax.random.normal(ks[1], (Cmid,), jnp.float32) * 0.05
    gamma = 1.0 + 0.1 * jax.random.normal(ks[2], (Cmid,), jnp.float32)
    beta = 0.05 * jax.random.normal(ks[3], (Cmid,), jnp.float32)
    rmean = 0.1 * jax.random.normal(ks[4], (Cmid,), jnp.float32)
    rvar = 1.0 + 0.1 * jax.random.uniform(ks[5], (Cmid,), jnp.float32)
    w2 = jax.random.normal(ks[6], (Cmid, Cout), jnp.float32) * 0.1
    b2 = 0.05 * jax.random.normal(ks[7], (Cout,), jnp.float32)
    params = (w1, b1, gamma, beta, rmean, rvar, w2, b2)

    x = jax.random.normal(jax.random.PRNGKey(42), (B, channels, S, S), jnp.float32)

    ref = predict_reference(x, params, num_classes, num_box)

    # Performance path: bf16 matmul inputs, f32 accumulation / elementwise.
    out_bf16 = jax.block_until_ready(
        predict_pallas(x, params, num_classes, num_box,
                       compute_dtype=jnp.bfloat16))
    # Validation path: full f32.
    out_f32 = jax.block_until_ready(
        predict_pallas(x, params, num_classes, num_box,
                       compute_dtype=jnp.float32))

    assert out_bf16.shape == (B, num_box, S, S, 5 + num_classes), out_bf16.shape
    assert jnp.allclose(out_f32, ref, atol=1e-3, rtol=1e-3), \
        float(jnp.abs(out_f32 - ref).max())
    assert jnp.allclose(out_bf16, ref, atol=6e-2, rtol=6e-2), \
        float(jnp.abs(out_bf16 - ref).max())

    print("KERNEL_OK")
</pallas_src>

<mosaic_0001>
module attributes {stable_mosaic.version = 11 : i64} {
  func.func @kernel(%arg0: i32, %arg1: memref<1x328x8xbf16, #tpu.memory_space<vmem>>, %arg2: memref<9x8x128xbf16, #tpu.memory_space<vmem>>, %arg3: memref<1x128xf32, #tpu.memory_space<vmem>>, %arg4: memref<128x128xbf16, #tpu.memory_space<vmem>>, %arg5: memref<1x128xf32, #tpu.memory_space<vmem>>, %arg6: memref<1x288x128xf32, #tpu.memory_space<vmem>>, %arg7: memref<288x128xf32, #tpu.memory_space<vmem>>) attributes {dimension_semantics = [#tpu.dimension_semantics<parallel>], iteration_bounds = array<i64: 2>, scalar_prefetch = 0 : i64, scratch_operands = 1 : i64, tpu.core_type = #tpu.core_type<tc>, window_params = [{transform_indices = @transform_0, window_bounds = array<i64: 1, 328, 8>}, {pipeline_mode = #tpu.pipeline_mode<synchronous>, transform_indices = @transform_1, window_bounds = array<i64: 9, 8, 128>}, {pipeline_mode = #tpu.pipeline_mode<synchronous>, transform_indices = @transform_2, window_bounds = array<i64: 1, 128>}, {pipeline_mode = #tpu.pipeline_mode<synchronous>, transform_indices = @transform_3, window_bounds = array<i64: 128, 128>}, {pipeline_mode = #tpu.pipeline_mode<synchronous>, transform_indices = @transform_4, window_bounds = array<i64: 1, 128>}, {transform_indices = @transform_5, window_bounds = array<i64: 1, 288, 128>}]} {
    %c0 = arith.constant 0 : index
    %c0_0 = arith.constant 0 : index
    %c0_1 = arith.constant 0 : index
    %0 = vector.load %arg1[%c0, %c0_0, %c0_1] : memref<1x328x8xbf16, #tpu.memory_space<vmem>>, vector<1x328x8xbf16>
    %1 = vector.shape_cast %0 : vector<1x328x8xbf16> to vector<328x8xbf16>
    %cst = arith.constant 0.000000e+00 : f32
    %2 = vector.broadcast %cst : f32 to vector<288x128xf32>
    %c0_2 = arith.constant 0 : index
    %c0_3 = arith.constant 0 : index
    %3 = vector.load %arg7[%c0_2, %c0_3] : memref<288x128xf32, #tpu.memory_space<vmem>>, vector<288x128xf32>
    tpu.vector_store %arg7[%c0_2, %c0_3], %2 {strides = array<i32>} : memref<288x128xf32, #tpu.memory_space<vmem>>, vector<288x128xf32>,
    %4 = vector.extract_strided_slice %1 {offsets = [0, 0], sizes = [288, 8], strides = [1, 1]} : vector<328x8xbf16> to vector<288x8xbf16>
    %c0_4 = arith.constant 0 : index
    %c0_5 = arith.constant 0 : index
    %5 = vector.load %arg7[%c0_4, %c0_5] : memref<288x128xf32, #tpu.memory_space<vmem>>, vector<288x128xf32>
    %c0_6 = arith.constant 0 : index
    %c0_7 = arith.constant 0 : index
    %c0_8 = arith.constant 0 : index
    %6 = vector.load %arg2[%c0_6, %c0_7, %c0_8] : memref<9x8x128xbf16, #tpu.memory_space<vmem>>, vector<1x8x128xbf16>
    %7 = vector.shape_cast %6 : vector<1x8x128xbf16> to vector<8x128xbf16>
    %cst_9 = arith.constant dense<0.000000e+00> : vector<288x128xf32>
    %8 = tpu.matmul %4, %7, %cst_9 {dimension_numbers = #tpu.dot_dimension_numbers<[1], [0], [0], [1], [0, 0, 1, 1], [], []>} : vector<288x8xbf16>, vector<8x128xbf16>, vector<288x128xf32> -> vector<288x128xf32>
    %9 = arith.addf %5, %8 : vector<288x128xf32>
    %c0_10 = arith.constant 0 : index
    %c0_11 = arith.constant 0 : index
    %10 = vector.load %arg7[%c0_10, %c0_11] : memref<288x128xf32, #tpu.memory_space<vmem>>, vector<288x128xf32>
    tpu.vector_store %arg7[%c0_10, %c0_11], %9 {strides = array<i32>} : memref<288x128xf32, #tpu.memory_space<vmem>>, vector<288x128xf32>,
    %11 = vector.extract_strided_slice %1 {offsets = [1, 0], sizes = [288, 8], strides = [1, 1]} : vector<328x8xbf16> to vector<288x8xbf16>
    %c0_12 = arith.constant 0 : index
    %c0_13 = arith.constant 0 : index
    %12 = vector.load %arg7[%c0_12, %c0_13] : memref<288x128xf32, #tpu.memory_space<vmem>>, vector<288x128xf32>
    %c1 = arith.constant 1 : index
    %c0_14 = arith.constant 0 : index
    %c0_15 = arith.constant 0 : index
    %13 = vector.load %arg2[%c1, %c0_14, %c0_15] : memref<9x8x128xbf16, #tpu.memory_space<vmem>>, vector<1x8x128xbf16>
    %14 = vector.shape_cast %13 : vector<1x8x128xbf16> to vector<8x128xbf16>
    %cst_16 = arith.constant dense<0.000000e+00> : vector<288x128xf32>
    %15 = tpu.matmul %11, %14, %cst_16 {dimension_numbers = #tpu.dot_dimension_numbers<[1], [0], [0], [1], [0, 0, 1, 1], [], []>} : vector<288x8xbf16>, vector<8x128xbf16>, vector<288x128xf32> -> vector<288x128xf32>
    %16 = arith.addf %12, %15 : vector<288x128xf32>
    %c0_17 = arith.constant 0 : index
    %c0_18 = arith.constant 0 : index
    %17 = vector.load %arg7[%c0_17, %c0_18] : memref<288x128xf32, #tpu.memory_space<vmem>>, vector<288x128xf32>
    tpu.vector_store %arg7[%c0_17, %c0_18], %16 {strides = array<i32>} : memref<288x128xf32, #tpu.memory_space<vmem>>, vector<288x128xf32>,
    %18 = vector.extract_strided_slice %1 {offsets = [2, 0], sizes = [288, 8], strides = [1, 1]} : vector<328x8xbf16> to vector<288x8xbf16>
    %c0_19 = arith.constant 0 : index
    %c0_20 = arith.constant 0 : index
    %19 = vector.load %arg7[%c0_19, %c0_20] : memref<288x128xf32, #tpu.memory_space<vmem>>, vector<288x128xf32>
    %c2 = arith.constant 2 : index
    %c0_21 = arith.constant 0 : index
    %c0_22 = arith.constant 0 : index
    %20 = vector.load %arg2[%c2, %c0_21, %c0_22] : memref<9x8x128xbf16, #tpu.memory_space<vmem>>, vector<1x8x128xbf16>
    %21 = vector.shape_cast %20 : vector<1x8x128xbf16> to vector<8x128xbf16>
    %cst_23 = arith.constant dense<0.000000e+00> : vector<288x128xf32>
    %22 = tpu.matmul %18, %21, %cst_23 {dimension_numbers = #tpu.dot_dimension_numbers<[1], [0], [0], [1], [0, 0, 1, 1], [], []>} : vector<288x8xbf16>, vector<8x128xbf16>, vector<288x128xf32> -> vector<288x128xf32>
    %23 = arith.addf %19, %22 : vector<288x128xf32>
    %c0_24 = arith.constant 0 : index
    %c0_25 = arith.constant 0 : index
    %24 = vector.load %arg7[%c0_24, %c0_25] : memref<288x128xf32, #tpu.memory_space<vmem>>, vector<288x128xf32>
    tpu.vector_store %arg7[%c0_24, %c0_25], %23 {strides = array<i32>} : memref<288x128xf32, #tpu.memory_space<vmem>>, vector<288x128xf32>,
    %25 = vector.extract_strided_slice %1 {offsets = [18, 0], sizes = [288, 8], strides = [1, 1]} : vector<328x8xbf16> to vector<288x8xbf16>
    %c0_26 = arith.constant 0 : index
    %c0_27 = arith.constant 0 : index
    %26 = vector.load %arg7[%c0_26, %c0_27] : memref<288x128xf32, #tpu.memory_space<vmem>>, vector<288x128xf32>
    %c3 = arith.constant 3 : index
    %c0_28 = arith.constant 0 : index
    %c0_29 = arith.constant 0 : index
    %27 = vector.load %arg2[%c3, %c0_28, %c0_29] : memref<9x8x128xbf16, #tpu.memory_space<vmem>>, vector<1x8x128xbf16>
    %28 = vector.shape_cast %27 : vector<1x8x128xbf16> to vector<8x128xbf16>
    %cst_30 = arith.constant dense<0.000000e+00> : vector<288x128xf32>
    %29 = tpu.matmul %25, %28, %cst_30 {dimension_numbers = #tpu.dot_dimension_numbers<[1], [0], [0], [1], [0, 0, 1, 1], [], []>} : vector<288x8xbf16>, vector<8x128xbf16>, vector<288x128xf32> -> vector<288x128xf32>
    %30 = arith.addf %26, %29 : vector<288x128xf32>
    %c0_31 = arith.constant 0 : index
    %c0_32 = arith.constant 0 : index
    %31 = vector.load %arg7[%c0_31, %c0_32] : memref<288x128xf32, #tpu.memory_space<vmem>>, vector<288x128xf32>
    tpu.vector_store %arg7[%c0_31, %c0_32], %30 {strides = array<i32>} : memref<288x128xf32, #tpu.memory_space<vmem>>, vector<288x128xf32>,
    %32 = vector.extract_strided_slice %1 {offsets = [19, 0], sizes = [288, 8], strides = [1, 1]} : vector<328x8xbf16> to vector<288x8xbf16>
    %c0_33 = arith.constant 0 : index
    %c0_34 = arith.constant 0 : index
    %33 = vector.load %arg7[%c0_33, %c0_34] : memref<288x128xf32, #tpu.memory_space<vmem>>, vector<288x128xf32>
    %c4 = arith.constant 4 : index
    %c0_35 = arith.constant 0 : index
    %c0_36 = arith.constant 0 : index
    %34 = vector.load %arg2[%c4, %c0_35, %c0_36] : memref<9x8x128xbf16, #tpu.memory_space<vmem>>, vector<1x8x128xbf16>
    %35 = vector.shape_cast %34 : vector<1x8x128xbf16> to vector<8x128xbf16>
    %cst_37 = arith.constant dense<0.000000e+00> : vector<288x128xf32>
    %36 = tpu.matmul %32, %35, %cst_37 {dimension_numbers = #tpu.dot_dimension_numbers<[1], [0], [0], [1], [0, 0, 1, 1], [], []>} : vector<288x8xbf16>, vector<8x128xbf16>, vector<288x128xf32> -> vector<288x128xf32>
    %37 = arith.addf %33, %36 : vector<288x128xf32>
    %c0_38 = arith.constant 0 : index
    %c0_39 = arith.constant 0 : index
    %38 = vector.load %arg7[%c0_38, %c0_39] : memref<288x128xf32, #tpu.memory_space<vmem>>, vector<288x128xf32>
    tpu.vector_store %arg7[%c0_38, %c0_39], %37 {strides = array<i32>} : memref<288x128xf32, #tpu.memory_space<vmem>>, vector<288x128xf32>,
    %39 = vector.extract_strided_slice %1 {offsets = [20, 0], sizes = [288, 8], strides = [1, 1]} : vector<328x8xbf16> to vector<288x8xbf16>
    %c0_40 = arith.constant 0 : index
    %c0_41 = arith.constant 0 : index
    %40 = vector.load %arg7[%c0_40, %c0_41] : memref<288x128xf32, #tpu.memory_space<vmem>>, vector<288x128xf32>
    %c5 = arith.constant 5 : index
    %c0_42 = arith.constant 0 : index
    %c0_43 = arith.constant 0 : index
    %41 = vector.load %arg2[%c5, %c0_42, %c0_43] : memref<9x8x128xbf16, #tpu.memory_space<vmem>>, vector<1x8x128xbf16>
    %42 = vector.shape_cast %41 : vector<1x8x128xbf16> to vector<8x128xbf16>
    %cst_44 = arith.constant dense<0.000000e+00> : vector<288x128xf32>
    %43 = tpu.matmul %39, %42, %cst_44 {dimension_numbers = #tpu.dot_dimension_numbers<[1], [0], [0], [1], [0, 0, 1, 1], [], []>} : vector<288x8xbf16>, vector<8x128xbf16>, vector<288x128xf32> -> vector<288x128xf32>
    %44 = arith.addf %40, %43 : vector<288x128xf32>
    %c0_45 = arith.constant 0 : index
    %c0_46 = arith.constant 0 : index
    %45 = vector.load %arg7[%c0_45, %c0_46] : memref<288x128xf32, #tpu.memory_space<vmem>>, vector<288x128xf32>
    tpu.vector_store %arg7[%c0_45, %c0_46], %44 {strides = array<i32>} : memref<288x128xf32, #tpu.memory_space<vmem>>, vector<288x128xf32>,
    %46 = vector.extract_strided_slice %1 {offsets = [36, 0], sizes = [288, 8], strides = [1, 1]} : vector<328x8xbf16> to vector<288x8xbf16>
    %c0_47 = arith.constant 0 : index
    %c0_48 = arith.constant 0 : index
    %47 = vector.load %arg7[%c0_47, %c0_48] : memref<288x128xf32, #tpu.memory_space<vmem>>, vector<288x128xf32>
    %c6 = arith.constant 6 : index
    %c0_49 = arith.constant 0 : index
    %c0_50 = arith.constant 0 : index
    %48 = vector.load %arg2[%c6, %c0_49, %c0_50] : memref<9x8x128xbf16, #tpu.memory_space<vmem>>, vector<1x8x128xbf16>
    %49 = vector.shape_cast %48 : vector<1x8x128xbf16> to vector<8x128xbf16>
    %cst_51 = arith.constant dense<0.000000e+00> : vector<288x128xf32>
    %50 = tpu.matmul %46, %49, %cst_51 {dimension_numbers = #tpu.dot_dimension_numbers<[1], [0], [0], [1], [0, 0, 1, 1], [], []>} : vector<288x8xbf16>, vector<8x128xbf16>, vector<288x128xf32> -> vector<288x128xf32>
    %51 = arith.addf %47, %50 : vector<288x128xf32>
    %c0_52 = arith.constant 0 : index
    %c0_53 = arith.constant 0 : index
    %52 = vector.load %arg7[%c0_52, %c0_53] : memref<288x128xf32, #tpu.memory_space<vmem>>, vector<288x128xf32>
    tpu.vector_store %arg7[%c0_52, %c0_53], %51 {strides = array<i32>} : memref<288x128xf32, #tpu.memory_space<vmem>>, vector<288x128xf32>,
    %53 = vector.extract_strided_slice %1 {offsets = [37, 0], sizes = [288, 8], strides = [1, 1]} : vector<328x8xbf16> to vector<288x8xbf16>
    %c0_54 = arith.constant 0 : index
    %c0_55 = arith.constant 0 : index
    %54 = vector.load %arg7[%c0_54, %c0_55] : memref<288x128xf32, #tpu.memory_space<vmem>>, vector<288x128xf32>
    %c7 = arith.constant 7 : index
    %c0_56 = arith.constant 0 : index
    %c0_57 = arith.constant 0 : index
    %55 = vector.load %arg2[%c7, %c0_56, %c0_57] : memref<9x8x128xbf16, #tpu.memory_space<vmem>>, vector<1x8x128xbf16>
    %56 = vector.shape_cast %55 : vector<1x8x128xbf16> to vector<8x128xbf16>
    %cst_58 = arith.constant dense<0.000000e+00> : vector<288x128xf32>
    %57 = tpu.matmul %53, %56, %cst_58 {dimension_numbers = #tpu.dot_dimension_numbers<[1], [0], [0], [1], [0, 0, 1, 1], [], []>} : vector<288x8xbf16>, vector<8x128xbf16>, vector<288x128xf32> -> vector<288x128xf32>
    %58 = arith.addf %54, %57 : vector<288x128xf32>
    %c0_59 = arith.constant 0 : index
    %c0_60 = arith.constant 0 : index
    %59 = vector.load %arg7[%c0_59, %c0_60] : memref<288x128xf32, #tpu.memory_space<vmem>>, vector<288x128xf32>
    tpu.vector_store %arg7[%c0_59, %c0_60], %58 {strides = array<i32>} : memref<288x128xf32, #tpu.memory_space<vmem>>, vector<288x128xf32>,
    %60 = vector.extract_strided_slice %1 {offsets = [38, 0], sizes = [288, 8], strides = [1, 1]} : vector<328x8xbf16> to vector<288x8xbf16>
    %c0_61 = arith.constant 0 : index
    %c0_62 = arith.constant 0 : index
    %61 = vector.load %arg7[%c0_61, %c0_62] : memref<288x128xf32, #tpu.memory_space<vmem>>, vector<288x128xf32>
    %c8 = arith.constant 8 : index
    %c0_63 = arith.constant 0 : index
    %c0_64 = arith.constant 0 : index
    %62 = vector.load %arg2[%c8, %c0_63, %c0_64] : memref<9x8x128xbf16, #tpu.memory_space<vmem>>, vector<1x8x128xbf16>
    %63 = vector.shape_cast %62 : vector<1x8x128xbf16> to vector<8x128xbf16>
    %cst_65 = arith.constant dense<0.000000e+00> : vector<288x128xf32>
    %64 = tpu.matmul %60, %63, %cst_65 {dimension_numbers = #tpu.dot_dimension_numbers<[1], [0], [0], [1], [0, 0, 1, 1], [], []>} : vector<288x8xbf16>, vector<8x128xbf16>, vector<288x128xf32> -> vector<288x128xf32>
    %65 = arith.addf %61, %64 : vector<288x128xf32>
    %c0_66 = arith.constant 0 : index
    %c0_67 = arith.constant 0 : index
    %66 = vector.load %arg7[%c0_66, %c0_67] : memref<288x128xf32, #tpu.memory_space<vmem>>, vector<288x128xf32>
    tpu.vector_store %arg7[%c0_66, %c0_67], %65 {strides = array<i32>} : memref<288x128xf32, #tpu.memory_space<vmem>>, vector<288x128xf32>,
    %c0_68 = arith.constant 0 : index
    %c0_69 = arith.constant 0 : index
    %67 = vector.load %arg7[%c0_68, %c0_69] : memref<288x128xf32, #tpu.memory_space<vmem>>, vector<288x128xf32>
    %c0_70 = arith.constant 0 : index
    %c0_71 = arith.constant 0 : index
    %68 = vector.load %arg3[%c0_70, %c0_71] : memref<1x128xf32, #tpu.memory_space<vmem>>, vector<1x128xf32>
    %69 = vector.broadcast %68 : vector<1x128xf32> to vector<288x128xf32>
    %70 = arith.addf %67, %69 : vector<288x128xf32>
    %cst_72 = arith.constant 0.000000e+00 : f32
    %71 = vector.broadcast %cst_72 : f32 to vector<288x128xf32>
    %72 = arith.cmpf ogt, %70, %71 : vector<288x128xf32>
    %cst_73 = arith.constant 1.000000e-01 : f32
    %73 = vector.broadcast %cst_73 : f32 to vector<288x128xf32>
    %74 = arith.mulf %73, %70 : vector<288x128xf32>
    %75 = arith.select %72, %70, %74 : vector<288x128xi1>, vector<288x128xf32>
    %76 = arith.truncf %75 : vector<288x128xf32> to vector<288x128xbf16>
    %c0_74 = arith.constant 0 : index
    %c0_75 = arith.constant 0 : index
    %77 = vector.load %arg4[%c0_74, %c0_75] : memref<128x128xbf16, #tpu.memory_space<vmem>>, vector<128x128xbf16>
    %cst_76 = arith.constant dense<0.000000e+00> : vector<288x128xf32>
    %78 = tpu.matmul %76, %77, %cst_76 {dimension_numbers = #tpu.dot_dimension_numbers<[1], [0], [0], [1], [0, 0, 1, 1], [], []>} : vector<288x128xbf16>, vector<128x128xbf16>, vector<288x128xf32> -> vector<288x128xf32>
    %c0_77 = arith.constant 0 : index
    %c0_78 = arith.constant 0 : index
    %79 = vector.load %arg5[%c0_77, %c0_78] : memref<1x128xf32, #tpu.memory_space<vmem>>, vector<1x128xf32>
    %80 = vector.broadcast %79 : vector<1x128xf32> to vector<288x128xf32>
    %81 = arith.addf %78, %80 : vector<288x128xf32>
    %c0_79 = arith.constant 0 : index
    %c0_80 = arith.constant 0 : index
    %c0_81 = arith.constant 0 : index
    %82 = vector.load %arg6[%c0_79, %c0_80, %c0_81] : memref<1x288x128xf32, #tpu.memory_space<vmem>>, vector<1x288x128xf32>
    %83 = vector.shape_cast %82 : vector<1x288x128xf32> to vector<288x128xf32>
    %84 = vector.shape_cast %81 : vector<288x128xf32> to vector<1x288x128xf32>
    tpu.vector_store %arg6[%c0_79, %c0_80, %c0_81], %84 {strides = array<i32>} : memref<1x288x128xf32, #tpu.memory_space<vmem>>, vector<1x288x128xf32>,
    return
  }
  func.func @transform_0(%arg0: i32) -> (i32, i32, i32) {
    %c0_i32 = arith.constant 0 : i32
    %c0_i32_0 = arith.constant 0 : i32
    %c0_i32_1 = arith.constant 0 : i32
    return %arg0, %c0_i32, %c0_i32_0 : i32, i32, i32
  }
  func.func @transform_1(%arg0: i32) -> (i32, i32, i32) {
    %c0_i32 = arith.constant 0 : i32
    %c0_i32_0 = arith.constant 0 : i32
    %c0_i32_1 = arith.constant 0 : i32
    %c0_i32_2 = arith.constant 0 : i32
    return %c0_i32, %c0_i32_0, %c0_i32_1 : i32, i32, i32
  }
  func.func @transform_2(%arg0: i32) -> (i32, i32) {
    %c0_i32 = arith.constant 0 : i32
    %c0_i32_0 = arith.constant 0 : i32
    %c0_i32_1 = arith.constant 0 : i32
    return %c0_i32, %c0_i32_0 : i32, i32
  }
  func.func @transform_3(%arg0: i32) -> (i32, i32) {
    %c0_i32 = arith.constant 0 : i32
    %c0_i32_0 = arith.constant 0 : i32
    %c0_i32_1 = arith.constant 0 : i32
    return %c0_i32, %c0_i32_0 : i32, i32
  }
  func.func @transform_4(%arg0: i32) -> (i32, i32) {
    %c0_i32 = arith.constant 0 : i32
    %c0_i32_0 = arith.constant 0 : i32
    %c0_i32_1 = arith.constant 0 : i32
    return %c0_i32, %c0_i32_0 : i32, i32
  }
  func.func @transform_5(%arg0: i32) -> (i32, i32, i32) {
    %c0_i32 = arith.constant 0 : i32
    %c0_i32_0 = arith.constant 0 : i32
    %c0_i32_1 = arith.constant 0 : i32
    return %arg0, %c0_i32, %c0_i32_0 : i32, i32, i32
  }
}

</mosaic_0001>

<llo_original>
// kernel: tpu_custom_call.1
$region0: #{tpu_custom_call.1}
  #allocation0 [shape = 'u32[]', space=smem, size = 0x4, offset = 0x4, fixed_abs, tag = 'smem constant byte address 0x4 - core index']
  #allocation1 [shape = 'u32[72,128]{1,0:T(1,128)}', space=vmem, size = 0x9000, scoped, tag = 'internal scratch']
  #allocation2 [shape = 'f32[288,128]{1,0:T(8,128)}', space=vmem, size = 0x24000, scoped, tag = 'scratch operand']
  %s0 = inlined_call_operand.vmem [shape: bf16[2,328,8], index: 0, kind: input, shape index: {}]
  %s1 = inlined_call_operand.vmem [shape: bf16[9,8,128], index: 1, kind: input, shape index: {}]
  %s2 = inlined_call_operand.vmem [shape: f32[1,128], index: 2, kind: input, shape index: {}]
  %s3 = inlined_call_operand.vmem [shape: bf16[128,128], index: 3, kind: input, shape index: {}]
  %s4 = inlined_call_operand.vmem [shape: f32[1,128], index: 4, kind: input, shape index: {}]
  %s5 = inlined_call_operand.hbm [shape: f32[2,288,128], index: 5, kind: output, shape index: {}]
  %s6 = sld [smem:[#allocation0]]
  $region53: #{tpu_custom_call.1} parent=0
    _
  %s8 = ssub.s32 1, %s6
  %s9 = scalar_select 0, %s8, %s6
  $region1: #{tpu_custom_call.1} parent=0
    #allocation3 [shape = 'u8[294912]{0}', space=vmem, size = 0x48000, scoped, tag = 'output window, operand 0']
    #allocation4 [shape = 's32[2]{0}', space=sflag, size = 0x8, scoped, tag = 'scoped memory for tpu_custom_call.1']
    %10 = vsyncpa [#allocation4], 0
    %s11 = scalar_lea.sflag [#allocation4], 1
    %12 = vsyncpa %s11, 0
    loop: start=0, step=1, limit=4
    $region2: #{tpu_custom_call.1} parent=1 // loop_pre_header
      _
    $region3: #{tpu_custom_call.1} parent=1 // loop_header
      %s14 = sphi 0, %s18
      %p15 = scmp.ge.s32.totalorder %s14, 4
      %s24 = sphi 0, %s26
      %s27 = sphi 0, %s24
      %s28 = sphi 0, %s27
      %s44 = sphi 0, %s28
      %s48 = sphi 0, %s48
      %s50 = sphi 0, %s48
      %s51 = sphi 0, %s50
      %s65 = sphi 0, %s51
      %s69 = sphi 0, %s69
      %s71 = sphi 0, %s69
      %s72 = sphi 0, %s71
      %s86 = sphi 0, %s72
      %s90 = sphi 0, %s90
      %s92 = sphi 0, %s90
      %s93 = sphi 0, %s92
      %s107 = sphi 0, %s93
      %s111 = sphi 0, %s111
      %s113 = sphi 0, %s111
      %s114 = sphi 0, %s113
      %s128 = sphi 0, %s114
      %s134 = sphi 0, %s136
      %s137 = sphi 0, %s134
      %s138 = sphi 0, %s137
      %s154 = sphi 0, %s138
    $region4: #{tpu_custom_call.1} parent=1 // loop_header_branch
      %17 = sbr.rel (%p15) target = $region8
    $region5: #{tpu_custom_call.1} parent=1 // loop_body
      %s19 = ssub.s32 %s14, 1
      %s20 = ssub.s32 %s14, 2
      %s21 = sadd.s32 %s14, 1
      %s22 = ssub.s32 %s14, %s21
      %p23 = scmp.eq.s32.totalorder %s22, 0
      %s25 = sadd.s32 %s24, 1
      %s26 = scalar_select %p23, %s24, %s25
      %p29 = pneg %p23
      %p30 = scmp.eq.s32.totalorder %s14, 1
      %p31 = por %p29, %p30
      %p32 = scmp.ne.s32.totalorder %s24, %s27
      %p33 = scmp.eq.s32.totalorder %s14, 0
      %p34 = por %p32, %p33
      %p35 = scmp.ne.s32.totalorder %s24, %s27
      %p36 = scmp.eq.s32.totalorder %s19, 1
      %p37 = por %p35, %p36
      %p38 = scmp.ne.s32.totalorder %s27, %s28
      %p39 = scmp.eq.s32.totalorder %s19, 0
      %p40 = por %p38, %p39
      %p41 = scmp.ne.s32.totalorder %s27, %s28
      %p42 = scmp.eq.s32.totalorder %s20, 1
      %p43 = por %p41, %p42
      %p45 = scmp.ne.s32.totalorder %s28, %s44
      %p46 = scmp.eq.s32.totalorder %s20, 0
      %p47 = por %p45, %p46
      %s49 = sadd.s32 %s48, 1
      %p52 = scmp.eq.s32.totalorder %s14, 1
      %p53 = scmp.ne.s32.totalorder %s48, %s50
      %p54 = scmp.eq.s32.totalorder %s14, 0
      %p55 = por %p53, %p54
      %p56 = scmp.ne.s32.totalorder %s48, %s50
      %p57 = scmp.eq.s32.totalorder %s19, 1
      %p58 = por %p56, %p57
      %p59 = scmp.ne.s32.totalorder %s50, %s51
      %p60 = scmp.eq.s32.totalorder %s19, 0
      %p61 = por %p59, %p60
      %p62 = scmp.ne.s32.totalorder %s50, %s51
      %p63 = scmp.eq.s32.totalorder %s20, 1
      %p64 = por %p62, %p63
      %p66 = scmp.ne.s32.totalorder %s51, %s65
      %p67 = scmp.eq.s32.totalorder %s20, 0
      %p68 = por %p66, %p67
      %s70 = sadd.s32 %s69, 1
      %p73 = scmp.eq.s32.totalorder %s14, 1
      %p74 = scmp.ne.s32.totalorder %s69, %s71
      %p75 = scmp.eq.s32.totalorder %s14, 0
      %p76 = por %p74, %p75
      %p77 = scmp.ne.s32.totalorder %s69, %s71
      %p78 = scmp.eq.s32.totalorder %s19, 1
      %p79 = por %p77, %p78
      %p80 = scmp.ne.s32.totalorder %s71, %s72
      %p81 = scmp.eq.s32.totalorder %s19, 0
      %p82 = por %p80, %p81
      %p83 = scmp.ne.s32.totalorder %s71, %s72
      %p84 = scmp.eq.s32.totalorder %s20, 1
      %p85 = por %p83, %p84
      %p87 = scmp.ne.s32.totalorder %s72, %s86
      %p88 = scmp.eq.s32.totalorder %s20, 0
      %p89 = por %p87, %p88
      %s91 = sadd.s32 %s90, 1
      %p94 = scmp.eq.s32.totalorder %s14, 1
      %p95 = scmp.ne.s32.totalorder %s90, %s92
      %p96 = scmp.eq.s32.totalorder %s14, 0
      %p97 = por %p95, %p96
      %p98 = scmp.ne.s32.totalorder %s90, %s92
      %p99 = scmp.eq.s32.totalorder %s19, 1
      %p100 = por %p98, %p99
      %p101 = scmp.ne.s32.totalorder %s92, %s93
      %p102 = scmp.eq.s32.totalorder %s19, 0
      %p103 = por %p101, %p102
      %p104 = scmp.ne.s32.totalorder %s92, %s93
      %p105 = scmp.eq.s32.totalorder %s20, 1
      %p106 = por %p104, %p105
      %p108 = scmp.ne.s32.totalorder %s93, %s107
      %p109 = scmp.eq.s32.totalorder %s20, 0
      %p110 = por %p108, %p109
      %s112 = sadd.s32 %s111, 1
      %p115 = scmp.eq.s32.totalorder %s14, 1
      %p116 = scmp.ne.s32.totalorder %s111, %s113
      %p117 = scmp.eq.s32.totalorder %s14, 0
      %p118 = por %p116, %p117
      %p119 = scmp.ne.s32.totalorder %s111, %s113
      %p120 = scmp.eq.s32.totalorder %s19, 1
      %p121 = por %p119, %p120
      %p122 = scmp.ne.s32.totalorder %s113, %s114
      %p123 = scmp.eq.s32.totalorder %s19, 0
      %p124 = por %p122, %p123
      %p125 = scmp.ne.s32.totalorder %s113, %s114
      %p126 = scmp.eq.s32.totalorder %s20, 1
      %p127 = por %p125, %p126
      %p129 = scmp.ne.s32.totalorder %s114, %s128
      %p130 = scmp.eq.s32.totalorder %s20, 0
      %p131 = por %p129, %p130
      %s132 = ssub.s32 %s14, %s21
      %p133 = scmp.eq.s32.totalorder %s132, 0
      %s135 = sadd.s32 %s134, 1
      %s136 = scalar_select %p133, %s134, %s135
      %p139 = pneg %p133
      %p140 = scmp.eq.s32.totalorder %s14, 1
      %p141 = por %p139, %p140
      %p142 = scmp.ne.s32.totalorder %s134, %s137
      %p143 = scmp.eq.s32.totalorder %s14, 0
      %p144 = por %p142, %p143
      %p145 = scmp.ne.s32.totalorder %s134, %s137
      %p146 = scmp.eq.s32.totalorder %s19, 1
      %p147 = por %p145, %p146
      %p148 = scmp.ne.s32.totalorder %s137, %s138
      %p149 = scmp.eq.s32.totalorder %s19, 0
      %p150 = por %p148, %p149
      %p151 = scmp.ne.s32.totalorder %s137, %s138
      %p152 = scmp.eq.s32.totalorder %s20, 1
      %p153 = por %p151, %p152
      %p155 = scmp.ne.s32.totalorder %s138, %s154
      %p156 = scmp.eq.s32.totalorder %s20, 0
      %p157 = por %p155, %p156
      %p158 = scmp.le.s32.totalorder 1, %s14
      %p159 = scmp.lt.s32.totalorder %s14, 3
      %p160 = pnand %p158, %p159
      %p161 = pneg %p160
      // Predicated region
      $region9: #{tpu_custom_call.1} parent=5 // pred_check
        _
      $region10: #{tpu_custom_call.1} parent=5 // pred_check_branch
        %163 = sbr.rel (%p160) target = $region12
      $region11: #{tpu_custom_call.1} parent=5 // pred_region
        %s164 = ssub.s32 %s14, 1
        // Predicated region
        $region13: #{tpu_custom_call.1} parent=11 // pred_check
          %p165 = pneg %p61
        $region14: #{tpu_custom_call.1} parent=11 // pred_check_branch
          %167 = sbr.rel (%p165) target = $region16
        $region15: #{tpu_custom_call.1} parent=11 // pred_region
          _
        $region16: #{tpu_custom_call.1} parent=11 // pred_fallthru
          _
        // Predicated region
        $region17: #{tpu_custom_call.1} parent=11 // pred_check
          %p168 = pneg %p82
        $region18: #{tpu_custom_call.1} parent=11 // pred_check_branch
          %170 = sbr.rel (%p168) target = $region20
        $region19: #{tpu_custom_call.1} parent=11 // pred_region
          _
        $region20: #{tpu_custom_call.1} parent=11 // pred_fallthru
          _
        // Predicated region
        $region21: #{tpu_custom_call.1} parent=11 // pred_check
          %p171 = pneg %p103
        $region22: #{tpu_custom_call.1} parent=11 // pred_check_branch
          %173 = sbr.rel (%p171) target = $region24
        $region23: #{tpu_custom_call.1} parent=11 // pred_region
          _
        $region24: #{tpu_custom_call.1} parent=11 // pred_fallthru
          _
        // Predicated region
        $region25: #{tpu_custom_call.1} parent=11 // pred_check
          %p174 = pneg %p124
        $region26: #{tpu_custom_call.1} parent=11 // pred_check_branch
          %176 = sbr.rel (%p174) target = $region28
        $region27: #{tpu_custom_call.1} parent=11 // pred_region
          _
        $region28: #{tpu_custom_call.1} parent=11 // pred_fallthru
          _
      $region12: #{tpu_custom_call.1} parent=5 // pred_fallthru
        _
      %p177 = scmp.lt.s32.totalorder %s14, 2
      // Predicated region
      $region29: #{tpu_custom_call.1} parent=5 // pred_check
        %p178 = pneg %p177
      $region30: #{tpu_custom_call.1} parent=5 // pred_check_branch
        %180 = sbr.rel (%p178) target = $region32
      $region31: #{tpu_custom_call.1} parent=5 // pred_region
        // Predicated region
        $region33: #{tpu_custom_call.1} parent=31 // pred_check
          %p181 = pneg %p34
        $region34: #{tpu_custom_call.1} parent=31 // pred_check_branch
          %183 = sbr.rel (%p181) target = $region36
        $region35: #{tpu_custom_call.1} parent=31 // pred_region
          %p184 = scmp.lt.s32.totalorder %s14, 1
          %s185 = scalar_select %p184, %s14, 1
          %s186 = smul.addr %s185, 41
          %s187 = smul.addr %s186, 4
          %s188 = scalar_lea.vmem %s0, %s187
        $region36: #{tpu_custom_call.1} parent=31 // pred_fallthru
          _
      $region32: #{tpu_custom_call.1} parent=5 // pred_fallthru
        _
      %p189 = scmp.le.s32.totalorder 1, %s14
      %p190 = scmp.lt.s32.totalorder %s14, 3
      %p191 = pnand %p189, %p190
      %p192 = pneg %p191
      // Predicated region
      $region37: #{tpu_custom_call.1} parent=5 // pred_check
        _
      $region38: #{tpu_custom_call.1} parent=5 // pred_check_branch
        %194 = sbr.rel (%p191) target = $region40
      $region39: #{tpu_custom_call.1} parent=5 // pred_region
        %s195 = ssub.s32 %s14, 1
        %p196 = scmp.lt.s32.totalorder %s19, 1
        %s197 = scalar_select %p196, %s19, 1
        %s198 = smul.addr %s197, 41
        %s199 = smul.addr %s198, 4
        %s200 = scalar_lea.vmem %s0, %s199
        %p201 = pneg %p40
        %p202 = pneg %p37
        %p203 = pneg %p61
        %p204 = pneg %p58
        %p205 = pneg %p82
        %p206 = pneg %p79
        %p207 = pneg %p103
        %p208 = pneg %p100
        %p209 = pneg %p124
        %p210 = pneg %p121
        %p211 = pneg %p150
        %p212 = pneg %p147
        %s213 = sand.u32 %s137, 1
        %s214 = scalar_lea.sflag [#allocation4], %s213
        %s215 = sand.u32 %s137, 1
        %s216 = smul.addr %s215, 288
        %s217 = scalar_lea.vmem [#allocation3], %s216
        %p218 = scmp.lt.s32.totalorder %s19, 1
        %s219 = scalar_select %p218, %s19, 1
        %s220 = smul.addr %s219, 41
        %s221 = smul.addr %s220, 4
        %s222 = scalar_lea.vmem %s0, %s221
        %v224 = vld [vmem:[%s222] sm:$0xf]
        %v225 = vld [vmem:[%s222 + $0x4] sm:$0xf]
        %v226 = vld [vmem:[%s222 + $0x8] sm:$0xf]
        %v227 = vld [vmem:[%s222 + $0xc] sm:$0xf]
        %v228 = vld [vmem:[%s222 + $0x10] sm:$0xf]
        %v229 = vld [vmem:[%s222 + $0x14] sm:$0xf]
        %v230 = vld [vmem:[%s222 + $0x18] sm:$0xf]
        %v231 = vld [vmem:[%s222 + $0x1c] sm:$0xf]
        %v232 = vld [vmem:[%s222 + $0x20] sm:$0xf]
        %v233 = vld [vmem:[%s222 + $0x24] sm:$0xf]
        %v234 = vld [vmem:[%s222 + $0x28] sm:$0xf]
        %v235 = vld [vmem:[%s222 + $0x2c] sm:$0xf]
        %v236 = vld [vmem:[%s222 + $0x30] sm:$0xf]
        %v237 = vld [vmem:[%s222 + $0x34] sm:$0xf]
        %v238 = vld [vmem:[%s222 + $0x38] sm:$0xf]
        %v239 = vld [vmem:[%s222 + $0x3c] sm:$0xf]
        %v240 = vld [vmem:[%s222 + $0x40] sm:$0xf]
        %v241 = vld [vmem:[%s222 + $0x44] sm:$0xf]
        %v242 = vld [vmem:[%s222 + $0x48] sm:$0xf]
        %v243 = vld [vmem:[%s222 + $0x4c] sm:$0xf]
        %v244 = vld [vmem:[%s222 + $0x50] sm:$0xf]
        %v245 = vld [vmem:[%s222 + $0x54] sm:$0xf]
        %v246 = vld [vmem:[%s222 + $0x58] sm:$0xf]
        %v247 = vld [vmem:[%s222 + $0x5c] sm:$0xf]
        %v248 = vld [vmem:[%s222 + $0x60] sm:$0xf]
        %v249 = vld [vmem:[%s222 + $0x64] sm:$0xf]
        %v250 = vld [vmem:[%s222 + $0x68] sm:$0xf]
        %v251 = vld [vmem:[%s222 + $0x6c] sm:$0xf]
        %v252 = vld [vmem:[%s222 + $0x70] sm:$0xf]
        %v253 = vld [vmem:[%s222 + $0x74] sm:$0xf]
        %v254 = vld [vmem:[%s222 + $0x78] sm:$0xf]
        %v255 = vld [vmem:[%s222 + $0x7c] sm:$0xf]
        %v256 = vld [vmem:[%s222 + $0x80] sm:$0xf]
        %v257 = vld [vmem:[%s222 + $0x84] sm:$0xf]
        %v258 = vld [vmem:[%s222 + $0x88] sm:$0xf]
        %v259 = vld [vmem:[%s222 + $0x8c] sm:$0xf]
        %v260 = vld [vmem:[%s222 + $0x90] sm:$0xf]
        %v261 = vld [vmem:[%s222 + $0x94] sm:$0xf]
        %v262 = vld [vmem:[%s222 + $0x98] sm:$0xf]
        %v263 = vld [vmem:[%s222 + $0x9c] sm:$0xf]
        %v264 = vld [vmem:[%s222 + $0xa0] sm:$0xf]
        %265 = vst [vmem:[#allocation2] sm:$0xff] 0.0
        %266 = vst [vmem:[#allocation2 + $0x8] sm:$0xff] 0.0
        %267 = vst [vmem:[#allocation2 + $0x10] sm:$0xff] 0.0
        %268 = vst [vmem:[#allocation2 + $0x18] sm:$0xff] 0.0
        %269 = vst [vmem:[#allocation2 + $0x20] sm:$0xff] 0.0
        %270 = vst [vmem:[#allocation2 + $0x28] sm:$0xff] 0.0
        %271 = vst [vmem:[#allocation2 + $0x30] sm:$0xff] 0.0
        %272 = vst [vmem:[#allocation2 + $0x38] sm:$0xff] 0.0
        %273 = vst [vmem:[#allocation2 + $0x40] sm:$0xff] 0.0
        %274 = vst [vmem:[#allocation2 + $0x48] sm:$0xff] 0.0
        %275 = vst [vmem:[#allocation2 + $0x50] sm:$0xff] 0.0
        %276 = vst [vmem:[#allocation2 + $0x58] sm:$0xff] 0.0
        %277 = vst [vmem:[#allocation2 + $0x60] sm:$0xff] 0.0
        %278 = vst [vmem:[#allocation2 + $0x68] sm:$0xff] 0.0
        %279 = vst [vmem:[#allocation2 + $0x70] sm:$0xff] 0.0
        %280 = vst [vmem:[#allocation2 + $0x78] sm:$0xff] 0.0
        %281 = vst [vmem:[#allocation2 + $0x80] sm:$0xff] 0.0
        %282 = vst [vmem:[#allocation2 + $0x88] sm:$0xff] 0.0
        %283 = vst [vmem:[#allocation2 + $0x90] sm:$0xff] 0.0
        %284 = vst [vmem:[#allocation2 + $0x98] sm:$0xff] 0.0
        %285 = vst [vmem:[#allocation2 + $0xa0] sm:$0xff] 0.0
        %286 = vst [vmem:[#allocation2 + $0xa8] sm:$0xff] 0.0
        %287 = vst [vmem:[#allocation2 + $0xb0] sm:$0xff] 0.0
        %288 = vst [vmem:[#allocation2 + $0xb8] sm:$0xff] 0.0
        %289 = vst [vmem:[#allocation2 + $0xc0] sm:$0xff] 0.0
        %290 = vst [vmem:[#allocation2 + $0xc8] sm:$0xff] 0.0
        %291 = vst [vmem:[#allocation2 + $0xd0] sm:$0xff] 0.0
        %292 = vst [vmem:[#allocation2 + $0xd8] sm:$0xff] 0.0
        %293 = vst [vmem:[#allocation2 + $0xe0] sm:$0xff] 0.0
        %294 = vst [vmem:[#allocation2 + $0xe8] sm:$0xff] 0.0
        %295 = vst [vmem:[#allocation2 + $0xf0] sm:$0xff] 0.0
        %296 = vst [vmem:[#allocation2 + $0xf8] sm:$0xff] 0.0
        %297 = vst [vmem:[#allocation2 + $0x100] sm:$0xff] 0.0
        %298 = vst [vmem:[#allocation2 + $0x108] sm:$0xff] 0.0
        %299 = vst [vmem:[#allocation2 + $0x110] sm:$0xff] 0.0
        %300 = vst [vmem:[#allocation2 + $0x118] sm:$0xff] 0.0
        %v301 = vld [vmem:[#allocation2] sm:$0xff]
        %v302 = vld [vmem:[#allocation2 + $0x8] sm:$0xff]
        %v303 = vld [vmem:[#allocation2 + $0x10] sm:$0xff]
        %v304 = vld [vmem:[#allocation2 + $0x18] sm:$0xff]
        %v305 = vld [vmem:[#allocation2 + $0x20] sm:$0xff]
        %v306 = vld [vmem:[#allocation2 + $0x28] sm:$0xff]
        %v307 = vld [vmem:[#allocation2 + $0x30] sm:$0xff]
        %v308 = vld [vmem:[#allocation2 + $0x38] sm:$0xff]
        %v309 = vld [vmem:[#allocation2 + $0x40] sm:$0xff]
        %v310 = vld [vmem:[#allocation2 + $0x48] sm:$0xff]
        %v311 = vld [vmem:[#allocation2 + $0x50] sm:$0xff]
        %v312 = vld [vmem:[#allocation2 + $0x58] sm:$0xff]
        %v313 = vld [vmem:[#allocation2 + $0x60] sm:$0xff]
        %v314 = vld [vmem:[#allocation2 + $0x68] sm:$0xff]
        %v315 = vld [vmem:[#allocation2 + $0x70] sm:$0xff]
        %v316 = vld [vmem:[#allocation2 + $0x78] sm:$0xff]
        %v317 = vld [vmem:[#allocation2 + $0x80] sm:$0xff]
        %v318 = vld [vmem:[#allocation2 + $0x88] sm:$0xff]
        %v319 = vld [vmem:[#allocation2 + $0x90] sm:$0xff]
        %v320 = vld [vmem:[#allocation2 + $0x98] sm:$0xff]
        %v321 = vld [vmem:[#allocation2 + $0xa0] sm:$0xff]
        %v322 = vld [vmem:[#allocation2 + $0xa8] sm:$0xff]
        %v323 = vld [vmem:[#allocation2 + $0xb0] sm:$0xff]
        %v324 = vld [vmem:[#allocation2 + $0xb8] sm:$0xff]
        %v325 = vld [vmem:[#allocation2 + $0xc0] sm:$0xff]
        %v326 = vld [vmem:[#allocation2 + $0xc8] sm:$0xff]
        %v327 = vld [vmem:[#allocation2 + $0xd0] sm:$0xff]
        %v328 = vld [vmem:[#allocation2 + $0xd8] sm:$0xff]
        %v329 = vld [vmem:[#allocation2 + $0xe0] sm:$0xff]
        %v330 = vld [vmem:[#allocation2 + $0xe8] sm:$0xff]
        %v331 = vld [vmem:[#allocation2 + $0xf0] sm:$0xff]
        %v332 = vld [vmem:[#allocation2 + $0xf8] sm:$0xff]
        %v333 = vld [vmem:[#allocation2 + $0x100] sm:$0xff]
        %v334 = vld [vmem:[#allocation2 + $0x108] sm:$0xff]
        %v335 = vld [vmem:[#allocation2 + $0x110] sm:$0xff]
        %v336 = vld [vmem:[#allocation2 + $0x118] sm:$0xff]
        %v337 = vld [vmem:[%s1] sm:$0xf]
        %v374 = vunpack.c.l.b16 %v224
        %v375 = vunpack.c.l.b16 %v225
        %v376 = vunpack.c.l.b16 %v226
        %v377 = vunpack.c.l.b16 %v227
        %v378 = vunpack.c.l.b16 %v228
        %v379 = vunpack.c.l.b16 %v229
        %v380 = vunpack.c.l.b16 %v230
        %v381 = vunpack.c.l.b16 %v231
        %v382 = vunpack.c.l.b16 %v232
        %v383 = vunpack.c.l.b16 %v233
        %v384 = vunpack.c.l.b16 %v234
        %v385 = vunpack.c.l.b16 %v235
        %v386 = vunpack.c.l.b16 %v236
        %v387 = vunpack.c.l.b16 %v237
        %v388 = vunpack.c.l.b16 %v238
        %v389 = vunpack.c.l.b16 %v239
        %v390 = vunpack.c.l.b16 %v240
        %v391 = vunpack.c.l.b16 %v241
        %v392 = vunpack.c.l.b16 %v242
        %v393 = vunpack.c.l.b16 %v243
        %v394 = vunpack.c.l.b16 %v244
        %v395 = vunpack.c.l.b16 %v245
        %v396 = vunpack.c.l.b16 %v246
        %v397 = vunpack.c.l.b16 %v247
        %v398 = vunpack.c.l.b16 %v248
        %v399 = vunpack.c.l.b16 %v249
        %v400 = vunpack.c.l.b16 %v250
        %v401 = vunpack.c.l.b16 %v251
        %v402 = vunpack.c.l.b16 %v252
        %v403 = vunpack.c.l.b16 %v253
        %v404 = vunpack.c.l.b16 %v254
        %v405 = vunpack.c.l.b16 %v255
        %v406 = vunpack.c.l.b16 %v256
        %v407 = vunpack.c.l.b16 %v257
        %v408 = vunpack.c.l.b16 %v258
        %v409 = vunpack.c.l.b16 %v259
        %v410 = vpack.c.b16 %v375, %v374
        %v411 = vpack.c.b16 %v377, %v376
        %v412 = vpack.c.b16 %v379, %v378
        %v413 = vpack.c.b16 %v381, %v380
        %v414 = vpack.c.b16 %v383, %v382
        %v415 = vpack.c.b16 %v385, %v384
        %v416 = vpack.c.b16 %v387, %v386
        %v417 = vpack.c.b16 %v389, %v388
        %v418 = vpack.c.b16 %v391, %v390
        %v419 = vpack.c.b16 %v393, %v392
        %v420 = vpack.c.b16 %v395, %v394
        %v421 = vpack.c.b16 %v397, %v396
        %v422 = vpack.c.b16 %v399, %v398
        %v423 = vpack.c.b16 %v401, %v400
        %v424 = vpack.c.b16 %v403, %v402
        %v425 = vpack.c.b16 %v405, %v404
        %v426 = vpack.c.b16 %v407, %v406
        %v427 = vpack.c.b16 %v409, %v408
        %vm428 = vcmask 64512
        %v430 = vsel %vm428, %v410, 0
        %v433 = vsel %vm428, %v411, 0
        %v436 = vsel %vm428, %v412, 0
        %v439 = vsel %vm428, %v413, 0
        %v442 = vsel %vm428, %v414, 0
        %v445 = vsel %vm428, %v415, 0
        %v448 = vsel %vm428, %v416, 0
        %v451 = vsel %vm428, %v417, 0
        %v454 = vsel %vm428, %v418, 0
        %v457 = vsel %vm428, %v419, 0
        %v460 = vsel %vm428, %v420, 0
        %v463 = vsel %vm428, %v421, 0
        %v466 = vsel %vm428, %v422, 0
        %v469 = vsel %vm428, %v423, 0
        %v472 = vsel %vm428, %v424, 0
        %v475 = vsel %vm428, %v425, 0
        %v478 = vsel %vm428, %v426, 0
        %v481 = vsel %vm428, %v427, 0
        %vm483 = vcmask 1043456
        %v485 = vsel %vm483, %v337, 0
        %487 = vmatpush.bf16.msra.mxu0 0
        %488 = vmatpush.bf16.msra.mxu0 0
        %489 = vmatpush.bf16.msra.mxu0 0
        %490 = vmatpush.bf16.msra.mxu0 0
        %491 = vmatpush.bf16.msra.mxu0 0
        %492 = vmatpush.bf16.msra.mxu0 0
        %493 = vmatpush.bf16.msra.mxu0 0
        %494 = vmatpush.bf16.msra.mxu0 %v485
        %495 = vmatmul.bf16.gmra.mxu0 %v430
        %v496 = vpop.f32.mrf.mxu0
        %v497 = vadd.f32 0.0, %v496
        %v498 = vpop.f32.mrf.mxu0
        %v499 = vadd.f32 0.0, %v498
        %500 = vmatmul.bf16.gmra.mxu0 %v433
        %v501 = vpop.f32.mrf.mxu0
        %v502 = vadd.f32 0.0, %v501
        %v503 = vpop.f32.mrf.mxu0
        %v504 = vadd.f32 0.0, %v503
        %505 = vmatmul.bf16.gmra.mxu0 %v436
        %v506 = vpop.f32.mrf.mxu0
        %v507 = vadd.f32 0.0, %v506
        %v508 = vpop.f32.mrf.mxu0
        %v509 = vadd.f32 0.0, %v508
        %510 = vmatmul.bf16.gmra.mxu0 %v439
        %v511 = vpop.f32.mrf.mxu0
        %v512 = vadd.f32 0.0, %v511
        %v513 = vpop.f32.mrf.mxu0
        %v514 = vadd.f32 0.0, %v513
        %515 = vmatmul.bf16.gmra.mxu0 %v442
        %v516 = vpop.f32.mrf.mxu0
        %v517 = vadd.f32 0.0, %v516
        %v518 = vpop.f32.mrf.mxu0
        %v519 = vadd.f32 0.0, %v518
        %520 = vmatmul.bf16.gmra.mxu0 %v445
        %v521 = vpop.f32.mrf.mxu0
        %v522 = vadd.f32 0.0, %v521
        %v523 = vpop.f32.mrf.mxu0
        %v524 = vadd.f32 0.0, %v523
        %525 = vmatmul.bf16.gmra.mxu0 %v448
        %v526 = vpop.f32.mrf.mxu0
        %v527 = vadd.f32 0.0, %v526
        %v528 = vpop.f32.mrf.mxu0
        %v529 = vadd.f32 0.0, %v528
        %530 = vmatmul.bf16.gmra.mxu0 %v451
        %v531 = vpop.f32.mrf.mxu0
        %v532 = vadd.f32 0.0, %v531
        %v533 = vpop.f32.mrf.mxu0
        %v534 = vadd.f32 0.0, %v533
        %535 = vmatmul.bf16.gmra.mxu0 %v454
        %v536 = vpop.f32.mrf.mxu0
        %v537 = vadd.f32 0.0, %v536
        %v538 = vpop.f32.mrf.mxu0
        %v539 = vadd.f32 0.0, %v538
        %540 = vmatmul.bf16.gmra.mxu0 %v457
        %v541 = vpop.f32.mrf.mxu0
        %v542 = vadd.f32 0.0, %v541
        %v543 = vpop.f32.mrf.mxu0
        %v544 = vadd.f32 0.0, %v543
        %545 = vmatmul.bf16.gmra.mxu0 %v460
        %v546 = vpop.f32.mrf.mxu0
        %v547 = vadd.f32 0.0, %v546
        %v548 = vpop.f32.mrf.mxu0
        %v549 = vadd.f32 0.0, %v548
        %550 = vmatmul.bf16.gmra.mxu0 %v463
        %v551 = vpop.f32.mrf.mxu0
        %v552 = vadd.f32 0.0, %v551
        %v553 = vpop.f32.mrf.mxu0
        %v554 = vadd.f32 0.0, %v553
        %555 = vmatmul.bf16.gmra.mxu0 %v466
        %v556 = vpop.f32.mrf.mxu0
        %v557 = vadd.f32 0.0, %v556
        %v558 = vpop.f32.mrf.mxu0
        %v559 = vadd.f32 0.0, %v558
        %560 = vmatmul.bf16.gmra.mxu0 %v469
        %v561 = vpop.f32.mrf.mxu0
        %v562 = vadd.f32 0.0, %v561
        %v563 = vpop.f32.mrf.mxu0
        %v564 = vadd.f32 0.0, %v563
        %565 = vmatmul.bf16.gmra.mxu0 %v472
        %v566 = vpop.f32.mrf.mxu0
        %v567 = vadd.f32 0.0, %v566
        %v568 = vpop.f32.mrf.mxu0
        %v569 = vadd.f32 0.0, %v568
        %570 = vmatmul.bf16.gmra.mxu0 %v475
        %v571 = vpop.f32.mrf.mxu0
        %v572 = vadd.f32 0.0, %v571
        %v573 = vpop.f32.mrf.mxu0
        %v574 = vadd.f32 0.0, %v573
        %575 = vmatmul.bf16.gmra.mxu0 %v478
        %v576 = vpop.f32.mrf.mxu0
        %v577 = vadd.f32 0.0, %v576
        %v578 = vpop.f32.mrf.mxu0
        %v579 = vadd.f32 0.0, %v578
        %580 = vmatmul.bf16.gmra.mxu0 %v481
        %v581 = vpop.f32.mrf.mxu0
        %v582 = vadd.f32 0.0, %v581
        %v583 = vpop.f32.mrf.mxu0
        %v584 = vadd.f32 0.0, %v583
        %585 = vdwg.mxu0
        %v586 = vadd.f32 %v301, %v497
        %v587 = vadd.f32 %v302, %v499
        %v588 = vadd.f32 %v303, %v502
        %v589 = vadd.f32 %v304, %v504
        %v590 = vadd.f32 %v305, %v507
        %v591 = vadd.f32 %v306, %v509
        %v592 = vadd.f32 %v307, %v512
        %v593 = vadd.f32 %v308, %v514
        %v594 = vadd.f32 %v309, %v517
        %v595 = vadd.f32 %v310, %v519
        %v596 = vadd.f32 %v311, %v522
        %v597 = vadd.f32 %v312, %v524
        %v598 = vadd.f32 %v313, %v527
        %v599 = vadd.f32 %v314, %v529
        %v600 = vadd.f32 %v315, %v532
        %v601 = vadd.f32 %v316, %v534
        %v602 = vadd.f32 %v317, %v537
        %v603 = vadd.f32 %v318, %v539
        %v604 = vadd.f32 %v319, %v542
        %v605 = vadd.f32 %v320, %v544
        %v606 = vadd.f32 %v321, %v547
        %v607 = vadd.f32 %v322, %v549
        %v608 = vadd.f32 %v323, %v552
        %v609 = vadd.f32 %v324, %v554
        %v610 = vadd.f32 %v325, %v557
        %v611 = vadd.f32 %v326, %v559
        %v612 = vadd.f32 %v327, %v562
        %v613 = vadd.f32 %v328, %v564
        %v614 = vadd.f32 %v329, %v567
        %v615 = vadd.f32 %v330, %v569
        %v616 = vadd.f32 %v331, %v572
        %v617 = vadd.f32 %v332, %v574
        %v618 = vadd.f32 %v333, %v577
        %v619 = vadd.f32 %v334, %v579
        %v620 = vadd.f32 %v335, %v582
        %v621 = vadd.f32 %v336, %v584
        %622 = vst [vmem:[#allocation2] sm:$0xff] %v586
        %623 = vst [vmem:[#allocation2 + $0x8] sm:$0xff] %v587
        %624 = vst [vmem:[#allocation2 + $0x10] sm:$0xff] %v588
        %625 = vst [vmem:[#allocation2 + $0x18] sm:$0xff] %v589
        %626 = vst [vmem:[#allocation2 + $0x20] sm:$0xff] %v590
        %627 = vst [vmem:[#allocation2 + $0x28] sm:$0xff] %v591
        %628 = vst [vmem:[#allocation2 + $0x30] sm:$0xff] %v592
        %629 = vst [vmem:[#allocation2 + $0x38] sm:$0xff] %v593
        %630 = vst [vmem:[#allocation2 + $0x40] sm:$0xff] %v594
        %631 = vst [vmem:[#allocation2 + $0x48] sm:$0xff] %v595
        %632 = vst [vmem:[#allocation2 + $0x50] sm:$0xff] %v596
        %633 = vst [vmem:[#allocation2 + $0x58] sm:$0xff] %v597
        %634 = vst [vmem:[#allocation2 + $0x60] sm:$0xff] %v598
        %635 = vst [vmem:[#allocation2 + $0x68] sm:$0xff] %v599
        %636 = vst [vmem:[#allocation2 + $0x70] sm:$0xff] %v600
        %637 = vst [vmem:[#allocation2 + $0x78] sm:$0xff] %v601
        %638 = vst [vmem:[#allocation2 + $0x80] sm:$0xff] %v602
        %639 = vst [vmem:[#allocation2 + $0x88] sm:$0xff] %v603
        %640 = vst [vmem:[#allocation2 + $0x90] sm:$0xff] %v604
        %641 = vst [vmem:[#allocation2 + $0x98] sm:$0xff] %v605
        %642 = vst [vmem:[#allocation2 + $0xa0] sm:$0xff] %v606
        %643 = vst [vmem:[#allocation2 + $0xa8] sm:$0xff] %v607
        %644 = vst [vmem:[#allocation2 + $0xb0] sm:$0xff] %v608
        %645 = vst [vmem:[#allocation2 + $0xb8] sm:$0xff] %v609
        %646 = vst [vmem:[#allocation2 + $0xc0] sm:$0xff] %v610
        %647 = vst [vmem:[#allocation2 + $0xc8] sm:$0xff] %v611
        %648 = vst [vmem:[#allocation2 + $0xd0] sm:$0xff] %v612
        %649 = vst [vmem:[#allocation2 + $0xd8] sm:$0xff] %v613
        %650 = vst [vmem:[#allocation2 + $0xe0] sm:$0xff] %v614
        %651 = vst [vmem:[#allocation2 + $0xe8] sm:$0xff] %v615
        %652 = vst [vmem:[#allocation2 + $0xf0] sm:$0xff] %v616
        %653 = vst [vmem:[#allocation2 + $0xf8] sm:$0xff] %v617
        %654 = vst [vmem:[#allocation2 + $0x100] sm:$0xff] %v618
        %655 = vst [vmem:[#allocation2 + $0x108] sm:$0xff] %v619
        %656 = vst [vmem:[#allocation2 + $0x110] sm:$0xff] %v620
        %657 = vst [vmem:[#allocation2 + $0x118] sm:$0xff] %v621
        %v658 = vld [vmem:[#allocation2] sm:$0xff]
        %v659 = vld [vmem:[#allocation2 + $0x8] sm:$0xff]
        %v660 = vld [vmem:[#allocation2 + $0x10] sm:$0xff]
        %v661 = vld [vmem:[#allocation2 + $0x18] sm:$0xff]
        %v662 = vld [vmem:[#allocation2 + $0x20] sm:$0xff]
        %v663 = vld [vmem:[#allocation2 + $0x28] sm:$0xff]
        %v664 = vld [vmem:[#allocation2 + $0x30] sm:$0xff]
        %v665 = vld [vmem:[#allocation2 + $0x38] sm:$0xff]
        %v666 = vld [vmem:[#allocation2 + $0x40] sm:$0xff]
        %v667 = vld [vmem:[#allocation2 + $0x48] sm:$0xff]
        %v668 = vld [vmem:[#allocation2 + $0x50] sm:$0xff]
        %v669 = vld [vmem:[#allocation2 + $0x58] sm:$0xff]
        %v670 = vld [vmem:[#allocation2 + $0x60] sm:$0xff]
        %v671 = vld [vmem:[#allocation2 + $0x68] sm:$0xff]
        %v672 = vld [vmem:[#allocation2 + $0x70] sm:$0xff]
        %v673 = vld [vmem:[#allocation2 + $0x78] sm:$0xff]
        %v674 = vld [vmem:[#allocation2 + $0x80] sm:$0xff]
        %v675 = vld [vmem:[#allocation2 + $0x88] sm:$0xff]
        %v676 = vld [vmem:[#allocation2 + $0x90] sm:$0xff]
        %v677 = vld [vmem:[#allocation2 + $0x98] sm:$0xff]
        %v678 = vld [vmem:[#allocation2 + $0xa0] sm:$0xff]
        %v679 = vld [vmem:[#allocation2 + $0xa8] sm:$0xff]
        %v680 = vld [vmem:[#allocation2 + $0xb0] sm:$0xff]
        %v681 = vld [vmem:[#allocation2 + $0xb8] sm:$0xff]
        %v682 = vld [vmem:[#allocation2 + $0xc0] sm:$0xff]
        %v683 = vld [vmem:[#allocation2 + $0xc8] sm:$0xff]
        %v684 = vld [vmem:[#allocation2 + $0xd0] sm:$0xff]
        %v685 = vld [vmem:[#allocation2 + $0xd8] sm:$0xff]
        %v686 = vld [vmem:[#allocation2 + $0xe0] sm:$0xff]
        %v687 = vld [vmem:[#allocation2 + $0xe8] sm:$0xff]
        %v688 = vld [vmem:[#allocation2 + $0xf0] sm:$0xff]
        %v689 = vld [vmem:[#allocation2 + $0xf8] sm:$0xff]
        %v690 = vld [vmem:[#allocation2 + $0x100] sm:$0xff]
        %v691 = vld [vmem:[#allocation2 + $0x108] sm:$0xff]
        %v692 = vld [vmem:[#allocation2 + $0x110] sm:$0xff]
        %v693 = vld [vmem:[#allocation2 + $0x118] sm:$0xff]
        %s694 = scalar_lea.vmem %s1, 4
        %v695 = vld [vmem:[%s694] sm:$0xf]
        %v697 = vunpack.c.l.b16 %v260
        %v698 = vpack.c.b16 %v697, %v697
        %vm699 = vsmask.f32 7424
        %v700 = vshrl.u32 %v410, 16
        %v702 = vshll.u32 %v410, 16
        %v704 = vrot.slane %v702, 1
        %v705 = vor.u32 %v700, %v704
        %v706 = vshll.u32 %v411, 16
        %v708 = vrot.slane %v706, 1
        %v709 = vsel %vm699, %v705, %v708
        %v710 = vshrl.u32 %v411, 16
        %v712 = vor.u32 %v710, %v708
        %v713 = vshll.u32 %v412, 16
        %v715 = vrot.slane %v713, 1
        %v716 = vsel %vm699, %v712, %v715
        %v717 = vshrl.u32 %v412, 16
        %v719 = vor.u32 %v717, %v715
        %v720 = vshll.u32 %v413, 16
        %v722 = vrot.slane %v720, 1
        %v723 = vsel %vm699, %v719, %v722
        %v724 = vshrl.u32 %v413, 16
        %v726 = vor.u32 %v724, %v722
        %v727 = vshll.u32 %v414, 16
        %v729 = vrot.slane %v727, 1
        %v730 = vsel %vm699, %v726, %v729
        %v731 = vshrl.u32 %v414, 16
        %v733 = vor.u32 %v731, %v729
        %v734 = vshll.u32 %v415, 16
        %v736 = vrot.slane %v734, 1
        %v737 = vsel %vm699, %v733, %v736
        %v738 = vshrl.u32 %v415, 16
        %v740 = vor.u32 %v738, %v736
        %v741 = vshll.u32 %v416, 16
        %v743 = vrot.slane %v741, 1
        %v744 = vsel %vm699, %v740, %v743
        %v745 = vshrl.u32 %v416, 16
        %v747 = vor.u32 %v745, %v743
        %v748 = vshll.u32 %v417, 16
        %v750 = vrot.slane %v748, 1
        %v751 = vsel %vm699, %v747, %v750
        %v752 = vshrl.u32 %v417, 16
        %v754 = vor.u32 %v752, %v750
        %v755 = vshll.u32 %v418, 16
        %v757 = vrot.slane %v755, 1
        %v758 = vsel %vm699, %v754, %v757
        %v759 = vshrl.u32 %v418, 16
        %v761 = vor.u32 %v759, %v757
        %v762 = vshll.u32 %v419, 16
        %v764 = vrot.slane %v762, 1
        %v765 = vsel %vm699, %v761, %v764
        %v766 = vshrl.u32 %v419, 16
        %v768 = vor.u32 %v766, %v764
        %v769 = vshll.u32 %v420, 16
        %v771 = vrot.slane %v769, 1
        %v772 = vsel %vm699, %v768, %v771
        %v773 = vshrl.u32 %v420, 16
        %v775 = vor.u32 %v773, %v771
        %v776 = vshll.u32 %v421, 16
        %v778 = vrot.slane %v776, 1
        %v779 = vsel %vm699, %v775, %v778
        %v780 = vshrl.u32 %v421, 16
        %v782 = vor.u32 %v780, %v778
        %v783 = vshll.u32 %v422, 16
        %v785 = vrot.slane %v783, 1
        %v786 = vsel %vm699, %v782, %v785
        %v787 = vshrl.u32 %v422, 16
        %v789 = vor.u32 %v787, %v785
        %v790 = vshll.u32 %v423, 16
        %v792 = vrot.slane %v790, 1
        %v793 = vsel %vm699, %v789, %v792
        %v794 = vshrl.u32 %v423, 16
        %v796 = vor.u32 %v794, %v792
        %v797 = vshll.u32 %v424, 16
        %v799 = vrot.slane %v797, 1
        %v800 = vsel %vm699, %v796, %v799
        %v801 = vshrl.u32 %v424, 16
        %v803 = vor.u32 %v801, %v799
        %v804 = vshll.u32 %v425, 16
        %v806 = vrot.slane %v804, 1
        %v807 = vsel %vm699, %v803, %v806
        %v808 = vshrl.u32 %v425, 16
        %v810 = vor.u32 %v808, %v806
        %v811 = vshll.u32 %v426, 16
        %v813 = vrot.slane %v811, 1
        %v814 = vsel %vm699, %v810, %v813
        %v815 = vshrl.u32 %v426, 16
        %v817 = vor.u32 %v815, %v813
        %v818 = vshll.u32 %v427, 16
        %v820 = vrot.slane %v818, 1
        %v821 = vsel %vm699, %v817, %v820
        %v822 = vshrl.u32 %v427, 16
        %v824 = vor.u32 %v822, %v820
        %v826 = vshll.u32 %v698, 16
        %v828 = vrot.slane %v826, 1
        %v829 = vsel %vm699, %v824, %v828
        %v831 = vsel %vm428, %v709, 0
        %v834 = vsel %vm428, %v716, 0
        %v837 = vsel %vm428, %v723, 0
        %v840 = vsel %vm428, %v730, 0
        %v843 = vsel %vm428, %v737, 0
        %v846 = vsel %vm428, %v744, 0
        %v849 = vsel %vm428, %v751, 0
        %v852 = vsel %vm428, %v758, 0
        %v855 = vsel %vm428, %v765, 0
        %v858 = vsel %vm428, %v772, 0
        %v861 = vsel %vm428, %v779, 0
        %v864 = vsel %vm428, %v786, 0
        %v867 = vsel %vm428, %v793, 0
        %v870 = vsel %vm428, %v800, 0
        %v873 = vsel %vm428, %v807, 0
        %v876 = vsel %vm428, %v814, 0
        %v879 = vsel %vm428, %v821, 0
        %v882 = vsel %vm428, %v829, 0
        %v885 = vsel %vm483, %v695, 0
        %887 = vmatpush.bf16.msra.mxu0 0
        %888 = vmatpush.bf16.msra.mxu0 0
        %889 = vmatpush.bf16.msra.mxu0 0
        %890 = vmatpush.bf16.msra.mxu0 0
        %891 = vmatpush.bf16.msra.mxu0 0
        %892 = vmatpush.bf16.msra.mxu0 0
        %893 = vmatpush.bf16.msra.mxu0 0
        %894 = vmatpush.bf16.msra.mxu0 %v885
        %895 = vmatmul.bf16.gmra.mxu0 %v831
        %v896 = vpop.f32.mrf.mxu0
        %v897 = vadd.f32 0.0, %v896
        %v898 = vpop.f32.mrf.mxu0
        %v899 = vadd.f32 0.0, %v898
        %900 = vmatmul.bf16.gmra.mxu0 %v834
        %v901 = vpop.f32.mrf.mxu0
        %v902 = vadd.f32 0.0, %v901
        %v903 = vpop.f32.mrf.mxu0
        %v904 = vadd.f32 0.0, %v903
        %905 = vmatmul.bf16.gmra.mxu0 %v837
        %v906 = vpop.f32.mrf.mxu0
        %v907 = vadd.f32 0.0, %v906
        %v908 = vpop.f32.mrf.mxu0
        %v909 = vadd.f32 0.0, %v908
        %910 = vmatmul.bf16.gmra.mxu0 %v840
        %v911 = vpop.f32.mrf.mxu0
        %v912 = vadd.f32 0.0, %v911
        %v913 = vpop.f32.mrf.mxu0
        %v914 = vadd.f32 0.0, %v913
        %915 = vmatmul.bf16.gmra.mxu0 %v843
        %v916 = vpop.f32.mrf.mxu0
        %v917 = vadd.f32 0.0, %v916
        %v918 = vpop.f32.mrf.mxu0
        %v919 = vadd.f32 0.0, %v918
        %920 = vmatmul.bf16.gmra.mxu0 %v846
        %v921 = vpop.f32.mrf.mxu0
        %v922 = vadd.f32 0.0, %v921
        %v923 = vpop.f32.mrf.mxu0
        %v924 = vadd.f32 0.0, %v923
        %925 = vmatmul.bf16.gmra.mxu0 %v849
        %v926 = vpop.f32.mrf.mxu0
        %v927 = vadd.f32 0.0, %v926
        %v928 = vpop.f32.mrf.mxu0
        %v929 = vadd.f32 0.0, %v928
        %930 = vmatmul.bf16.gmra.mxu0 %v852
        %v931 = vpop.f32.mrf.mxu0
        %v932 = vadd.f32 0.0, %v931
        %v933 = vpop.f32.mrf.mxu0
        %v934 = vadd.f32 0.0, %v933
        %935 = vmatmul.bf16.gmra.mxu0 %v855
        %v936 = vpop.f32.mrf.mxu0
        %v937 = vadd.f32 0.0, %v936
        %v938 = vpop.f32.mrf.mxu0
        %v939 = vadd.f32 0.0, %v938
        %940 = vmatmul.bf16.gmra.mxu0 %v858
        %v941 = vpop.f32.mrf.mxu0
        %v942 = vadd.f32 0.0, %v941
        %v943 = vpop.f32.mrf.mxu0
        %v944 = vadd.f32 0.0, %v943
        %945 = vmatmul.bf16.gmra.mxu0 %v861
        %v946 = vpop.f32.mrf.mxu0
        %v947 = vadd.f32 0.0, %v946
        %v948 = vpop.f32.mrf.mxu0
        %v949 = vadd.f32 0.0, %v948
        %950 = vmatmul.bf16.gmra.mxu0 %v864
        %v951 = vpop.f32.mrf.mxu0
        %v952 = vadd.f32 0.0, %v951
        %v953 = vpop.f32.mrf.mxu0
        %v954 = vadd.f32 0.0, %v953
        %955 = vmatmul.bf16.gmra.mxu0 %v867
        %v956 = vpop.f32.mrf.mxu0
        %v957 = vadd.f32 0.0, %v956
        %v958 = vpop.f32.mrf.mxu0
        %v959 = vadd.f32 0.0, %v958
        %960 = vmatmul.bf16.gmra.mxu0 %v870
        %v961 = vpop.f32.mrf.mxu0
        %v962 = vadd.f32 0.0, %v961
        %v963 = vpop.f32.mrf.mxu0
        %v964 = vadd.f32 0.0, %v963
        %965 = vmatmul.bf16.gmra.mxu0 %v873
        %v966 = vpop.f32.mrf.mxu0
        %v967 = vadd.f32 0.0, %v966
        %v968 = vpop.f32.mrf.mxu0
        %v969 = vadd.f32 0.0, %v968
        %970 = vmatmul.bf16.gmra.mxu0 %v876
        %v971 = vpop.f32.mrf.mxu0
        %v972 = vadd.f32 0.0, %v971
        %v973 = vpop.f32.mrf.mxu0
        %v974 = vadd.f32 0.0, %v973
        %975 = vmatmul.bf16.gmra.mxu0 %v879
        %v976 = vpop.f32.mrf.mxu0
        %v977 = vadd.f32 0.0, %v976
        %v978 = vpop.f32.mrf.mxu0
        %v979 = vadd.f32 0.0, %v978
        %980 = vmatmul.bf16.gmra.mxu0 %v882
        %v981 = vpop.f32.mrf.mxu0
        %v982 = vadd.f32 0.0, %v981
        %v983 = vpop.f32.mrf.mxu0
        %v984 = vadd.f32 0.0, %v983
        %985 = vdwg.mxu0
        %v986 = vadd.f32 %v658, %v897
        %v987 = vadd.f32 %v659, %v899
        %v988 = vadd.f32 %v660, %v902
        %v989 = vadd.f32 %v661, %v904
        %v990 = vadd.f32 %v662, %v907
        %v991 = vadd.f32 %v663, %v909
        %v992 = vadd.f32 %v664, %v912
        %v993 = vadd.f32 %v665, %v914
        %v994 = vadd.f32 %v666, %v917
        %v995 = vadd.f32 %v667, %v919
        %v996 = vadd.f32 %v668, %v922
        %v997 = vadd.f32 %v669, %v924
        %v998 = vadd.f32 %v670, %v927
        %v999 = vadd.f32 %v671, %v929
        %v1000 = vadd.f32 %v672, %v932
        %v1001 = vadd.f32 %v673, %v934
        %v1002 = vadd.f32 %v674, %v937
        %v1003 = vadd.f32 %v675, %v939
        %v1004 = vadd.f32 %v676, %v942
        %v1005 = vadd.f32 %v677, %v944
        %v1006 = vadd.f32 %v678, %v947
        %v1007 = vadd.f32 %v679, %v949
        %v1008 = vadd.f32 %v680, %v952
        %v1009 = vadd.f32 %v681, %v954
        %v1010 = vadd.f32 %v682, %v957
        %v1011 = vadd.f32 %v683, %v959
        %v1012 = vadd.f32 %v684, %v962
        %v1013 = vadd.f32 %v685, %v964
        %v1014 = vadd.f32 %v686, %v967
        %v1015 = vadd.f32 %v687, %v969
        %v1016 = vadd.f32 %v688, %v972
        %v1017 = vadd.f32 %v689, %v974
        %v1018 = vadd.f32 %v690, %v977
        %v1019 = vadd.f32 %v691, %v979
        %v1020 = vadd.f32 %v692, %v982
        %v1021 = vadd.f32 %v693, %v984
        %1022 = vst [vmem:[#allocation2] sm:$0xff] %v986
        %1023 = vst [vmem:[#allocation2 + $0x8] sm:$0xff] %v987
        %1024 = vst [vmem:[#allocation2 + $0x10] sm:$0xff] %v988
        %1025 = vst [vmem:[#allocation2 + $0x18] sm:$0xff] %v989
        %1026 = vst [vmem:[#allocation2 + $0x20] sm:$0xff] %v990
        %1027 = vst [vmem:[#allocation2 + $0x28] sm:$0xff] %v991
        %1028 = vst [vmem:[#allocation2 + $0x30] sm:$0xff] %v992
        %1029 = vst [vmem:[#allocation2 + $0x38] sm:$0xff] %v993
        %1030 = vst [vmem:[#allocation2 + $0x40] sm:$0xff] %v994
        %1031 = vst [vmem:[#allocation2 + $0x48] sm:$0xff] %v995
        %1032 = vst [vmem:[#allocation2 + $0x50] sm:$0xff] %v996
        %1033 = vst [vmem:[#allocation2 + $0x58] sm:$0xff] %v997
        %1034 = vst [vmem:[#allocation2 + $0x60] sm:$0xff] %v998
        %1035 = vst [vmem:[#allocation2 + $0x68] sm:$0xff] %v999
        %1036 = vst [vmem:[#allocation2 + $0x70] sm:$0xff] %v1000
        %1037 = vst [vmem:[#allocation2 + $0x78] sm:$0xff] %v1001
        %1038 = vst [vmem:[#allocation2 + $0x80] sm:$0xff] %v1002
        %1039 = vst [vmem:[#allocation2 + $0x88] sm:$0xff] %v1003
        %1040 = vst [vmem:[#allocation2 + $0x90] sm:$0xff] %v1004
        %1041 = vst [vmem:[#allocation2 + $0x98] sm:$0xff] %v1005
        %1042 = vst [vmem:[#allocation2 + $0xa0] sm:$0xff] %v1006
        %1043 = vst [vmem:[#allocation2 + $0xa8] sm:$0xff] %v1007
        %1044 = vst [vmem:[#allocation2 + $0xb0] sm:$0xff] %v1008
        %1045 = vst [vmem:[#allocation2 + $0xb8] sm:$0xff] %v1009
        %1046 = vst [vmem:[#allocation2 + $0xc0] sm:$0xff] %v1010
        %1047 = vst [vmem:[#allocation2 + $0xc8] sm:$0xff] %v1011
        %1048 = vst [vmem:[#allocation2 + $0xd0] sm:$0xff] %v1012
        %1049 = vst [vmem:[#allocation2 + $0xd8] sm:$0xff] %v1013
        %1050 = vst [vmem:[#allocation2 + $0xe0] sm:$0xff] %v1014
        %1051 = vst [vmem:[#allocation2 + $0xe8] sm:$0xff] %v1015
        %1052 = vst [vmem:[#allocation2 + $0xf0] sm:$0xff] %v1016
        %1053 = vst [vmem:[#allocation2 + $0xf8] sm:$0xff] %v1017
        %1054 = vst [vmem:[#allocation2 + $0x100] sm:$0xff] %v1018
        %1055 = vst [vmem:[#allocation2 + $0x108] sm:$0xff] %v1019
        %1056 = vst [vmem:[#allocation2 + $0x110] sm:$0xff] %v1020
        %1057 = vst [vmem:[#allocation2 + $0x118] sm:$0xff] %v1021
        %v1058 = vld [vmem:[#allocation2] sm:$0xff]
        %v1059 = vld [vmem:[#allocation2 + $0x8] sm:$0xff]
        %v1060 = vld [vmem:[#allocation2 + $0x10] sm:$0xff]
        %v1061 = vld [vmem:[#allocation2 + $0x18] sm:$0xff]
        %v1062 = vld [vmem:[#allocation2 + $0x20] sm:$0xff]
        %v1063 = vld [vmem:[#allocation2 + $0x28] sm:$0xff]
        %v1064 = vld [vmem:[#allocation2 + $0x30] sm:$0xff]
        %v1065 = vld [vmem:[#allocation2 + $0x38] sm:$0xff]
        %v1066 = vld [vmem:[#allocation2 + $0x40] sm:$0xff]
        %v1067 = vld [vmem:[#allocation2 + $0x48] sm:$0xff]
        %v1068 = vld [vmem:[#allocation2 + $0x50] sm:$0xff]
        %v1069 = vld [vmem:[#allocation2 + $0x58] sm:$0xff]
        %v1070 = vld [vmem:[#allocation2 + $0x60] sm:$0xff]
        %v1071 = vld [vmem:[#allocation2 + $0x68] sm:$0xff]
        %v1072 = vld [vmem:[#allocation2 + $0x70] sm:$0xff]
        %v1073 = vld [vmem:[#allocation2 + $0x78] sm:$0xff]
        %v1074 = vld [vmem:[#allocation2 + $0x80] sm:$0xff]
        %v1075 = vld [vmem:[#allocation2 + $0x88] sm:$0xff]
        %v1076 = vld [vmem:[#allocation2 + $0x90] sm:$0xff]
        %v1077 = vld [vmem:[#allocation2 + $0x98] sm:$0xff]
        %v1078 = vld [vmem:[#allocation2 + $0xa0] sm:$0xff]
        %v1079 = vld [vmem:[#allocation2 + $0xa8] sm:$0xff]
        %v1080 = vld [vmem:[#allocation2 + $0xb0] sm:$0xff]
        %v1081 = vld [vmem:[#allocation2 + $0xb8] sm:$0xff]
        %v1082 = vld [vmem:[#allocation2 + $0xc0] sm:$0xff]
        %v1083 = vld [vmem:[#allocation2 + $0xc8] sm:$0xff]
        %v1084 = vld [vmem:[#allocation2 + $0xd0] sm:$0xff]
        %v1085 = vld [vmem:[#allocation2 + $0xd8] sm:$0xff]
        %v1086 = vld [vmem:[#allocation2 + $0xe0] sm:$0xff]
        %v1087 = vld [vmem:[#allocation2 + $0xe8] sm:$0xff]
        %v1088 = vld [vmem:[#allocation2 + $0xf0] sm:$0xff]
        %v1089 = vld [vmem:[#allocation2 + $0xf8] sm:$0xff]
        %v1090 = vld [vmem:[#allocation2 + $0x100] sm:$0xff]
        %v1091 = vld [vmem:[#allocation2 + $0x108] sm:$0xff]
        %v1092 = vld [vmem:[#allocation2 + $0x110] sm:$0xff]
        %v1093 = vld [vmem:[#allocation2 + $0x118] sm:$0xff]
        %s1094 = scalar_lea.vmem %s1, 8
        %v1095 = vld [vmem:[%s1094] sm:$0xf]
        %vm1096 = vcmask 1046528
        %v1097 = vrot.slane %v410, 1
        %v1098 = vrot.slane %v411, 1
        %v1099 = vsel %vm1096, %v1097, %v1098
        %v1100 = vrot.slane %v412, 1
        %v1101 = vsel %vm1096, %v1098, %v1100
        %v1102 = vrot.slane %v413, 1
        %v1103 = vsel %vm1096, %v1100, %v1102
        %v1104 = vrot.slane %v414, 1
        %v1105 = vsel %vm1096, %v1102, %v1104
        %v1106 = vrot.slane %v415, 1
        %v1107 = vsel %vm1096, %v1104, %v1106
        %v1108 = vrot.slane %v416, 1
        %v1109 = vsel %vm1096, %v1106, %v1108
        %v1110 = vrot.slane %v417, 1
        %v1111 = vsel %vm1096, %v1108, %v1110
        %v1112 = vrot.slane %v418, 1
        %v1113 = vsel %vm1096, %v1110, %v1112
        %v1114 = vrot.slane %v419, 1
        %v1115 = vsel %vm1096, %v1112, %v1114
        %v1116 = vrot.slane %v420, 1
        %v1117 = vsel %vm1096, %v1114, %v1116
        %v1118 = vrot.slane %v421, 1
        %v1119 = vsel %vm1096, %v1116, %v1118
        %v1120 = vrot.slane %v422, 1
        %v1121 = vsel %vm1096, %v1118, %v1120
        %v1122 = vrot.slane %v423, 1
        %v1123 = vsel %vm1096, %v1120, %v1122
        %v1124 = vrot.slane %v424, 1
        %v1125 = vsel %vm1096, %v1122, %v1124
        %v1126 = vrot.slane %v425, 1
        %v1127 = vsel %vm1096, %v1124, %v1126
        %v1128 = vrot.slane %v426, 1
        %v1129 = vsel %vm1096, %v1126, %v1128
        %v1130 = vrot.slane %v427, 1
        %v1131 = vsel %vm1096, %v1128, %v1130
        %v1132 = vrot.slane %v698, 1
        %v1133 = vsel %vm1096, %v1130, %v1132
        %v1135 = vsel %vm428, %v1099, 0
        %v1138 = vsel %vm428, %v1101, 0
        %v1141 = vsel %vm428, %v1103, 0
        %v1144 = vsel %vm428, %v1105, 0
        %v1147 = vsel %vm428, %v1107, 0
        %v1150 = vsel %vm428, %v1109, 0
        %v1153 = vsel %vm428, %v1111, 0
        %v1156 = vsel %vm428, %v1113, 0
        %v1159 = vsel %vm428, %v1115, 0
        %v1162 = vsel %vm428, %v1117, 0
        %v1165 = vsel %vm428, %v1119, 0
        %v1168 = vsel %vm428, %v1121, 0
        %v1171 = vsel %vm428, %v1123, 0
        %v1174 = vsel %vm428, %v1125, 0
        %v1177 = vsel %vm428, %v1127, 0
        %v1180 = vsel %vm428, %v1129, 0
        %v1183 = vsel %vm428, %v1131, 0
        %v1186 = vsel %vm428, %v1133, 0
        %v1189 = vsel %vm483, %v1095, 0
        %1191 = vmatpush.bf16.msra.mxu0 0
        %1192 = vmatpush.bf16.msra.mxu0 0
        %1193 = vmatpush.bf16.msra.mxu0 0
        %1194 = vmatpush.bf16.msra.mxu0 0
        %1195 = vmatpush.bf16.msra.mxu0 0
        %1196 = vmatpush.bf16.msra.mxu0 0
        %1197 = vmatpush.bf16.msra.mxu0 0
        %1198 = vmatpush.bf16.msra.mxu0 %v1189
        %1199 = vmatmul.bf16.gmra.mxu0 %v1135
        %v1200 = vpop.f32.mrf.mxu0
        %v1201 = vadd.f32 0.0, %v1200
        %v1202 = vpop.f32.mrf.mxu0
        %v1203 = vadd.f32 0.0, %v1202
        %1204 = vmatmul.bf16.gmra.mxu0 %v1138
        %v1205 = vpop.f32.mrf.mxu0
        %v1206 = vadd.f32 0.0, %v1205
        %v1207 = vpop.f32.mrf.mxu0
        %v1208 = vadd.f32 0.0, %v1207
        %1209 = vmatmul.bf16.gmra.mxu0 %v1141
        %v1210 = vpop.f32.mrf.mxu0
        %v1211 = vadd.f32 0.0, %v1210
        %v1212 = vpop.f32.mrf.mxu0
        %v1213 = vadd.f32 0.0, %v1212
        %1214 = vmatmul.bf16.gmra.mxu0 %v1144
        %v1215 = vpop.f32.mrf.mxu0
        %v1216 = vadd.f32 0.0, %v1215
        %v1217 = vpop.f32.mrf.mxu0
        %v1218 = vadd.f32 0.0, %v1217
        %1219 = vmatmul.bf16.gmra.mxu0 %v1147
        %v1220 = vpop.f32.mrf.mxu0
        %v1221 = vadd.f32 0.0, %v1220
        %v1222 = vpop.f32.mrf.mxu0
        %v1223 = vadd.f32 0.0, %v1222
        %1224 = vmatmul.bf16.gmra.mxu0 %v1150
        %v1225 = vpop.f32.mrf.mxu0
        %v1226 = vadd.f32 0.0, %v1225
        %v1227 = vpop.f32.mrf.mxu0
        %v1228 = vadd.f32 0.0, %v1227
        %1229 = vmatmul.bf16.gmra.mxu0 %v1153
        %v1230 = vpop.f32.mrf.mxu0
        %v1231 = vadd.f32 0.0, %v1230
        %v1232 = vpop.f32.mrf.mxu0
        %v1233 = vadd.f32 0.0, %v1232
        %1234 = vmatmul.bf16.gmra.mxu0 %v1156
        %v1235 = vpop.f32.mrf.mxu0
        %v1236 = vadd.f32 0.0, %v1235
        %v1237 = vpop.f32.mrf.mxu0
        %v1238 = vadd.f32 0.0, %v1237
        %1239 = vmatmul.bf16.gmra.mxu0 %v1159
        %v1240 = vpop.f32.mrf.mxu0
        %v1241 = vadd.f32 0.0, %v1240
        %v1242 = vpop.f32.mrf.mxu0
        %v1243 = vadd.f32 0.0, %v1242
        %1244 = vmatmul.bf16.gmra.mxu0 %v1162
        %v1245 = vpop.f32.mrf.mxu0
        %v1246 = vadd.f32 0.0, %v1245
        %v1247 = vpop.f32.mrf.mxu0
        %v1248 = vadd.f32 0.0, %v1247
        %1249 = vmatmul.bf16.gmra.mxu0 %v1165
        %v1250 = vpop.f32.mrf.mxu0
        %v1251 = vadd.f32 0.0, %v1250
        %v1252 = vpop.f32.mrf.mxu0
        %v1253 = vadd.f32 0.0, %v1252
        %1254 = vmatmul.bf16.gmra.mxu0 %v1168
        %v1255 = vpop.f32.mrf.mxu0
        %v1256 = vadd.f32 0.0, %v1255
        %v1257 = vpop.f32.mrf.mxu0
        %v1258 = vadd.f32 0.0, %v1257
        %1259 = vmatmul.bf16.gmra.mxu0 %v1171
        %v1260 = vpop.f32.mrf.mxu0
        %v1261 = vadd.f32 0.0, %v1260
        %v1262 = vpop.f32.mrf.mxu0
        %v1263 = vadd.f32 0.0, %v1262
        %1264 = vmatmul.bf16.gmra.mxu0 %v1174
        %v1265 = vpop.f32.mrf.mxu0
        %v1266 = vadd.f32 0.0, %v1265
        %v1267 = vpop.f32.mrf.mxu0
        %v1268 = vadd.f32 0.0, %v1267
        %1269 = vmatmul.bf16.gmra.mxu0 %v1177
        %v1270 = vpop.f32.mrf.mxu0
        %v1271 = vadd.f32 0.0, %v1270
        %v1272 = vpop.f32.mrf.mxu0
        %v1273 = vadd.f32 0.0, %v1272
        %1274 = vmatmul.bf16.gmra.mxu0 %v1180
        %v1275 = vpop.f32.mrf.mxu0
        %v1276 = vadd.f32 0.0, %v1275
        %v1277 = vpop.f32.mrf.mxu0
        %v1278 = vadd.f32 0.0, %v1277
        %1279 = vmatmul.bf16.gmra.mxu0 %v1183
        %v1280 = vpop.f32.mrf.mxu0
        %v1281 = vadd.f32 0.0, %v1280
        %v1282 = vpop.f32.mrf.mxu0
        %v1283 = vadd.f32 0.0, %v1282
        %1284 = vmatmul.bf16.gmra.mxu0 %v1186
        %v1285 = vpop.f32.mrf.mxu0
        %v1286 = vadd.f32 0.0, %v1285
        %v1287 = vpop.f32.mrf.mxu0
        %v1288 = vadd.f32 0.0, %v1287
        %1289 = vdwg.mxu0
        %v1290 = vadd.f32 %v1058, %v1201
        %v1291 = vadd.f32 %v1059, %v1203
        %v1292 = vadd.f32 %v1060, %v1206
        %v1293 = vadd.f32 %v1061, %v1208
        %v1294 = vadd.f32 %v1062, %v1211
        %v1295 = vadd.f32 %v1063, %v1213
        %v1296 = vadd.f32 %v1064, %v1216
        %v1297 = vadd.f32 %v1065, %v1218
        %v1298 = vadd.f32 %v1066, %v1221
        %v1299 = vadd.f32 %v1067, %v1223
        %v1300 = vadd.f32 %v1068, %v1226
        %v1301 = vadd.f32 %v1069, %v1228
        %v1302 = vadd.f32 %v1070, %v1231
        %v1303 = vadd.f32 %v1071, %v1233
        %v1304 = vadd.f32 %v1072, %v1236
        %v1305 = vadd.f32 %v1073, %v1238
        %v1306 = vadd.f32 %v1074, %v1241
        %v1307 = vadd.f32 %v1075, %v1243
        %v1308 = vadd.f32 %v1076, %v1246
        %v1309 = vadd.f32 %v1077, %v1248
        %v1310 = vadd.f32 %v1078, %v1251
        %v1311 = vadd.f32 %v1079, %v1253
        %v1312 = vadd.f32 %v1080, %v1256
        %v1313 = vadd.f32 %v1081, %v1258
        %v1314 = vadd.f32 %v1082, %v1261
        %v1315 = vadd.f32 %v1083, %v1263
        %v1316 = vadd.f32 %v1084, %v1266
        %v1317 = vadd.f32 %v1085, %v1268
        %v1318 = vadd.f32 %v1086, %v1271
        %v1319 = vadd.f32 %v1087, %v1273
        %v1320 = vadd.f32 %v1088, %v1276
        %v1321 = vadd.f32 %v1089, %v1278
        %v1322 = vadd.f32 %v1090, %v1281
        %v1323 = vadd.f32 %v1091, %v1283
        %v1324 = vadd.f32 %v1092, %v1286
        %v1325 = vadd.f32 %v1093, %v1288
        %1326 = vst [vmem:[#allocation2] sm:$0xff] %v1290
        %1327 = vst [vmem:[#allocation2 + $0x8] sm:$0xff] %v1291
        %1328 = vst [vmem:[#allocation2 + $0x10] sm:$0xff] %v1292
        %1329 = vst [vmem:[#allocation2 + $0x18] sm:$0xff] %v1293
        %1330 = vst [vmem:[#allocation2 + $0x20] sm:$0xff] %v1294
        %1331 = vst [vmem:[#allocation2 + $0x28] sm:$0xff] %v1295
        %1332 = vst [vmem:[#allocation2 + $0x30] sm:$0xff] %v1296
        %1333 = vst [vmem:[#allocation2 + $0x38] sm:$0xff] %v1297
        %1334 = vst [vmem:[#allocation2 + $0x40] sm:$0xff] %v1298
        %1335 = vst [vmem:[#allocation2 + $0x48] sm:$0xff] %v1299
        %1336 = vst [vmem:[#allocation2 + $0x50] sm:$0xff] %v1300
        %1337 = vst [vmem:[#allocation2 + $0x58] sm:$0xff] %v1301
        %1338 = vst [vmem:[#allocation2 + $0x60] sm:$0xff] %v1302
        %1339 = vst [vmem:[#allocation2 + $0x68] sm:$0xff] %v1303
        %1340 = vst [vmem:[#allocation2 + $0x70] sm:$0xff] %v1304
        %1341 = vst [vmem:[#allocation2 + $0x78] sm:$0xff] %v1305
        %1342 = vst [vmem:[#allocation2 + $0x80] sm:$0xff] %v1306
        %1343 = vst [vmem:[#allocation2 + $0x88] sm:$0xff] %v1307
        %1344 = vst [vmem:[#allocation2 + $0x90] sm:$0xff] %v1308
        %1345 = vst [vmem:[#allocation2 + $0x98] sm:$0xff] %v1309
        %1346 = vst [vmem:[#allocation2 + $0xa0] sm:$0xff] %v1310
        %1347 = vst [vmem:[#allocation2 + $0xa8] sm:$0xff] %v1311
        %1348 = vst [vmem:[#allocation2 + $0xb0] sm:$0xff] %v1312
        %1349 = vst [vmem:[#allocation2 + $0xb8] sm:$0xff] %v1313
        %1350 = vst [vmem:[#allocation2 + $0xc0] sm:$0xff] %v1314
        %1351 = vst [vmem:[#allocation2 + $0xc8] sm:$0xff] %v1315
        %1352 = vst [vmem:[#allocation2 + $0xd0] sm:$0xff] %v1316
        %1353 = vst [vmem:[#allocation2 + $0xd8] sm:$0xff] %v1317
        %1354 = vst [vmem:[#allocation2 + $0xe0] sm:$0xff] %v1318
        %1355 = vst [vmem:[#allocation2 + $0xe8] sm:$0xff] %v1319
        %1356 = vst [vmem:[#allocation2 + $0xf0] sm:$0xff] %v1320
        %1357 = vst [vmem:[#allocation2 + $0xf8] sm:$0xff] %v1321
        %1358 = vst [vmem:[#allocation2 + $0x100] sm:$0xff] %v1322
        %1359 = vst [vmem:[#allocation2 + $0x108] sm:$0xff] %v1323
        %1360 = vst [vmem:[#allocation2 + $0x110] sm:$0xff] %v1324
        %1361 = vst [vmem:[#allocation2 + $0x118] sm:$0xff] %v1325
        %v1362 = vld [vmem:[#allocation2] sm:$0xff]
        %v1363 = vld [vmem:[#allocation2 + $0x8] sm:$0xff]
        %v1364 = vld [vmem:[#allocation2 + $0x10] sm:$0xff]
        %v1365 = vld [vmem:[#allocation2 + $0x18] sm:$0xff]
        %v1366 = vld [vmem:[#allocation2 + $0x20] sm:$0xff]
        %v1367 = vld [vmem:[#allocation2 + $0x28] sm:$0xff]
        %v1368 = vld [vmem:[#allocation2 + $0x30] sm:$0xff]
        %v1369 = vld [vmem:[#allocation2 + $0x38] sm:$0xff]
        %v1370 = vld [vmem:[#allocation2 + $0x40] sm:$0xff]
        %v1371 = vld [vmem:[#allocation2 + $0x48] sm:$0xff]
        %v1372 = vld [vmem:[#allocation2 + $0x50] sm:$0xff]
        %v1373 = vld [vmem:[#allocation2 + $0x58] sm:$0xff]
        %v1374 = vld [vmem:[#allocation2 + $0x60] sm:$0xff]
        %v1375 = vld [vmem:[#allocation2 + $0x68] sm:$0xff]
        %v1376 = vld [vmem:[#allocation2 + $0x70] sm:$0xff]
        %v1377 = vld [vmem:[#allocation2 + $0x78] sm:$0xff]
        %v1378 = vld [vmem:[#allocation2 + $0x80] sm:$0xff]
        %v1379 = vld [vmem:[#allocation2 + $0x88] sm:$0xff]
        %v1380 = vld [vmem:[#allocation2 + $0x90] sm:$0xff]
        %v1381 = vld [vmem:[#allocation2 + $0x98] sm:$0xff]
        %v1382 = vld [vmem:[#allocation2 + $0xa0] sm:$0xff]
        %v1383 = vld [vmem:[#allocation2 + $0xa8] sm:$0xff]
        %v1384 = vld [vmem:[#allocation2 + $0xb0] sm:$0xff]
        %v1385 = vld [vmem:[#allocation2 + $0xb8] sm:$0xff]
        %v1386 = vld [vmem:[#allocation2 + $0xc0] sm:$0xff]
        %v1387 = vld [vmem:[#allocation2 + $0xc8] sm:$0xff]
        %v1388 = vld [vmem:[#allocation2 + $0xd0] sm:$0xff]
        %v1389 = vld [vmem:[#allocation2 + $0xd8] sm:$0xff]
        %v1390 = vld [vmem:[#allocation2 + $0xe0] sm:$0xff]
        %v1391 = vld [vmem:[#allocation2 + $0xe8] sm:$0xff]
        %v1392 = vld [vmem:[#allocation2 + $0xf0] sm:$0xff]
        %v1393 = vld [vmem:[#allocation2 + $0xf8] sm:$0xff]
        %v1394 = vld [vmem:[#allocation2 + $0x100] sm:$0xff]
        %v1395 = vld [vmem:[#allocation2 + $0x108] sm:$0xff]
        %v1396 = vld [vmem:[#allocation2 + $0x110] sm:$0xff]
        %v1397 = vld [vmem:[#allocation2 + $0x118] sm:$0xff]
        %s1398 = scalar_lea.vmem %s1, 12
        %v1399 = vld [vmem:[%s1398] sm:$0xf]
        %v1402 = vunpack.c.l.b16 %v261
        %v1403 = vunpack.c.l.b16 %v262
        %v1404 = vpack.c.b16 %v1402, %v697
        %v1405 = vpack.c.b16 %v1403, %v1403
        %v1406 = vrot.slane %v1404, 1
        %v1407 = vsel %vm1096, %v1130, %v1406
        %v1408 = vrot.slane %v1405, 1
        %v1409 = vsel %vm1096, %v1406, %v1408
        %v1411 = vsel %vm428, %v1407, 0
        %v1414 = vsel %vm428, %v1409, 0
        %v1417 = vsel %vm483, %v1399, 0
        %1419 = vmatpush.bf16.msra.mxu0 0
        %1420 = vmatpush.bf16.msra.mxu0 0
        %1421 = vmatpush.bf16.msra.mxu0 0
        %1422 = vmatpush.bf16.msra.mxu0 0
        %1423 = vmatpush.bf16.msra.mxu0 0
        %1424 = vmatpush.bf16.msra.mxu0 0
        %1425 = vmatpush.bf16.msra.mxu0 0
        %1426 = vmatpush.bf16.msra.mxu0 %v1417
        %1427 = vmatmul.bf16.gmra.mxu0 %v1138
        %v1428 = vpop.f32.mrf.mxu0
        %v1429 = vadd.f32 0.0, %v1428
        %v1430 = vpop.f32.mrf.mxu0
        %v1431 = vadd.f32 0.0, %v1430
        %1432 = vmatmul.bf16.gmra.mxu0 %v1141
        %v1433 = vpop.f32.mrf.mxu0
        %v1434 = vadd.f32 0.0, %v1433
        %v1435 = vpop.f32.mrf.mxu0
        %v1436 = vadd.f32 0.0, %v1435
        %1437 = vmatmul.bf16.gmra.mxu0 %v1144
        %v1438 = vpop.f32.mrf.mxu0
        %v1439 = vadd.f32 0.0, %v1438
        %v1440 = vpop.f32.mrf.mxu0
        %v1441 = vadd.f32 0.0, %v1440
        %1442 = vmatmul.bf16.gmra.mxu0 %v1147
        %v1443 = vpop.f32.mrf.mxu0
        %v1444 = vadd.f32 0.0, %v1443
        %v1445 = vpop.f32.mrf.mxu0
        %v1446 = vadd.f32 0.0, %v1445
        %1447 = vmatmul.bf16.gmra.mxu0 %v1150
        %v1448 = vpop.f32.mrf.mxu0
        %v1449 = vadd.f32 0.0, %v1448
        %v1450 = vpop.f32.mrf.mxu0
        %v1451 = vadd.f32 0.0, %v1450
        %1452 = vmatmul.bf16.gmra.mxu0 %v1153
        %v1453 = vpop.f32.mrf.mxu0
        %v1454 = vadd.f32 0.0, %v1453
        %v1455 = vpop.f32.mrf.mxu0
        %v1456 = vadd.f32 0.0, %v1455
        %1457 = vmatmul.bf16.gmra.mxu0 %v1156
        %v1458 = vpop.f32.mrf.mxu0
        %v1459 = vadd.f32 0.0, %v1458
        %v1460 = vpop.f32.mrf.mxu0
        %v1461 = vadd.f32 0.0, %v1460
        %1462 = vmatmul.bf16.gmra.mxu0 %v1159
        %v1463 = vpop.f32.mrf.mxu0
        %v1464 = vadd.f32 0.0, %v1463
        %v1465 = vpop.f32.mrf.mxu0
        %v1466 = vadd.f32 0.0, %v1465
        %1467 = vmatmul.bf16.gmra.mxu0 %v1162
        %v1468 = vpop.f32.mrf.mxu0
        %v1469 = vadd.f32 0.0, %v1468
        %v1470 = vpop.f32.mrf.mxu0
        %v1471 = vadd.f32 0.0, %v1470
        %1472 = vmatmul.bf16.gmra.mxu0 %v1165
        %v1473 = vpop.f32.mrf.mxu0
        %v1474 = vadd.f32 0.0, %v1473
        %v1475 = vpop.f32.mrf.mxu0
        %v1476 = vadd.f32 0.0, %v1475
        %1477 = vmatmul.bf16.gmra.mxu0 %v1168
        %v1478 = vpop.f32.mrf.mxu0
        %v1479 = vadd.f32 0.0, %v1478
        %v1480 = vpop.f32.mrf.mxu0
        %v1481 = vadd.f32 0.0, %v1480
        %1482 = vmatmul.bf16.gmra.mxu0 %v1171
        %v1483 = vpop.f32.mrf.mxu0
        %v1484 = vadd.f32 0.0, %v1483
        %v1485 = vpop.f32.mrf.mxu0
        %v1486 = vadd.f32 0.0, %v1485
        %1487 = vmatmul.bf16.gmra.mxu0 %v1174
        %v1488 = vpop.f32.mrf.mxu0
        %v1489 = vadd.f32 0.0, %v1488
        %v1490 = vpop.f32.mrf.mxu0
        %v1491 = vadd.f32 0.0, %v1490
        %1492 = vmatmul.bf16.gmra.mxu0 %v1177
        %v1493 = vpop.f32.mrf.mxu0
        %v1494 = vadd.f32 0.0, %v1493
        %v1495 = vpop.f32.mrf.mxu0
        %v1496 = vadd.f32 0.0, %v1495
        %1497 = vmatmul.bf16.gmra.mxu0 %v1180
        %v1498 = vpop.f32.mrf.mxu0
        %v1499 = vadd.f32 0.0, %v1498
        %v1500 = vpop.f32.mrf.mxu0
        %v1501 = vadd.f32 0.0, %v1500
        %1502 = vmatmul.bf16.gmra.mxu0 %v1183
        %v1503 = vpop.f32.mrf.mxu0
        %v1504 = vadd.f32 0.0, %v1503
        %v1505 = vpop.f32.mrf.mxu0
        %v1506 = vadd.f32 0.0, %v1505
        %1507 = vmatmul.bf16.gmra.mxu0 %v1411
        %v1508 = vpop.f32.mrf.mxu0
        %v1509 = vadd.f32 0.0, %v1508
        %v1510 = vpop.f32.mrf.mxu0
        %v1511 = vadd.f32 0.0, %v1510
        %1512 = vmatmul.bf16.gmra.mxu0 %v1414
        %v1513 = vpop.f32.mrf.mxu0
        %v1514 = vadd.f32 0.0, %v1513
        %v1515 = vpop.f32.mrf.mxu0
        %v1516 = vadd.f32 0.0, %v1515
        %1517 = vdwg.mxu0
        %v1518 = vadd.f32 %v1362, %v1429
        %v1519 = vadd.f32 %v1363, %v1431
        %v1520 = vadd.f32 %v1364, %v1434
        %v1521 = vadd.f32 %v1365, %v1436
        %v1522 = vadd.f32 %v1366, %v1439
        %v1523 = vadd.f32 %v1367, %v1441
        %v1524 = vadd.f32 %v1368, %v1444
        %v1525 = vadd.f32 %v1369, %v1446
        %v1526 = vadd.f32 %v1370, %v1449
        %v1527 = vadd.f32 %v1371, %v1451
        %v1528 = vadd.f32 %v1372, %v1454
        %v1529 = vadd.f32 %v1373, %v1456
        %v1530 = vadd.f32 %v1374, %v1459
        %v1531 = vadd.f32 %v1375, %v1461
        %v1532 = vadd.f32 %v1376, %v1464
        %v1533 = vadd.f32 %v1377, %v1466
        %v1534 = vadd.f32 %v1378, %v1469
        %v1535 = vadd.f32 %v1379, %v1471
        %v1536 = vadd.f32 %v1380, %v1474
        %v1537 = vadd.f32 %v1381, %v1476
        %v1538 = vadd.f32 %v1382, %v1479
        %v1539 = vadd.f32 %v1383, %v1481
        %v1540 = vadd.f32 %v1384, %v1484
        %v1541 = vadd.f32 %v1385, %v1486
        %v1542 = vadd.f32 %v1386, %v1489
        %v1543 = vadd.f32 %v1387, %v1491
        %v1544 = vadd.f32 %v1388, %v1494
        %v1545 = vadd.f32 %v1389, %v1496
        %v1546 = vadd.f32 %v1390, %v1499
        %v1547 = vadd.f32 %v1391, %v1501
        %v1548 = vadd.f32 %v1392, %v1504
        %v1549 = vadd.f32 %v1393, %v1506
        %v1550 = vadd.f32 %v1394, %v1509
        %v1551 = vadd.f32 %v1395, %v1511
        %v1552 = vadd.f32 %v1396, %v1514
        %v1553 = vadd.f32 %v1397, %v1516
        %1554 = vst [vmem:[#allocation2] sm:$0xff] %v1518
        %1555 = vst [vmem:[#allocation2 + $0x8] sm:$0xff] %v1519
        %1556 = vst [vmem:[#allocation2 + $0x10] sm:$0xff] %v1520
        %1557 = vst [vmem:[#allocation2 + $0x18] sm:$0xff] %v1521
        %1558 = vst [vmem:[#allocation2 + $0x20] sm:$0xff] %v1522
        %1559 = vst [vmem:[#allocation2 + $0x28] sm:$0xff] %v1523
        %1560 = vst [vmem:[#allocation2 + $0x30] sm:$0xff] %v1524
        %1561 = vst [vmem:[#allocation2 + $0x38] sm:$0xff] %v1525
        %1562 = vst [vmem:[#allocation2 + $0x40] sm:$0xff] %v1526
        %1563 = vst [vmem:[#allocation2 + $0x48] sm:$0xff] %v1527
        %1564 = vst [vmem:[#allocation2 + $0x50] sm:$0xff] %v1528
        %1565 = vst [vmem:[#allocation2 + $0x58] sm:$0xff] %v1529
        %1566 = vst [vmem:[#allocation2 + $0x60] sm:$0xff] %v1530
        %1567 = vst [vmem:[#allocation2 + $0x68] sm:$0xff] %v1531
        %1568 = vst [vmem:[#allocation2 + $0x70] sm:$0xff] %v1532
        %1569 = vst [vmem:[#allocation2 + $0x78] sm:$0xff] %v1533
        %1570 = vst [vmem:[#allocation2 + $0x80] sm:$0xff] %v1534
        %1571 = vst [vmem:[#allocation2 + $0x88] sm:$0xff] %v1535
        %1572 = vst [vmem:[#allocation2 + $0x90] sm:$0xff] %v1536
        %1573 = vst [vmem:[#allocation2 + $0x98] sm:$0xff] %v1537
        %1574 = vst [vmem:[#allocation2 + $0xa0] sm:$0xff] %v1538
        %1575 = vst [vmem:[#allocation2 + $0xa8] sm:$0xff] %v1539
        %1576 = vst [vmem:[#allocation2 + $0xb0] sm:$0xff] %v1540
        %1577 = vst [vmem:[#allocation2 + $0xb8] sm:$0xff] %v1541
        %1578 = vst [vmem:[#allocation2 + $0xc0] sm:$0xff] %v1542
        %1579 = vst [vmem:[#allocation2 + $0xc8] sm:$0xff] %v1543
        %1580 = vst [vmem:[#allocation2 + $0xd0] sm:$0xff] %v1544
        %1581 = vst [vmem:[#allocation2 + $0xd8] sm:$0xff] %v1545
        %1582 = vst [vmem:[#allocation2 + $0xe0] sm:$0xff] %v1546
        %1583 = vst [vmem:[#allocation2 + $0xe8] sm:$0xff] %v1547
        %1584 = vst [vmem:[#allocation2 + $0xf0] sm:$0xff] %v1548
        %1585 = vst [vmem:[#allocation2 + $0xf8] sm:$0xff] %v1549
        %1586 = vst [vmem:[#allocation2 + $0x100] sm:$0xff] %v1550
        %1587 = vst [vmem:[#allocation2 + $0x108] sm:$0xff] %v1551
        %1588 = vst [vmem:[#allocation2 + $0x110] sm:$0xff] %v1552
        %1589 = vst [vmem:[#allocation2 + $0x118] sm:$0xff] %v1553
        %v1590 = vld [vmem:[#allocation2] sm:$0xff]
        %v1591 = vld [vmem:[#allocation2 + $0x8] sm:$0xff]
        %v1592 = vld [vmem:[#allocation2 + $0x10] sm:$0xff]
        %v1593 = vld [vmem:[#allocation2 + $0x18] sm:$0xff]
        %v1594 = vld [vmem:[#allocation2 + $0x20] sm:$0xff]
        %v1595 = vld [vmem:[#allocation2 + $0x28] sm:$0xff]
        %v1596 = vld [vmem:[#allocation2 + $0x30] sm:$0xff]
        %v1597 = vld [vmem:[#allocation2 + $0x38] sm:$0xff]
        %v1598 = vld [vmem:[#allocation2 + $0x40] sm:$0xff]
        %v1599 = vld [vmem:[#allocation2 + $0x48] sm:$0xff]
        %v1600 = vld [vmem:[#allocation2 + $0x50] sm:$0xff]
        %v1601 = vld [vmem:[#allocation2 + $0x58] sm:$0xff]
        %v1602 = vld [vmem:[#allocation2 + $0x60] sm:$0xff]
        %v1603 = vld [vmem:[#allocation2 + $0x68] sm:$0xff]
        %v1604 = vld [vmem:[#allocation2 + $0x70] sm:$0xff]
        %v1605 = vld [vmem:[#allocation2 + $0x78] sm:$0xff]
        %v1606 = vld [vmem:[#allocation2 + $0x80] sm:$0xff]
        %v1607 = vld [vmem:[#allocation2 + $0x88] sm:$0xff]
        %v1608 = vld [vmem:[#allocation2 + $0x90] sm:$0xff]
        %v1609 = vld [vmem:[#allocation2 + $0x98] sm:$0xff]
        %v1610 = vld [vmem:[#allocation2 + $0xa0] sm:$0xff]
        %v1611 = vld [vmem:[#allocation2 + $0xa8] sm:$0xff]
        %v1612 = vld [vmem:[#allocation2 + $0xb0] sm:$0xff]
        %v1613 = vld [vmem:[#allocation2 + $0xb8] sm:$0xff]
        %v1614 = vld [vmem:[#allocation2 + $0xc0] sm:$0xff]
        %v1615 = vld [vmem:[#allocation2 + $0xc8] sm:$0xff]
        %v1616 = vld [vmem:[#allocation2 + $0xd0] sm:$0xff]
        %v1617 = vld [vmem:[#allocation2 + $0xd8] sm:$0xff]
        %v1618 = vld [vmem:[#allocation2 + $0xe0] sm:$0xff]
        %v1619 = vld [vmem:[#allocation2 + $0xe8] sm:$0xff]
        %v1620 = vld [vmem:[#allocation2 + $0xf0] sm:$0xff]
        %v1621 = vld [vmem:[#allocation2 + $0xf8] sm:$0xff]
        %v1622 = vld [vmem:[#allocation2 + $0x100] sm:$0xff]
        %v1623 = vld [vmem:[#allocation2 + $0x108] sm:$0xff]
        %v1624 = vld [vmem:[#allocation2 + $0x110] sm:$0xff]
        %v1625 = vld [vmem:[#allocation2 + $0x118] sm:$0xff]
        %s1626 = scalar_lea.vmem %s1, 16
        %v1627 = vld [vmem:[%s1626] sm:$0xf]
        %vm1628 = vsmask.f32 6400
        %v1629 = vrot.slane %v710, 1
        %v1630 = vrot.slane %v706, 2
        %v1631 = vor.u32 %v1629, %v1630
        %v1632 = vrot.slane %v717, 1
        %v1633 = vrot.slane %v713, 2
        %v1634 = vor.u32 %v1632, %v1633
        %v1635 = vsel %vm1628, %v1631, %v1634
        %v1636 = vrot.slane %v724, 1
        %v1637 = vrot.slane %v720, 2
        %v1638 = vor.u32 %v1636, %v1637
        %v1639 = vsel %vm1628, %v1634, %v1638
        %v1640 = vrot.slane %v731, 1
        %v1641 = vrot.slane %v727, 2
        %v1642 = vor.u32 %v1640, %v1641
        %v1643 = vsel %vm1628, %v1638, %v1642
        %v1644 = vrot.slane %v738, 1
        %v1645 = vrot.slane %v734, 2
        %v1646 = vor.u32 %v1644, %v1645
        %v1647 = vsel %vm1628, %v1642, %v1646
        %v1648 = vrot.slane %v745, 1
        %v1649 = vrot.slane %v741, 2
        %v1650 = vor.u32 %v1648, %v1649
        %v1651 = vsel %vm1628, %v1646, %v1650
        %v1652 = vrot.slane %v752, 1
        %v1653 = vrot.slane %v748, 2
        %v1654 = vor.u32 %v1652, %v1653
        %v1655 = vsel %vm1628, %v1650, %v1654
        %v1656 = vrot.slane %v759, 1
        %v1657 = vrot.slane %v755, 2
        %v1658 = vor.u32 %v1656, %v1657
        %v1659 = vsel %vm1628, %v1654, %v1658
        %v1660 = vrot.slane %v766, 1
        %v1661 = vrot.slane %v762, 2
        %v1662 = vor.u32 %v1660, %v1661
        %v1663 = vsel %vm1628, %v1658, %v1662
        %v1664 = vrot.slane %v773, 1
        %v1665 = vrot.slane %v769, 2
        %v1666 = vor.u32 %v1664, %v1665
        %v1667 = vsel %vm1628, %v1662, %v1666
        %v1668 = vrot.slane %v780, 1
        %v1669 = vrot.slane %v776, 2
        %v1670 = vor.u32 %v1668, %v1669
        %v1671 = vsel %vm1628, %v1666, %v1670
        %v1672 = vrot.slane %v787, 1
        %v1673 = vrot.slane %v783, 2
        %v1674 = vor.u32 %v1672, %v1673
        %v1675 = vsel %vm1628, %v1670, %v1674
        %v1676 = vrot.slane %v794, 1
        %v1677 = vrot.slane %v790, 2
        %v1678 = vor.u32 %v1676, %v1677
        %v1679 = vsel %vm1628, %v1674, %v1678
        %v1680 = vrot.slane %v801, 1
        %v1681 = vrot.slane %v797, 2
        %v1682 = vor.u32 %v1680, %v1681
        %v1683 = vsel %vm1628, %v1678, %v1682
        %v1684 = vrot.slane %v808, 1
        %v1685 = vrot.slane %v804, 2
        %v1686 = vor.u32 %v1684, %v1685
        %v1687 = vsel %vm1628, %v1682, %v1686
        %v1688 = vrot.slane %v815, 1
        %v1689 = vrot.slane %v811, 2
        %v1690 = vor.u32 %v1688, %v1689
        %v1691 = vsel %vm1628, %v1686, %v1690
        %v1692 = vrot.slane %v822, 1
        %v1693 = vrot.slane %v818, 2
        %v1694 = vor.u32 %v1692, %v1693
        %v1695 = vsel %vm1628, %v1690, %v1694
        %v1697 = vshrl.u32 %v1404, 16
        %v1699 = vrot.slane %v1697, 1
        %v1700 = vshll.u32 %v1404, 16
        %v1702 = vrot.slane %v1700, 2
        %v1703 = vor.u32 %v1699, %v1702
        %v1704 = vsel %vm1628, %v1694, %v1703
        %v1706 = vshrl.u32 %v1405, 16
        %v1708 = vrot.slane %v1706, 1
        %v1709 = vshll.u32 %v1405, 16
        %v1711 = vrot.slane %v1709, 2
        %v1712 = vor.u32 %v1708, %v1711
        %v1713 = vsel %vm1628, %v1703, %v1712
        %v1715 = vsel %vm428, %v1635, 0
        %v1718 = vsel %vm428, %v1639, 0
        %v1721 = vsel %vm428, %v1643, 0
        %v1724 = vsel %vm428, %v1647, 0
        %v1727 = vsel %vm428, %v1651, 0
        %v1730 = vsel %vm428, %v1655, 0
        %v1733 = vsel %vm428, %v1659, 0
        %v1736 = vsel %vm428, %v1663, 0
        %v1739 = vsel %vm428, %v1667, 0
        %v1742 = vsel %vm428, %v1671, 0
        %v1745 = vsel %vm428, %v1675, 0
        %v1748 = vsel %vm428, %v1679, 0
        %v1751 = vsel %vm428, %v1683, 0
        %v1754 = vsel %vm428, %v1687, 0
        %v1757 = vsel %vm428, %v1691, 0
        %v1760 = vsel %vm428, %v1695, 0
        %v1763 = vsel %vm428, %v1704, 0
        %v1766 = vsel %vm428, %v1713, 0
        %v1769 = vsel %vm483, %v1627, 0
        %1771 = vmatpush.bf16.msra.mxu0 0
        %1772 = vmatpush.bf16.msra.mxu0 0
        %1773 = vmatpush.bf16.msra.mxu0 0
        %1774 = vmatpush.bf16.msra.mxu0 0
        %1775 = vmatpush.bf16.msra.mxu0 0
        %1776 = vmatpush.bf16.msra.mxu0 0
        %1777 = vmatpush.bf16.msra.mxu0 0
        %1778 = vmatpush.bf16.msra.mxu0 %v1769
        %1779 = vmatmul.bf16.gmra.mxu0 %v1715
        %v1780 = vpop.f32.mrf.mxu0
        %v1781 = vadd.f32 0.0, %v1780
        %v1782 = vpop.f32.mrf.mxu0
        %v1783 = vadd.f32 0.0, %v1782
        %1784 = vmatmul.bf16.gmra.mxu0 %v1718
        %v1785 = vpop.f32.mrf.mxu0
        %v1786 = vadd.f32 0.0, %v1785
        %v1787 = vpop.f32.mrf.mxu0
        %v1788 = vadd.f32 0.0, %v1787
        %1789 = vmatmul.bf16.gmra.mxu0 %v1721
        %v1790 = vpop.f32.mrf.mxu0
        %v1791 = vadd.f32 0.0, %v1790
        %v1792 = vpop.f32.mrf.mxu0
        %v1793 = vadd.f32 0.0, %v1792
        %1794 = vmatmul.bf16.gmra.mxu0 %v1724
        %v1795 = vpop.f32.mrf.mxu0
        %v1796 = vadd.f32 0.0, %v1795
        %v1797 = vpop.f32.mrf.mxu0
        %v1798 = vadd.f32 0.0, %v1797
        %1799 = vmatmul.bf16.gmra.mxu0 %v1727
        %v1800 = vpop.f32.mrf.mxu0
        %v1801 = vadd.f32 0.0, %v1800
        %v1802 = vpop.f32.mrf.mxu0
        %v1803 = vadd.f32 0.0, %v1802
        %1804 = vmatmul.bf16.gmra.mxu0 %v1730
        %v1805 = vpop.f32.mrf.mxu0
        %v1806 = vadd.f32 0.0, %v1805
        %v1807 = vpop.f32.mrf.mxu0
        %v1808 = vadd.f32 0.0, %v1807
        %1809 = vmatmul.bf16.gmra.mxu0 %v1733
        %v1810 = vpop.f32.mrf.mxu0
        %v1811 = vadd.f32 0.0, %v1810
        %v1812 = vpop.f32.mrf.mxu0
        %v1813 = vadd.f32 0.0, %v1812
        %1814 = vmatmul.bf16.gmra.mxu0 %v1736
        %v1815 = vpop.f32.mrf.mxu0
        %v1816 = vadd.f32 0.0, %v1815
        %v1817 = vpop.f32.mrf.mxu0
        %v1818 = vadd.f32 0.0, %v1817
        %1819 = vmatmul.bf16.gmra.mxu0 %v1739
        %v1820 = vpop.f32.mrf.mxu0
        %v1821 = vadd.f32 0.0, %v1820
        %v1822 = vpop.f32.mrf.mxu0
        %v1823 = vadd.f32 0.0, %v1822
        %1824 = vmatmul.bf16.gmra.mxu0 %v1742
        %v1825 = vpop.f32.mrf.mxu0
        %v1826 = vadd.f32 0.0, %v1825
        %v1827 = vpop.f32.mrf.mxu0
        %v1828 = vadd.f32 0.0, %v1827
        %1829 = vmatmul.bf16.gmra.mxu0 %v1745
        %v1830 = vpop.f32.mrf.mxu0
        %v1831 = vadd.f32 0.0, %v1830
        %v1832 = vpop.f32.mrf.mxu0
        %v1833 = vadd.f32 0.0, %v1832
        %1834 = vmatmul.bf16.gmra.mxu0 %v1748
        %v1835 = vpop.f32.mrf.mxu0
        %v1836 = vadd.f32 0.0, %v1835
        %v1837 = vpop.f32.mrf.mxu0
        %v1838 = vadd.f32 0.0, %v1837
        %1839 = vmatmul.bf16.gmra.mxu0 %v1751
        %v1840 = vpop.f32.mrf.mxu0
        %v1841 = vadd.f32 0.0, %v1840
        %v1842 = vpop.f32.mrf.mxu0
        %v1843 = vadd.f32 0.0, %v1842
        %1844 = vmatmul.bf16.gmra.mxu0 %v1754
        %v1845 = vpop.f32.mrf.mxu0
        %v1846 = vadd.f32 0.0, %v1845
        %v1847 = vpop.f32.mrf.mxu0
        %v1848 = vadd.f32 0.0, %v1847
        %1849 = vmatmul.bf16.gmra.mxu0 %v1757
        %v1850 = vpop.f32.mrf.mxu0
        %v1851 = vadd.f32 0.0, %v1850
        %v1852 = vpop.f32.mrf.mxu0
        %v1853 = vadd.f32 0.0, %v1852
        %1854 = vmatmul.bf16.gmra.mxu0 %v1760
        %v1855 = vpop.f32.mrf.mxu0
        %v1856 = vadd.f32 0.0, %v1855
        %v1857 = vpop.f32.mrf.mxu0
        %v1858 = vadd.f32 0.0, %v1857
        %1859 = vmatmul.bf16.gmra.mxu0 %v1763
        %v1860 = vpop.f32.mrf.mxu0
        %v1861 = vadd.f32 0.0, %v1860
        %v1862 = vpop.f32.mrf.mxu0
        %v1863 = vadd.f32 0.0, %v1862
        %1864 = vmatmul.bf16.gmra.mxu0 %v1766
        %v1865 = vpop.f32.mrf.mxu0
        %v1866 = vadd.f32 0.0, %v1865
        %v1867 = vpop.f32.mrf.mxu0
        %v1868 = vadd.f32 0.0, %v1867
        %1869 = vdwg.mxu0
        %v1870 = vadd.f32 %v1590, %v1781
        %v1871 = vadd.f32 %v1591, %v1783
        %v1872 = vadd.f32 %v1592, %v1786
        %v1873 = vadd.f32 %v1593, %v1788
        %v1874 = vadd.f32 %v1594, %v1791
        %v1875 = vadd.f32 %v1595, %v1793
        %v1876 = vadd.f32 %v1596, %v1796
        %v1877 = vadd.f32 %v1597, %v1798
        %v1878 = vadd.f32 %v1598, %v1801
        %v1879 = vadd.f32 %v1599, %v1803
        %v1880 = vadd.f32 %v1600, %v1806
        %v1881 = vadd.f32 %v1601, %v1808
        %v1882 = vadd.f32 %v1602, %v1811
        %v1883 = vadd.f32 %v1603, %v1813
        %v1884 = vadd.f32 %v1604, %v1816
        %v1885 = vadd.f32 %v1605, %v1818
        %v1886 = vadd.f32 %v1606, %v1821
        %v1887 = vadd.f32 %v1607, %v1823
        %v1888 = vadd.f32 %v1608, %v1826
        %v1889 = vadd.f32 %v1609, %v1828
        %v1890 = vadd.f32 %v1610, %v1831
        %v1891 = vadd.f32 %v1611, %v1833
        %v1892 = vadd.f32 %v1612, %v1836
        %v1893 = vadd.f32 %v1613, %v1838
        %v1894 = vadd.f32 %v1614, %v1841
        %v1895 = vadd.f32 %v1615, %v1843
        %v1896 = vadd.f32 %v1616, %v1846
        %v1897 = vadd.f32 %v1617, %v1848
        %v1898 = vadd.f32 %v1618, %v1851
        %v1899 = vadd.f32 %v1619, %v1853
        %v1900 = vadd.f32 %v1620, %v1856
        %v1901 = vadd.f32 %v1621, %v1858
        %v1902 = vadd.f32 %v1622, %v1861
        %v1903 = vadd.f32 %v1623, %v1863
        %v1904 = vadd.f32 %v1624, %v1866
        %v1905 = vadd.f32 %v1625, %v1868
        %1906 = vst [vmem:[#allocation2] sm:$0xff] %v1870
        %1907 = vst [vmem:[#allocation2 + $0x8] sm:$0xff] %v1871
        %1908 = vst [vmem:[#allocation2 + $0x10] sm:$0xff] %v1872
        %1909 = vst [vmem:[#allocation2 + $0x18] sm:$0xff] %v1873
        %1910 = vst [vmem:[#allocation2 + $0x20] sm:$0xff] %v1874
        %1911 = vst [vmem:[#allocation2 + $0x28] sm:$0xff] %v1875
        %1912 = vst [vmem:[#allocation2 + $0x30] sm:$0xff] %v1876
        %1913 = vst [vmem:[#allocation2 + $0x38] sm:$0xff] %v1877
        %1914 = vst [vmem:[#allocation2 + $0x40] sm:$0xff] %v1878
        %1915 = vst [vmem:[#allocation2 + $0x48] sm:$0xff] %v1879
        %1916 = vst [vmem:[#allocation2 + $0x50] sm:$0xff] %v1880
        %1917 = vst [vmem:[#allocation2 + $0x58] sm:$0xff] %v1881
        %1918 = vst [vmem:[#allocation2 + $0x60] sm:$0xff] %v1882
        %1919 = vst [vmem:[#allocation2 + $0x68] sm:$0xff] %v1883
        %1920 = vst [vmem:[#allocation2 + $0x70] sm:$0xff] %v1884
        %1921 = vst [vmem:[#allocation2 + $0x78] sm:$0xff] %v1885
        %1922 = vst [vmem:[#allocation2 + $0x80] sm:$0xff] %v1886
        %1923 = vst [vmem:[#allocation2 + $0x88] sm:$0xff] %v1887
        %1924 = vst [vmem:[#allocation2 + $0x90] sm:$0xff] %v1888
        %1925 = vst [vmem:[#allocation2 + $0x98] sm:$0xff] %v1889
        %1926 = vst [vmem:[#allocation2 + $0xa0] sm:$0xff] %v1890
        %1927 = vst [vmem:[#allocation2 + $0xa8] sm:$0xff] %v1891
        %1928 = vst [vmem:[#allocation2 + $0xb0] sm:$0xff] %v1892
        %1929 = vst [vmem:[#allocation2 + $0xb8] sm:$0xff] %v1893
        %1930 = vst [vmem:[#allocation2 + $0xc0] sm:$0xff] %v1894
        %1931 = vst [vmem:[#allocation2 + $0xc8] sm:$0xff] %v1895
        %1932 = vst [vmem:[#allocation2 + $0xd0] sm:$0xff] %v1896
        %1933 = vst [vmem:[#allocation2 + $0xd8] sm:$0xff] %v1897
        %1934 = vst [vmem:[#allocation2 + $0xe0] sm:$0xff] %v1898
        %1935 = vst [vmem:[#allocation2 + $0xe8] sm:$0xff] %v1899
        %1936 = vst [vmem:[#allocation2 + $0xf0] sm:$0xff] %v1900
        %1937 = vst [vmem:[#allocation2 + $0xf8] sm:$0xff] %v1901
        %1938 = vst [vmem:[#allocation2 + $0x100] sm:$0xff] %v1902
        %1939 = vst [vmem:[#allocation2 + $0x108] sm:$0xff] %v1903
        %1940 = vst [vmem:[#allocation2 + $0x110] sm:$0xff] %v1904
        %1941 = vst [vmem:[#allocation2 + $0x118] sm:$0xff] %v1905
        %v1942 = vld [vmem:[#allocation2] sm:$0xff]
        %v1943 = vld [vmem:[#allocation2 + $0x8] sm:$0xff]
        %v1944 = vld [vmem:[#allocation2 + $0x10] sm:$0xff]
        %v1945 = vld [vmem:[#allocation2 + $0x18] sm:$0xff]
        %v1946 = vld [vmem:[#allocation2 + $0x20] sm:$0xff]
        %v1947 = vld [vmem:[#allocation2 + $0x28] sm:$0xff]
        %v1948 = vld [vmem:[#allocation2 + $0x30] sm:$0xff]
        %v1949 = vld [vmem:[#allocation2 + $0x38] sm:$0xff]
        %v1950 = vld [vmem:[#allocation2 + $0x40] sm:$0xff]
        %v1951 = vld [vmem:[#allocation2 + $0x48] sm:$0xff]
        %v1952 = vld [vmem:[#allocation2 + $0x50] sm:$0xff]
        %v1953 = vld [vmem:[#allocation2 + $0x58] sm:$0xff]
        %v1954 = vld [vmem:[#allocation2 + $0x60] sm:$0xff]
        %v1955 = vld [vmem:[#allocation2 + $0x68] sm:$0xff]
        %v1956 = vld [vmem:[#allocation2 + $0x70] sm:$0xff]
        %v1957 = vld [vmem:[#allocation2 + $0x78] sm:$0xff]
        %v1958 = vld [vmem:[#allocation2 + $0x80] sm:$0xff]
        %v1959 = vld [vmem:[#allocation2 + $0x88] sm:$0xff]
        %v1960 = vld [vmem:[#allocation2 + $0x90] sm:$0xff]
        %v1961 = vld [vmem:[#allocation2 + $0x98] sm:$0xff]
        %v1962 = vld [vmem:[#allocation2 + $0xa0] sm:$0xff]
        %v1963 = vld [vmem:[#allocation2 + $0xa8] sm:$0xff]
        %v1964 = vld [vmem:[#allocation2 + $0xb0] sm:$0xff]
        %v1965 = vld [vmem:[#allocation2 + $0xb8] sm:$0xff]
        %v1966 = vld [vmem:[#allocation2 + $0xc0] sm:$0xff]
        %v1967 = vld [vmem:[#allocation2 + $0xc8] sm:$0xff]
        %v1968 = vld [vmem:[#allocation2 + $0xd0] sm:$0xff]
        %v1969 = vld [vmem:[#allocation2 + $0xd8] sm:$0xff]
        %v1970 = vld [vmem:[#allocation2 + $0xe0] sm:$0xff]
        %v1971 = vld [vmem:[#allocation2 + $0xe8] sm:$0xff]
        %v1972 = vld [vmem:[#allocation2 + $0xf0] sm:$0xff]
        %v1973 = vld [vmem:[#allocation2 + $0xf8] sm:$0xff]
        %v1974 = vld [vmem:[#allocation2 + $0x100] sm:$0xff]
        %v1975 = vld [vmem:[#allocation2 + $0x108] sm:$0xff]
        %v1976 = vld [vmem:[#allocation2 + $0x110] sm:$0xff]
        %v1977 = vld [vmem:[#allocation2 + $0x118] sm:$0xff]
        %s1978 = scalar_lea.vmem %s1, 20
        %v1979 = vld [vmem:[%s1978] sm:$0xf]
        %vm1980 = vcmask 1045504
        %v1981 = vrot.slane %v411, 2
        %v1982 = vrot.slane %v412, 2
        %v1983 = vsel %vm1980, %v1981, %v1982
        %v1984 = vrot.slane %v413, 2
        %v1985 = vsel %vm1980, %v1982, %v1984
        %v1986 = vrot.slane %v414, 2
        %v1987 = vsel %vm1980, %v1984, %v1986
        %v1988 = vrot.slane %v415, 2
        %v1989 = vsel %vm1980, %v1986, %v1988
        %v1990 = vrot.slane %v416, 2
        %v1991 = vsel %vm1980, %v1988, %v1990
        %v1992 = vrot.slane %v417, 2
        %v1993 = vsel %vm1980, %v1990, %v1992
        %v1994 = vrot.slane %v418, 2
        %v1995 = vsel %vm1980, %v1992, %v1994
        %v1996 = vrot.slane %v419, 2
        %v1997 = vsel %vm1980, %v1994, %v1996
        %v1998 = vrot.slane %v420, 2
        %v1999 = vsel %vm1980, %v1996, %v1998
        %v2000 = vrot.slane %v421, 2
        %v2001 = vsel %vm1980, %v1998, %v2000
        %v2002 = vrot.slane %v422, 2
        %v2003 = vsel %vm1980, %v2000, %v2002
        %v2004 = vrot.slane %v423, 2
        %v2005 = vsel %vm1980, %v2002, %v2004
        %v2006 = vrot.slane %v424, 2
        %v2007 = vsel %vm1980, %v2004, %v2006
        %v2008 = vrot.slane %v425, 2
        %v2009 = vsel %vm1980, %v2006, %v2008
        %v2010 = vrot.slane %v426, 2
        %v2011 = vsel %vm1980, %v2008, %v2010
        %v2012 = vrot.slane %v427, 2
        %v2013 = vsel %vm1980, %v2010, %v2012
        %v2014 = vrot.slane %v1404, 2
        %v2015 = vsel %vm1980, %v2012, %v2014
        %v2016 = vrot.slane %v1405, 2
        %v2017 = vsel %vm1980, %v2014, %v2016
        %v2019 = vsel %vm428, %v1983, 0
        %v2022 = vsel %vm428, %v1985, 0
        %v2025 = vsel %vm428, %v1987, 0
        %v2028 = vsel %vm428, %v1989, 0
        %v2031 = vsel %vm428, %v1991, 0
        %v2034 = vsel %vm428, %v1993, 0
        %v2037 = vsel %vm428, %v1995, 0
        %v2040 = vsel %vm428, %v1997, 0
        %v2043 = vsel %vm428, %v1999, 0
        %v2046 = vsel %vm428, %v2001, 0
        %v2049 = vsel %vm428, %v2003, 0
        %v2052 = vsel %vm428, %v2005, 0
        %v2055 = vsel %vm428, %v2007, 0
        %v2058 = vsel %vm428, %v2009, 0
        %v2061 = vsel %vm428, %v2011, 0
        %v2064 = vsel %vm428, %v2013, 0
        %v2067 = vsel %vm428, %v2015, 0
        %v2070 = vsel %vm428, %v2017, 0
        %v2073 = vsel %vm483, %v1979, 0
        %2075 = vmatpush.bf16.msra.mxu0 0
        %2076 = vmatpush.bf16.msra.mxu0 0
        %2077 = vmatpush.bf16.msra.mxu0 0
        %2078 = vmatpush.bf16.msra.mxu0 0
        %2079 = vmatpush.bf16.msra.mxu0 0
        %2080 = vmatpush.bf16.msra.mxu0 0
        %2081 = vmatpush.bf16.msra.mxu0 0
        %2082 = vmatpush.bf16.msra.mxu0 %v2073
        %2083 = vmatmul.bf16.gmra.mxu0 %v2019
        %v2084 = vpop.f32.mrf.mxu0
        %v2085 = vadd.f32 0.0, %v2084
        %v2086 = vpop.f32.mrf.mxu0
        %v2087 = vadd.f32 0.0, %v2086
        %2088 = vmatmul.bf16.gmra.mxu0 %v2022
        %v2089 = vpop.f32.mrf.mxu0
        %v2090 = vadd.f32 0.0, %v2089
        %v2091 = vpop.f32.mrf.mxu0
        %v2092 = vadd.f32 0.0, %v2091
        %2093 = vmatmul.bf16.gmra.mxu0 %v2025
        %v2094 = vpop.f32.mrf.mxu0
        %v2095 = vadd.f32 0.0, %v2094
        %v2096 = vpop.f32.mrf.mxu0
        %v2097 = vadd.f32 0.0, %v2096
        %2098 = vmatmul.bf16.gmra.mxu0 %v2028
        %v2099 = vpop.f32.mrf.mxu0
        %v2100 = vadd.f32 0.0, %v2099
        %v2101 = vpop.f32.mrf.mxu0
        %v2102 = vadd.f32 0.0, %v2101
        %2103 = vmatmul.bf16.gmra.mxu0 %v2031
        %v2104 = vpop.f32.mrf.mxu0
        %v2105 = vadd.f32 0.0, %v2104
        %v2106 = vpop.f32.mrf.mxu0
        %v2107 = vadd.f32 0.0, %v2106
        %2108 = vmatmul.bf16.gmra.mxu0 %v2034
        %v2109 = vpop.f32.mrf.mxu0
        %v2110 = vadd.f32 0.0, %v2109
        %v2111 = vpop.f32.mrf.mxu0
        %v2112 = vadd.f32 0.0, %v2111
        %2113 = vmatmul.bf16.gmra.mxu0 %v2037
        %v2114 = vpop.f32.mrf.mxu0
        %v2115 = vadd.f32 0.0, %v2114
        %v2116 = vpop.f32.mrf.mxu0
        %v2117 = vadd.f32 0.0, %v2116
        %2118 = vmatmul.bf16.gmra.mxu0 %v2040
        %v2119 = vpop.f32.mrf.mxu0
        %v2120 = vadd.f32 0.0, %v2119
        %v2121 = vpop.f32.mrf.mxu0
        %v2122 = vadd.f32 0.0, %v2121
        %2123 = vmatmul.bf16.gmra.mxu0 %v2043
        %v2124 = vpop.f32.mrf.mxu0
        %v2125 = vadd.f32 0.0, %v2124
        %v2126 = vpop.f32.mrf.mxu0
        %v2127 = vadd.f32 0.0, %v2126
        %2128 = vmatmul.bf16.gmra.mxu0 %v2046
        %v2129 = vpop.f32.mrf.mxu0
        %v2130 = vadd.f32 0.0, %v2129
        %v2131 = vpop.f32.mrf.mxu0
        %v2132 = vadd.f32 0.0, %v2131
        %2133 = vmatmul.bf16.gmra.mxu0 %v2049
        %v2134 = vpop.f32.mrf.mxu0
        %v2135 = vadd.f32 0.0, %v2134
        %v2136 = vpop.f32.mrf.mxu0
        %v2137 = vadd.f32 0.0, %v2136
        %2138 = vmatmul.bf16.gmra.mxu0 %v2052
        %v2139 = vpop.f32.mrf.mxu0
        %v2140 = vadd.f32 0.0, %v2139
        %v2141 = vpop.f32.mrf.mxu0
        %v2142 = vadd.f32 0.0, %v2141
        %2143 = vmatmul.bf16.gmra.mxu0 %v2055
        %v2144 = vpop.f32.mrf.mxu0
        %v2145 = vadd.f32 0.0, %v2144
        %v2146 = vpop.f32.mrf.mxu0
        %v2147 = vadd.f32 0.0, %v2146
        %2148 = vmatmul.bf16.gmra.mxu0 %v2058
        %v2149 = vpop.f32.mrf.mxu0
        %v2150 = vadd.f32 0.0, %v2149
        %v2151 = vpop.f32.mrf.mxu0
        %v2152 = vadd.f32 0.0, %v2151
        %2153 = vmatmul.bf16.gmra.mxu0 %v2061
        %v2154 = vpop.f32.mrf.mxu0
        %v2155 = vadd.f32 0.0, %v2154
        %v2156 = vpop.f32.mrf.mxu0
        %v2157 = vadd.f32 0.0, %v2156
        %2158 = vmatmul.bf16.gmra.mxu0 %v2064
        %v2159 = vpop.f32.mrf.mxu0
        %v2160 = vadd.f32 0.0, %v2159
        %v2161 = vpop.f32.mrf.mxu0
        %v2162 = vadd.f32 0.0, %v2161
        %2163 = vmatmul.bf16.gmra.mxu0 %v2067
        %v2164 = vpop.f32.mrf.mxu0
        %v2165 = vadd.f32 0.0, %v2164
        %v2166 = vpop.f32.mrf.mxu0
        %v2167 = vadd.f32 0.0, %v2166
        %2168 = vmatmul.bf16.gmra.mxu0 %v2070
        %v2169 = vpop.f32.mrf.mxu0
        %v2170 = vadd.f32 0.0, %v2169
        %v2171 = vpop.f32.mrf.mxu0
        %v2172 = vadd.f32 0.0, %v2171
        %2173 = vdwg.mxu0
        %v2174 = vadd.f32 %v1942, %v2085
        %v2175 = vadd.f32 %v1943, %v2087
        %v2176 = vadd.f32 %v1944, %v2090
        %v2177 = vadd.f32 %v1945, %v2092
        %v2178 = vadd.f32 %v1946, %v2095
        %v2179 = vadd.f32 %v1947, %v2097
        %v2180 = vadd.f32 %v1948, %v2100
        %v2181 = vadd.f32 %v1949, %v2102
        %v2182 = vadd.f32 %v1950, %v2105
        %v2183 = vadd.f32 %v1951, %v2107
        %v2184 = vadd.f32 %v1952, %v2110
        %v2185 = vadd.f32 %v1953, %v2112
        %v2186 = vadd.f32 %v1954, %v2115
        %v2187 = vadd.f32 %v1955, %v2117
        %v2188 = vadd.f32 %v1956, %v2120
        %v2189 = vadd.f32 %v1957, %v2122
        %v2190 = vadd.f32 %v1958, %v2125
        %v2191 = vadd.f32 %v1959, %v2127
        %v2192 = vadd.f32 %v1960, %v2130
        %v2193 = vadd.f32 %v1961, %v2132
        %v2194 = vadd.f32 %v1962, %v2135
        %v2195 = vadd.f32 %v1963, %v2137
        %v2196 = vadd.f32 %v1964, %v2140
        %v2197 = vadd.f32 %v1965, %v2142
        %v2198 = vadd.f32 %v1966, %v2145
        %v2199 = vadd.f32 %v1967, %v2147
        %v2200 = vadd.f32 %v1968, %v2150
        %v2201 = vadd.f32 %v1969, %v2152
        %v2202 = vadd.f32 %v1970, %v2155
        %v2203 = vadd.f32 %v1971, %v2157
        %v2204 = vadd.f32 %v1972, %v2160
        %v2205 = vadd.f32 %v1973, %v2162
        %v2206 = vadd.f32 %v1974, %v2165
        %v2207 = vadd.f32 %v1975, %v2167
        %v2208 = vadd.f32 %v1976, %v2170
        %v2209 = vadd.f32 %v1977, %v2172
        %2210 = vst [vmem:[#allocation2] sm:$0xff] %v2174
        %2211 = vst [vmem:[#allocation2 + $0x8] sm:$0xff] %v2175
        %2212 = vst [vmem:[#allocation2 + $0x10] sm:$0xff] %v2176
        %2213 = vst [vmem:[#allocation2 + $0x18] sm:$0xff] %v2177
        %2214 = vst [vmem:[#allocation2 + $0x20] sm:$0xff] %v2178
        %2215 = vst [vmem:[#allocation2 + $0x28] sm:$0xff] %v2179
        %2216 = vst [vmem:[#allocation2 + $0x30] sm:$0xff] %v2180
        %2217 = vst [vmem:[#allocation2 + $0x38] sm:$0xff] %v2181
        %2218 = vst [vmem:[#allocation2 + $0x40] sm:$0xff] %v2182
        %2219 = vst [vmem:[#allocation2 + $0x48] sm:$0xff] %v2183
        %2220 = vst [vmem:[#allocation2 + $0x50] sm:$0xff] %v2184
        %2221 = vst [vmem:[#allocation2 + $0x58] sm:$0xff] %v2185
        %2222 = vst [vmem:[#allocation2 + $0x60] sm:$0xff] %v2186
        %2223 = vst [vmem:[#allocation2 + $0x68] sm:$0xff] %v2187
        %2224 = vst [vmem:[#allocation2 + $0x70] sm:$0xff] %v2188
        %2225 = vst [vmem:[#allocation2 + $0x78] sm:$0xff] %v2189
        %2226 = vst [vmem:[#allocation2 + $0x80] sm:$0xff] %v2190
        %2227 = vst [vmem:[#allocation2 + $0x88] sm:$0xff] %v2191
        %2228 = vst [vmem:[#allocation2 + $0x90] sm:$0xff] %v2192
        %2229 = vst [vmem:[#allocation2 + $0x98] sm:$0xff] %v2193
        %2230 = vst [vmem:[#allocation2 + $0xa0] sm:$0xff] %v2194
        %2231 = vst [vmem:[#allocation2 + $0xa8] sm:$0xff] %v2195
        %2232 = vst [vmem:[#allocation2 + $0xb0] sm:$0xff] %v2196
        %2233 = vst [vmem:[#allocation2 + $0xb8] sm:$0xff] %v2197
        %2234 = vst [vmem:[#allocation2 + $0xc0] sm:$0xff] %v2198
        %2235 = vst [vmem:[#allocation2 + $0xc8] sm:$0xff] %v2199
        %2236 = vst [vmem:[#allocation2 + $0xd0] sm:$0xff] %v2200
        %2237 = vst [vmem:[#allocation2 + $0xd8] sm:$0xff] %v2201
        %2238 = vst [vmem:[#allocation2 + $0xe0] sm:$0xff] %v2202
        %2239 = vst [vmem:[#allocation2 + $0xe8] sm:$0xff] %v2203
        %2240 = vst [vmem:[#allocation2 + $0xf0] sm:$0xff] %v2204
        %2241 = vst [vmem:[#allocation2 + $0xf8] sm:$0xff] %v2205
        %2242 = vst [vmem:[#allocation2 + $0x100] sm:$0xff] %v2206
        %2243 = vst [vmem:[#allocation2 + $0x108] sm:$0xff] %v2207
        %2244 = vst [vmem:[#allocation2 + $0x110] sm:$0xff] %v2208
        %2245 = vst [vmem:[#allocation2 + $0x118] sm:$0xff] %v2209
        %v2246 = vld [vmem:[#allocation2] sm:$0xff]
        %v2247 = vld [vmem:[#allocation2 + $0x8] sm:$0xff]
        %v2248 = vld [vmem:[#allocation2 + $0x10] sm:$0xff]
        %v2249 = vld [vmem:[#allocation2 + $0x18] sm:$0xff]
        %v2250 = vld [vmem:[#allocation2 + $0x20] sm:$0xff]
        %v2251 = vld [vmem:[#allocation2 + $0x28] sm:$0xff]
        %v2252 = vld [vmem:[#allocation2 + $0x30] sm:$0xff]
        %v2253 = vld [vmem:[#allocation2 + $0x38] sm:$0xff]
        %v2254 = vld [vmem:[#allocation2 + $0x40] sm:$0xff]
        %v2255 = vld [vmem:[#allocation2 + $0x48] sm:$0xff]
        %v2256 = vld [vmem:[#allocation2 + $0x50] sm:$0xff]
        %v2257 = vld [vmem:[#allocation2 + $0x58] sm:$0xff]
        %v2258 = vld [vmem:[#allocation2 + $0x60] sm:$0xff]
        %v2259 = vld [vmem:[#allocation2 + $0x68] sm:$0xff]
        %v2260 = vld [vmem:[#allocation2 + $0x70] sm:$0xff]
        %v2261 = vld [vmem:[#allocation2 + $0x78] sm:$0xff]
        %v2262 = vld [vmem:[#allocation2 + $0x80] sm:$0xff]
        %v2263 = vld [vmem:[#allocation2 + $0x88] sm:$0xff]
        %v2264 = vld [vmem:[#allocation2 + $0x90] sm:$0xff]
        %v2265 = vld [vmem:[#allocation2 + $0x98] sm:$0xff]
        %v2266 = vld [vmem:[#allocation2 + $0xa0] sm:$0xff]
        %v2267 = vld [vmem:[#allocation2 + $0xa8] sm:$0xff]
        %v2268 = vld [vmem:[#allocation2 + $0xb0] sm:$0xff]
        %v2269 = vld [vmem:[#allocation2 + $0xb8] sm:$0xff]
        %v2270 = vld [vmem:[#allocation2 + $0xc0] sm:$0xff]
        %v2271 = vld [vmem:[#allocation2 + $0xc8] sm:$0xff]
        %v2272 = vld [vmem:[#allocation2 + $0xd0] sm:$0xff]
        %v2273 = vld [vmem:[#allocation2 + $0xd8] sm:$0xff]
        %v2274 = vld [vmem:[#allocation2 + $0xe0] sm:$0xff]
        %v2275 = vld [vmem:[#allocation2 + $0xe8] sm:$0xff]
        %v2276 = vld [vmem:[#allocation2 + $0xf0] sm:$0xff]
        %v2277 = vld [vmem:[#allocation2 + $0xf8] sm:$0xff]
        %v2278 = vld [vmem:[#allocation2 + $0x100] sm:$0xff]
        %v2279 = vld [vmem:[#allocation2 + $0x108] sm:$0xff]
        %v2280 = vld [vmem:[#allocation2 + $0x110] sm:$0xff]
        %v2281 = vld [vmem:[#allocation2 + $0x118] sm:$0xff]
        %s2282 = scalar_lea.vmem %s1, 24
        %v2283 = vld [vmem:[%s2282] sm:$0xf]
        %v2286 = vunpack.c.l.b16 %v263
        %v2287 = vunpack.c.l.b16 %v264
        %v2288 = vpack.c.b16 %v2286, %v1403
        %v2289 = vpack.c.b16 %v2287, %v2287
        %v2290 = vrot.slane %v2288, 2
        %v2291 = vsel %vm1980, %v2014, %v2290
        %v2292 = vrot.slane %v2289, 2
        %v2293 = vsel %vm1980, %v2290, %v2292
        %v2295 = vsel %vm428, %v2291, 0
        %v2298 = vsel %vm428, %v2293, 0
        %v2301 = vsel %vm483, %v2283, 0
        %2303 = vmatpush.bf16.msra.mxu0 0
        %2304 = vmatpush.bf16.msra.mxu0 0
        %2305 = vmatpush.bf16.msra.mxu0 0
        %2306 = vmatpush.bf16.msra.mxu0 0
        %2307 = vmatpush.bf16.msra.mxu0 0
        %2308 = vmatpush.bf16.msra.mxu0 0
        %2309 = vmatpush.bf16.msra.mxu0 0
        %2310 = vmatpush.bf16.msra.mxu0 %v2301
        %2311 = vmatmul.bf16.gmra.mxu0 %v2022
        %v2312 = vpop.f32.mrf.mxu0
        %v2313 = vadd.f32 0.0, %v2312
        %v2314 = vpop.f32.mrf.mxu0
        %v2315 = vadd.f32 0.0, %v2314
        %2316 = vmatmul.bf16.gmra.mxu0 %v2025
        %v2317 = vpop.f32.mrf.mxu0
        %v2318 = vadd.f32 0.0, %v2317
        %v2319 = vpop.f32.mrf.mxu0
        %v2320 = vadd.f32 0.0, %v2319
        %2321 = vmatmul.bf16.gmra.mxu0 %v2028
        %v2322 = vpop.f32.mrf.mxu0
        %v2323 = vadd.f32 0.0, %v2322
        %v2324 = vpop.f32.mrf.mxu0
        %v2325 = vadd.f32 0.0, %v2324
        %2326 = vmatmul.bf16.gmra.mxu0 %v2031
        %v2327 = vpop.f32.mrf.mxu0
        %v2328 = vadd.f32 0.0, %v2327
        %v2329 = vpop.f32.mrf.mxu0
        %v2330 = vadd.f32 0.0, %v2329
        %2331 = vmatmul.bf16.gmra.mxu0 %v2034
        %v2332 = vpop.f32.mrf.mxu0
        %v2333 = vadd.f32 0.0, %v2332
        %v2334 = vpop.f32.mrf.mxu0
        %v2335 = vadd.f32 0.0, %v2334
        %2336 = vmatmul.bf16.gmra.mxu0 %v2037
        %v2337 = vpop.f32.mrf.mxu0
        %v2338 = vadd.f32 0.0, %v2337
        %v2339 = vpop.f32.mrf.mxu0
        %v2340 = vadd.f32 0.0, %v2339
        %2341 = vmatmul.bf16.gmra.mxu0 %v2040
        %v2342 = vpop.f32.mrf.mxu0
        %v2343 = vadd.f32 0.0, %v2342
        %v2344 = vpop.f32.mrf.mxu0
        %v2345 = vadd.f32 0.0, %v2344
        %2346 = vmatmul.bf16.gmra.mxu0 %v2043
        %v2347 = vpop.f32.mrf.mxu0
        %v2348 = vadd.f32 0.0, %v2347
        %v2349 = vpop.f32.mrf.mxu0
        %v2350 = vadd.f32 0.0, %v2349
        %2351 = vmatmul.bf16.gmra.mxu0 %v2046
        %v2352 = vpop.f32.mrf.mxu0
        %v2353 = vadd.f32 0.0, %v2352
        %v2354 = vpop.f32.mrf.mxu0
        %v2355 = vadd.f32 0.0, %v2354
        %2356 = vmatmul.bf16.gmra.mxu0 %v2049
        %v2357 = vpop.f32.mrf.mxu0
        %v2358 = vadd.f32 0.0, %v2357
        %v2359 = vpop.f32.mrf.mxu0
        %v2360 = vadd.f32 0.0, %v2359
        %2361 = vmatmul.bf16.gmra.mxu0 %v2052
        %v2362 = vpop.f32.mrf.mxu0
        %v2363 = vadd.f32 0.0, %v2362
        %v2364 = vpop.f32.mrf.mxu0
        %v2365 = vadd.f32 0.0, %v2364
        %2366 = vmatmul.bf16.gmra.mxu0 %v2055
        %v2367 = vpop.f32.mrf.mxu0
        %v2368 = vadd.f32 0.0, %v2367
        %v2369 = vpop.f32.mrf.mxu0
        %v2370 = vadd.f32 0.0, %v2369
        %2371 = vmatmul.bf16.gmra.mxu0 %v2058
        %v2372 = vpop.f32.mrf.mxu0
        %v2373 = vadd.f32 0.0, %v2372
        %v2374 = vpop.f32.mrf.mxu0
        %v2375 = vadd.f32 0.0, %v2374
        %2376 = vmatmul.bf16.gmra.mxu0 %v2061
        %v2377 = vpop.f32.mrf.mxu0
        %v2378 = vadd.f32 0.0, %v2377
        %v2379 = vpop.f32.mrf.mxu0
        %v2380 = vadd.f32 0.0, %v2379
        %2381 = vmatmul.bf16.gmra.mxu0 %v2064
        %v2382 = vpop.f32.mrf.mxu0
        %v2383 = vadd.f32 0.0, %v2382
        %v2384 = vpop.f32.mrf.mxu0
        %v2385 = vadd.f32 0.0, %v2384
        %2386 = vmatmul.bf16.gmra.mxu0 %v2067
        %v2387 = vpop.f32.mrf.mxu0
        %v2388 = vadd.f32 0.0, %v2387
        %v2389 = vpop.f32.mrf.mxu0
        %v2390 = vadd.f32 0.0, %v2389
        %2391 = vmatmul.bf16.gmra.mxu0 %v2295
        %v2392 = vpop.f32.mrf.mxu0
        %v2393 = vadd.f32 0.0, %v2392
        %v2394 = vpop.f32.mrf.mxu0
        %v2395 = vadd.f32 0.0, %v2394
        %2396 = vmatmul.bf16.gmra.mxu0 %v2298
        %v2397 = vpop.f32.mrf.mxu0
        %v2398 = vadd.f32 0.0, %v2397
        %v2399 = vpop.f32.mrf.mxu0
        %v2400 = vadd.f32 0.0, %v2399
        %2401 = vdwg.mxu0
        %v2402 = vadd.f32 %v2246, %v2313
        %v2403 = vadd.f32 %v2247, %v2315
        %v2404 = vadd.f32 %v2248, %v2318
        %v2405 = vadd.f32 %v2249, %v2320
        %v2406 = vadd.f32 %v2250, %v2323
        %v2407 = vadd.f32 %v2251, %v2325
        %v2408 = vadd.f32 %v2252, %v2328
        %v2409 = vadd.f32 %v2253, %v2330
        %v2410 = vadd.f32 %v2254, %v2333
        %v2411 = vadd.f32 %v2255, %v2335
        %v2412 = vadd.f32 %v2256, %v2338
        %v2413 = vadd.f32 %v2257, %v2340
        %v2414 = vadd.f32 %v2258, %v2343
        %v2415 = vadd.f32 %v2259, %v2345
        %v2416 = vadd.f32 %v2260, %v2348
        %v2417 = vadd.f32 %v2261, %v2350
        %v2418 = vadd.f32 %v2262, %v2353
        %v2419 = vadd.f32 %v2263, %v2355
        %v2420 = vadd.f32 %v2264, %v2358
        %v2421 = vadd.f32 %v2265, %v2360
        %v2422 = vadd.f32 %v2266, %v2363
        %v2423 = vadd.f32 %v2267, %v2365
        %v2424 = vadd.f32 %v2268, %v2368
        %v2425 = vadd.f32 %v2269, %v2370
        %v2426 = vadd.f32 %v2270, %v2373
        %v2427 = vadd.f32 %v2271, %v2375
        %v2428 = vadd.f32 %v2272, %v2378
        %v2429 = vadd.f32 %v2273, %v2380
        %v2430 = vadd.f32 %v2274, %v2383
        %v2431 = vadd.f32 %v2275, %v2385
        %v2432 = vadd.f32 %v2276, %v2388
        %v2433 = vadd.f32 %v2277, %v2390
        %v2434 = vadd.f32 %v2278, %v2393
        %v2435 = vadd.f32 %v2279, %v2395
        %v2436 = vadd.f32 %v2280, %v2398
        %v2437 = vadd.f32 %v2281, %v2400
        %2438 = vst [vmem:[#allocation2] sm:$0xff] %v2402
        %2439 = vst [vmem:[#allocation2 + $0x8] sm:$0xff] %v2403
        %2440 = vst [vmem:[#allocation2 + $0x10] sm:$0xff] %v2404
        %2441 = vst [vmem:[#allocation2 + $0x18] sm:$0xff] %v2405
        %2442 = vst [vmem:[#allocation2 + $0x20] sm:$0xff] %v2406
        %2443 = vst [vmem:[#allocation2 + $0x28] sm:$0xff] %v2407
        %2444 = vst [vmem:[#allocation2 + $0x30] sm:$0xff] %v2408
        %2445 = vst [vmem:[#allocation2 + $0x38] sm:$0xff] %v2409
        %2446 = vst [vmem:[#allocation2 + $0x40] sm:$0xff] %v2410
        %2447 = vst [vmem:[#allocation2 + $0x48] sm:$0xff] %v2411
        %2448 = vst [vmem:[#allocation2 + $0x50] sm:$0xff] %v2412
        %2449 = vst [vmem:[#allocation2 + $0x58] sm:$0xff] %v2413
        %2450 = vst [vmem:[#allocation2 + $0x60] sm:$0xff] %v2414
        %2451 = vst [vmem:[#allocation2 + $0x68] sm:$0xff] %v2415
        %2452 = vst [vmem:[#allocation2 + $0x70] sm:$0xff] %v2416
        %2453 = vst [vmem:[#allocation2 + $0x78] sm:$0xff] %v2417
        %2454 = vst [vmem:[#allocation2 + $0x80] sm:$0xff] %v2418
        %2455 = vst [vmem:[#allocation2 + $0x88] sm:$0xff] %v2419
        %2456 = vst [vmem:[#allocation2 + $0x90] sm:$0xff] %v2420
        %2457 = vst [vmem:[#allocation2 + $0x98] sm:$0xff] %v2421
        %2458 = vst [vmem:[#allocation2 + $0xa0] sm:$0xff] %v2422
        %2459 = vst [vmem:[#allocation2 + $0xa8] sm:$0xff] %v2423
        %2460 = vst [vmem:[#allocation2 + $0xb0] sm:$0xff] %v2424
        %2461 = vst [vmem:[#allocation2 + $0xb8] sm:$0xff] %v2425
        %2462 = vst [vmem:[#allocation2 + $0xc0] sm:$0xff] %v2426
        %2463 = vst [vmem:[#allocation2 + $0xc8] sm:$0xff] %v2427
        %2464 = vst [vmem:[#allocation2 + $0xd0] sm:$0xff] %v2428
        %2465 = vst [vmem:[#allocation2 + $0xd8] sm:$0xff] %v2429
        %2466 = vst [vmem:[#allocation2 + $0xe0] sm:$0xff] %v2430
        %2467 = vst [vmem:[#allocation2 + $0xe8] sm:$0xff] %v2431
        %2468 = vst [vmem:[#allocation2 + $0xf0] sm:$0xff] %v2432
        %2469 = vst [vmem:[#allocation2 + $0xf8] sm:$0xff] %v2433
        %2470 = vst [vmem:[#allocation2 + $0x100] sm:$0xff] %v2434
        %2471 = vst [vmem:[#allocation2 + $0x108] sm:$0xff] %v2435
        %2472 = vst [vmem:[#allocation2 + $0x110] sm:$0xff] %v2436
        %2473 = vst [vmem:[#allocation2 + $0x118] sm:$0xff] %v2437
        %v2474 = vld [vmem:[#allocation2] sm:$0xff]
        %v2475 = vld [vmem:[#allocation2 + $0x8] sm:$0xff]
        %v2476 = vld [vmem:[#allocation2 + $0x10] sm:$0xff]
        %v2477 = vld [vmem:[#allocation2 + $0x18] sm:$0xff]
        %v2478 = vld [vmem:[#allocation2 + $0x20] sm:$0xff]
        %v2479 = vld [vmem:[#allocation2 + $0x28] sm:$0xff]
        %v2480 = vld [vmem:[#allocation2 + $0x30] sm:$0xff]
        %v2481 = vld [vmem:[#allocation2 + $0x38] sm:$0xff]
        %v2482 = vld [vmem:[#allocation2 + $0x40] sm:$0xff]
        %v2483 = vld [vmem:[#allocation2 + $0x48] sm:$0xff]
        %v2484 = vld [vmem:[#allocation2 + $0x50] sm:$0xff]
        %v2485 = vld [vmem:[#allocation2 + $0x58] sm:$0xff]
        %v2486 = vld [vmem:[#allocation2 + $0x60] sm:$0xff]
        %v2487 = vld [vmem:[#allocation2 + $0x68] sm:$0xff]
        %v2488 = vld [vmem:[#allocation2 + $0x70] sm:$0xff]
        %v2489 = vld [vmem:[#allocation2 + $0x78] sm:$0xff]
        %v2490 = vld [vmem:[#allocation2 + $0x80] sm:$0xff]
        %v2491 = vld [vmem:[#allocation2 + $0x88] sm:$0xff]
        %v2492 = vld [vmem:[#allocation2 + $0x90] sm:$0xff]
        %v2493 = vld [vmem:[#allocation2 + $0x98] sm:$0xff]
        %v2494 = vld [vmem:[#allocation2 + $0xa0] sm:$0xff]
        %v2495 = vld [vmem:[#allocation2 + $0xa8] sm:$0xff]
        %v2496 = vld [vmem:[#allocation2 + $0xb0] sm:$0xff]
        %v2497 = vld [vmem:[#allocation2 + $0xb8] sm:$0xff]
        %v2498 = vld [vmem:[#allocation2 + $0xc0] sm:$0xff]
        %v2499 = vld [vmem:[#allocation2 + $0xc8] sm:$0xff]
        %v2500 = vld [vmem:[#allocation2 + $0xd0] sm:$0xff]
        %v2501 = vld [vmem:[#allocation2 + $0xd8] sm:$0xff]
        %v2502 = vld [vmem:[#allocation2 + $0xe0] sm:$0xff]
        %v2503 = vld [vmem:[#allocation2 + $0xe8] sm:$0xff]
        %v2504 = vld [vmem:[#allocation2 + $0xf0] sm:$0xff]
        %v2505 = vld [vmem:[#allocation2 + $0xf8] sm:$0xff]
        %v2506 = vld [vmem:[#allocation2 + $0x100] sm:$0xff]
        %v2507 = vld [vmem:[#allocation2 + $0x108] sm:$0xff]
        %v2508 = vld [vmem:[#allocation2 + $0x110] sm:$0xff]
        %v2509 = vld [vmem:[#allocation2 + $0x118] sm:$0xff]
        %s2510 = scalar_lea.vmem %s1, 28
        %v2511 = vld [vmem:[%s2510] sm:$0xf]
        %vm2512 = vsmask.f32 5376
        %v2513 = vrot.slane %v717, 2
        %v2514 = vrot.slane %v713, 3
        %v2515 = vor.u32 %v2513, %v2514
        %v2516 = vrot.slane %v724, 2
        %v2517 = vrot.slane %v720, 3
        %v2518 = vor.u32 %v2516, %v2517
        %v2519 = vsel %vm2512, %v2515, %v2518
        %v2520 = vrot.slane %v731, 2
        %v2521 = vrot.slane %v727, 3
        %v2522 = vor.u32 %v2520, %v2521
        %v2523 = vsel %vm2512, %v2518, %v2522
        %v2524 = vrot.slane %v738, 2
        %v2525 = vrot.slane %v734, 3
        %v2526 = vor.u32 %v2524, %v2525
        %v2527 = vsel %vm2512, %v2522, %v2526
        %v2528 = vrot.slane %v745, 2
        %v2529 = vrot.slane %v741, 3
        %v2530 = vor.u32 %v2528, %v2529
        %v2531 = vsel %vm2512, %v2526, %v2530
        %v2532 = vrot.slane %v752, 2
        %v2533 = vrot.slane %v748, 3
        %v2534 = vor.u32 %v2532, %v2533
        %v2535 = vsel %vm2512, %v2530, %v2534
        %v2536 = vrot.slane %v759, 2
        %v2537 = vrot.slane %v755, 3
        %v2538 = vor.u32 %v2536, %v2537
        %v2539 = vsel %vm2512, %v2534, %v2538
        %v2540 = vrot.slane %v766, 2
        %v2541 = vrot.slane %v762, 3
        %v2542 = vor.u32 %v2540, %v2541
        %v2543 = vsel %vm2512, %v2538, %v2542
        %v2544 = vrot.slane %v773, 2
        %v2545 = vrot.slane %v769, 3
        %v2546 = vor.u32 %v2544, %v2545
        %v2547 = vsel %vm2512, %v2542, %v2546
        %v2548 = vrot.slane %v780, 2
        %v2549 = vrot.slane %v776, 3
        %v2550 = vor.u32 %v2548, %v2549
        %v2551 = vsel %vm2512, %v2546, %v2550
        %v2552 = vrot.slane %v787, 2
        %v2553 = vrot.slane %v783, 3
        %v2554 = vor.u32 %v2552, %v2553
        %v2555 = vsel %vm2512, %v2550, %v2554
        %v2556 = vrot.slane %v794, 2
        %v2557 = vrot.slane %v790, 3
        %v2558 = vor.u32 %v2556, %v2557
        %v2559 = vsel %vm2512, %v2554, %v2558
        %v2560 = vrot.slane %v801, 2
        %v2561 = vrot.slane %v797, 3
        %v2562 = vor.u32 %v2560, %v2561
        %v2563 = vsel %vm2512, %v2558, %v2562
        %v2564 = vrot.slane %v808, 2
        %v2565 = vrot.slane %v804, 3
        %v2566 = vor.u32 %v2564, %v2565
        %v2567 = vsel %vm2512, %v2562, %v2566
        %v2568 = vrot.slane %v815, 2
        %v2569 = vrot.slane %v811, 3
        %v2570 = vor.u32 %v2568, %v2569
        %v2571 = vsel %vm2512, %v2566, %v2570
        %v2572 = vrot.slane %v822, 2
        %v2573 = vrot.slane %v818, 3
        %v2574 = vor.u32 %v2572, %v2573
        %v2575 = vsel %vm2512, %v2570, %v2574
        %v2576 = vrot.slane %v1697, 2
        %v2577 = vrot.slane %v1700, 3
        %v2578 = vor.u32 %v2576, %v2577
        %v2579 = vsel %vm2512, %v2574, %v2578
        %v2581 = vshrl.u32 %v2288, 16
        %v2583 = vrot.slane %v2581, 2
        %v2584 = vshll.u32 %v2288, 16
        %v2586 = vrot.slane %v2584, 3
        %v2587 = vor.u32 %v2583, %v2586
        %v2588 = vsel %vm2512, %v2578, %v2587
        %v2590 = vshrl.u32 %v2289, 16
        %v2592 = vrot.slane %v2590, 2
        %v2593 = vshll.u32 %v2289, 16
        %v2595 = vrot.slane %v2593, 3
        %v2596 = vor.u32 %v2592, %v2595
        %v2597 = vsel %vm2512, %v2587, %v2596
        %v2599 = vsel %vm428, %v2519, 0
        %v2602 = vsel %vm428, %v2523, 0
        %v2605 = vsel %vm428, %v2527, 0
        %v2608 = vsel %vm428, %v2531, 0
        %v2611 = vsel %vm428, %v2535, 0
        %v2614 = vsel %vm428, %v2539, 0
        %v2617 = vsel %vm428, %v2543, 0
        %v2620 = vsel %vm428, %v2547, 0
        %v2623 = vsel %vm428, %v2551, 0
        %v2626 = vsel %vm428, %v2555, 0
        %v2629 = vsel %vm428, %v2559, 0
        %v2632 = vsel %vm428, %v2563, 0
        %v2635 = vsel %vm428, %v2567, 0
        %v2638 = vsel %vm428, %v2571, 0
        %v2641 = vsel %vm428, %v2575, 0
        %v2644 = vsel %vm428, %v2579, 0
        %v2647 = vsel %vm428, %v2588, 0
        %v2650 = vsel %vm428, %v2597, 0
        %v2653 = vsel %vm483, %v2511, 0
        %2655 = vmatpush.bf16.msra.mxu0 0
        %2656 = vmatpush.bf16.msra.mxu0 0
        %2657 = vmatpush.bf16.msra.mxu0 0
        %2658 = vmatpush.bf16.msra.mxu0 0
        %2659 = vmatpush.bf16.msra.mxu0 0
        %2660 = vmatpush.bf16.msra.mxu0 0
        %2661 = vmatpush.bf16.msra.mxu0 0
        %2662 = vmatpush.bf16.msra.mxu0 %v2653
        %2663 = vmatmul.bf16.gmra.mxu0 %v2599
        %v2664 = vpop.f32.mrf.mxu0
        %v2665 = vadd.f32 0.0, %v2664
        %v2666 = vpop.f32.mrf.mxu0
        %v2667 = vadd.f32 0.0, %v2666
        %2668 = vmatmul.bf16.gmra.mxu0 %v2602
        %v2669 = vpop.f32.mrf.mxu0
        %v2670 = vadd.f32 0.0, %v2669
        %v2671 = vpop.f32.mrf.mxu0
        %v2672 = vadd.f32 0.0, %v2671
        %2673 = vmatmul.bf16.gmra.mxu0 %v2605
        %v2674 = vpop.f32.mrf.mxu0
        %v2675 = vadd.f32 0.0, %v2674
        %v2676 = vpop.f32.mrf.mxu0
        %v2677 = vadd.f32 0.0, %v2676
        %2678 = vmatmul.bf16.gmra.mxu0 %v2608
        %v2679 = vpop.f32.mrf.mxu0
        %v2680 = vadd.f32 0.0, %v2679
        %v2681 = vpop.f32.mrf.mxu0
        %v2682 = vadd.f32 0.0, %v2681
        %2683 = vmatmul.bf16.gmra.mxu0 %v2611
        %v2684 = vpop.f32.mrf.mxu0
        %v2685 = vadd.f32 0.0, %v2684
        %v2686 = vpop.f32.mrf.mxu0
        %v2687 = vadd.f32 0.0, %v2686
        %2688 = vmatmul.bf16.gmra.mxu0 %v2614
        %v2689 = vpop.f32.mrf.mxu0
        %v2690 = vadd.f32 0.0, %v2689
        %v2691 = vpop.f32.mrf.mxu0
        %v2692 = vadd.f32 0.0, %v2691
        %2693 = vmatmul.bf16.gmra.mxu0 %v2617
        %v2694 = vpop.f32.mrf.mxu0
        %v2695 = vadd.f32 0.0, %v2694
        %v2696 = vpop.f32.mrf.mxu0
        %v2697 = vadd.f32 0.0, %v2696
        %2698 = vmatmul.bf16.gmra.mxu0 %v2620
        %v2699 = vpop.f32.mrf.mxu0
        %v2700 = vadd.f32 0.0, %v2699
        %v2701 = vpop.f32.mrf.mxu0
        %v2702 = vadd.f32 0.0, %v2701
        %2703 = vmatmul.bf16.gmra.mxu0 %v2623
        %v2704 = vpop.f32.mrf.mxu0
        %v2705 = vadd.f32 0.0, %v2704
        %v2706 = vpop.f32.mrf.mxu0
        %v2707 = vadd.f32 0.0, %v2706
        %2708 = vmatmul.bf16.gmra.mxu0 %v2626
        %v2709 = vpop.f32.mrf.mxu0
        %v2710 = vadd.f32 0.0, %v2709
        %v2711 = vpop.f32.mrf.mxu0
        %v2712 = vadd.f32 0.0, %v2711
        %2713 = vmatmul.bf16.gmra.mxu0 %v2629
        %v2714 = vpop.f32.mrf.mxu0
        %v2715 = vadd.f32 0.0, %v2714
        %v2716 = vpop.f32.mrf.mxu0
        %v2717 = vadd.f32 0.0, %v2716
        %2718 = vmatmul.bf16.gmra.mxu0 %v2632
        %v2719 = vpop.f32.mrf.mxu0
        %v2720 = vadd.f32 0.0, %v2719
        %v2721 = vpop.f32.mrf.mxu0
        %v2722 = vadd.f32 0.0, %v2721
        %2723 = vmatmul.bf16.gmra.mxu0 %v2635
        %v2724 = vpop.f32.mrf.mxu0
        %v2725 = vadd.f32 0.0, %v2724
        %v2726 = vpop.f32.mrf.mxu0
        %v2727 = vadd.f32 0.0, %v2726
        %2728 = vmatmul.bf16.gmra.mxu0 %v2638
        %v2729 = vpop.f32.mrf.mxu0
        %v2730 = vadd.f32 0.0, %v2729
        %v2731 = vpop.f32.mrf.mxu0
        %v2732 = vadd.f32 0.0, %v2731
        %2733 = vmatmul.bf16.gmra.mxu0 %v2641
        %v2734 = vpop.f32.mrf.mxu0
        %v2735 = vadd.f32 0.0, %v2734
        %v2736 = vpop.f32.mrf.mxu0
        %v2737 = vadd.f32 0.0, %v2736
        %2738 = vmatmul.bf16.gmra.mxu0 %v2644
        %v2739 = vpop.f32.mrf.mxu0
        %v2740 = vadd.f32 0.0, %v2739
        %v2741 = vpop.f32.mrf.mxu0
        %v2742 = vadd.f32 0.0, %v2741
        %2743 = vmatmul.bf16.gmra.mxu0 %v2647
        %v2744 = vpop.f32.mrf.mxu0
        %v2745 = vadd.f32 0.0, %v2744
        %v2746 = vpop.f32.mrf.mxu0
        %v2747 = vadd.f32 0.0, %v2746
        %2748 = vmatmul.bf16.gmra.mxu0 %v2650
        %v2749 = vpop.f32.mrf.mxu0
        %v2750 = vadd.f32 0.0, %v2749
        %v2751 = vpop.f32.mrf.mxu0
        %v2752 = vadd.f32 0.0, %v2751
        %2753 = vdwg.mxu0
        %v2754 = vadd.f32 %v2474, %v2665
        %v2755 = vadd.f32 %v2475, %v2667
        %v2756 = vadd.f32 %v2476, %v2670
        %v2757 = vadd.f32 %v2477, %v2672
        %v2758 = vadd.f32 %v2478, %v2675
        %v2759 = vadd.f32 %v2479, %v2677
        %v2760 = vadd.f32 %v2480, %v2680
        %v2761 = vadd.f32 %v2481, %v2682
        %v2762 = vadd.f32 %v2482, %v2685
        %v2763 = vadd.f32 %v2483, %v2687
        %v2764 = vadd.f32 %v2484, %v2690
        %v2765 = vadd.f32 %v2485, %v2692
        %v2766 = vadd.f32 %v2486, %v2695
        %v2767 = vadd.f32 %v2487, %v2697
        %v2768 = vadd.f32 %v2488, %v2700
        %v2769 = vadd.f32 %v2489, %v2702
        %v2770 = vadd.f32 %v2490, %v2705
        %v2771 = vadd.f32 %v2491, %v2707
        %v2772 = vadd.f32 %v2492, %v2710
        %v2773 = vadd.f32 %v2493, %v2712
        %v2774 = vadd.f32 %v2494, %v2715
        %v2775 = vadd.f32 %v2495, %v2717
        %v2776 = vadd.f32 %v2496, %v2720
        %v2777 = vadd.f32 %v2497, %v2722
        %v2778 = vadd.f32 %v2498, %v2725
        %v2779 = vadd.f32 %v2499, %v2727
        %v2780 = vadd.f32 %v2500, %v2730
        %v2781 = vadd.f32 %v2501, %v2732
        %v2782 = vadd.f32 %v2502, %v2735
        %v2783 = vadd.f32 %v2503, %v2737
        %v2784 = vadd.f32 %v2504, %v2740
        %v2785 = vadd.f32 %v2505, %v2742
        %v2786 = vadd.f32 %v2506, %v2745
        %v2787 = vadd.f32 %v2507, %v2747
        %v2788 = vadd.f32 %v2508, %v2750
        %v2789 = vadd.f32 %v2509, %v2752
        %2790 = vst [vmem:[#allocation2] sm:$0xff] %v2754
        %2791 = vst [vmem:[#allocation2 + $0x8] sm:$0xff] %v2755
        %2792 = vst [vmem:[#allocation2 + $0x10] sm:$0xff] %v2756
        %2793 = vst [vmem:[#allocation2 + $0x18] sm:$0xff] %v2757
        %2794 = vst [vmem:[#allocation2 + $0x20] sm:$0xff] %v2758
        %2795 = vst [vmem:[#allocation2 + $0x28] sm:$0xff] %v2759
        %2796 = vst [vmem:[#allocation2 + $0x30] sm:$0xff] %v2760
        %2797 = vst [vmem:[#allocation2 + $0x38] sm:$0xff] %v2761
        %2798 = vst [vmem:[#allocation2 + $0x40] sm:$0xff] %v2762
        %2799 = vst [vmem:[#allocation2 + $0x48] sm:$0xff] %v2763
        %2800 = vst [vmem:[#allocation2 + $0x50] sm:$0xff] %v2764
        %2801 = vst [vmem:[#allocation2 + $0x58] sm:$0xff] %v2765
        %2802 = vst [vmem:[#allocation2 + $0x60] sm:$0xff] %v2766
        %2803 = vst [vmem:[#allocation2 + $0x68] sm:$0xff] %v2767
        %2804 = vst [vmem:[#allocation2 + $0x70] sm:$0xff] %v2768
        %2805 = vst [vmem:[#allocation2 + $0x78] sm:$0xff] %v2769
        %2806 = vst [vmem:[#allocation2 + $0x80] sm:$0xff] %v2770
        %2807 = vst [vmem:[#allocation2 + $0x88] sm:$0xff] %v2771
        %2808 = vst [vmem:[#allocation2 + $0x90] sm:$0xff] %v2772
        %2809 = vst [vmem:[#allocation2 + $0x98] sm:$0xff] %v2773
        %2810 = vst [vmem:[#allocation2 + $0xa0] sm:$0xff] %v2774
        %2811 = vst [vmem:[#allocation2 + $0xa8] sm:$0xff] %v2775
        %2812 = vst [vmem:[#allocation2 + $0xb0] sm:$0xff] %v2776
        %2813 = vst [vmem:[#allocation2 + $0xb8] sm:$0xff] %v2777
        %2814 = vst [vmem:[#allocation2 + $0xc0] sm:$0xff] %v2778
        %2815 = vst [vmem:[#allocation2 + $0xc8] sm:$0xff] %v2779
        %2816 = vst [vmem:[#allocation2 + $0xd0] sm:$0xff] %v2780
        %2817 = vst [vmem:[#allocation2 + $0xd8] sm:$0xff] %v2781
        %2818 = vst [vmem:[#allocation2 + $0xe0] sm:$0xff] %v2782
        %2819 = vst [vmem:[#allocation2 + $0xe8] sm:$0xff] %v2783
        %2820 = vst [vmem:[#allocation2 + $0xf0] sm:$0xff] %v2784
        %2821 = vst [vmem:[#allocation2 + $0xf8] sm:$0xff] %v2785
        %2822 = vst [vmem:[#allocation2 + $0x100] sm:$0xff] %v2786
        %2823 = vst [vmem:[#allocation2 + $0x108] sm:$0xff] %v2787
        %2824 = vst [vmem:[#allocation2 + $0x110] sm:$0xff] %v2788
        %2825 = vst [vmem:[#allocation2 + $0x118] sm:$0xff] %v2789
        %v2826 = vld [vmem:[#allocation2] sm:$0xff]
        %v2827 = vld [vmem:[#allocation2 + $0x8] sm:$0xff]
        %v2828 = vld [vmem:[#allocation2 + $0x10] sm:$0xff]
        %v2829 = vld [vmem:[#allocation2 + $0x18] sm:$0xff]
        %v2830 = vld [vmem:[#allocation2 + $0x20] sm:$0xff]
        %v2831 = vld [vmem:[#allocation2 + $0x28] sm:$0xff]
        %v2832 = vld [vmem:[#allocation2 + $0x30] sm:$0xff]
        %v2833 = vld [vmem:[#allocation2 + $0x38] sm:$0xff]
        %v2834 = vld [vmem:[#allocation2 + $0x40] sm:$0xff]
        %v2835 = vld [vmem:[#allocation2 + $0x48] sm:$0xff]
        %v2836 = vld [vmem:[#allocation2 + $0x50] sm:$0xff]
        %v2837 = vld [vmem:[#allocation2 + $0x58] sm:$0xff]
        %v2838 = vld [vmem:[#allocation2 + $0x60] sm:$0xff]
        %v2839 = vld [vmem:[#allocation2 + $0x68] sm:$0xff]
        %v2840 = vld [vmem:[#allocation2 + $0x70] sm:$0xff]
        %v2841 = vld [vmem:[#allocation2 + $0x78] sm:$0xff]
        %v2842 = vld [vmem:[#allocation2 + $0x80] sm:$0xff]
        %v2843 = vld [vmem:[#allocation2 + $0x88] sm:$0xff]
        %v2844 = vld [vmem:[#allocation2 + $0x90] sm:$0xff]
        %v2845 = vld [vmem:[#allocation2 + $0x98] sm:$0xff]
        %v2846 = vld [vmem:[#allocation2 + $0xa0] sm:$0xff]
        %v2847 = vld [vmem:[#allocation2 + $0xa8] sm:$0xff]
        %v2848 = vld [vmem:[#allocation2 + $0xb0] sm:$0xff]
        %v2849 = vld [vmem:[#allocation2 + $0xb8] sm:$0xff]
        %v2850 = vld [vmem:[#allocation2 + $0xc0] sm:$0xff]
        %v2851 = vld [vmem:[#allocation2 + $0xc8] sm:$0xff]
        %v2852 = vld [vmem:[#allocation2 + $0xd0] sm:$0xff]
        %v2853 = vld [vmem:[#allocation2 + $0xd8] sm:$0xff]
        %v2854 = vld [vmem:[#allocation2 + $0xe0] sm:$0xff]
        %v2855 = vld [vmem:[#allocation2 + $0xe8] sm:$0xff]
        %v2856 = vld [vmem:[#allocation2 + $0xf0] sm:$0xff]
        %v2857 = vld [vmem:[#allocation2 + $0xf8] sm:$0xff]
        %v2858 = vld [vmem:[#allocation2 + $0x100] sm:$0xff]
        %v2859 = vld [vmem:[#allocation2 + $0x108] sm:$0xff]
        %v2860 = vld [vmem:[#allocation2 + $0x110] sm:$0xff]
        %v2861 = vld [vmem:[#allocation2 + $0x118] sm:$0xff]
        %s2862 = scalar_lea.vmem %s1, 32
        %v2863 = vld [vmem:[%s2862] sm:$0xf]
        %vm2864 = vcmask 1044480
        %v2865 = vrot.slane %v412, 3
        %v2866 = vrot.slane %v413, 3
        %v2867 = vsel %vm2864, %v2865, %v2866
        %v2868 = vrot.slane %v414, 3
        %v2869 = vsel %vm2864, %v2866, %v2868
        %v2870 = vrot.slane %v415, 3
        %v2871 = vsel %vm2864, %v2868, %v2870
        %v2872 = vrot.slane %v416, 3
        %v2873 = vsel %vm2864, %v2870, %v2872
        %v2874 = vrot.slane %v417, 3
        %v2875 = vsel %vm2864, %v2872, %v2874
        %v2876 = vrot.slane %v418, 3
        %v2877 = vsel %vm2864, %v2874, %v2876
        %v2878 = vrot.slane %v419, 3
        %v2879 = vsel %vm2864, %v2876, %v2878
        %v2880 = vrot.slane %v420, 3
        %v2881 = vsel %vm2864, %v2878, %v2880
        %v2882 = vrot.slane %v421, 3
        %v2883 = vsel %vm2864, %v2880, %v2882
        %v2884 = vrot.slane %v422, 3
        %v2885 = vsel %vm2864, %v2882, %v2884
        %v2886 = vrot.slane %v423, 3
        %v2887 = vsel %vm2864, %v2884, %v2886
        %v2888 = vrot.slane %v424, 3
        %v2889 = vsel %vm2864, %v2886, %v2888
        %v2890 = vrot.slane %v425, 3
        %v2891 = vsel %vm2864, %v2888, %v2890
        %v2892 = vrot.slane %v426, 3
        %v2893 = vsel %vm2864, %v2890, %v2892
        %v2894 = vrot.slane %v427, 3
        %v2895 = vsel %vm2864, %v2892, %v2894
        %v2896 = vrot.slane %v1404, 3
        %v2897 = vsel %vm2864, %v2894, %v2896
        %v2898 = vrot.slane %v2288, 3
        %v2899 = vsel %vm2864, %v2896, %v2898
        %v2900 = vrot.slane %v2289, 3
        %v2901 = vsel %vm2864, %v2898, %v2900
        %v2903 = vsel %vm428, %v2867, 0
        %v2906 = vsel %vm428, %v2869, 0
        %v2909 = vsel %vm428, %v2871, 0
        %v2912 = vsel %vm428, %v2873, 0
        %v2915 = vsel %vm428, %v2875, 0
        %v2918 = vsel %vm428, %v2877, 0
        %v2921 = vsel %vm428, %v2879, 0
        %v2924 = vsel %vm428, %v2881, 0
        %v2927 = vsel %vm428, %v2883, 0
        %v2930 = vsel %vm428, %v2885, 0
        %v2933 = vsel %vm428, %v2887, 0
        %v2936 = vsel %vm428, %v2889, 0
        %v2939 = vsel %vm428, %v2891, 0
        %v2942 = vsel %vm428, %v2893, 0
        %v2945 = vsel %vm428, %v2895, 0
        %v2948 = vsel %vm428, %v2897, 0
        %v2951 = vsel %vm428, %v2899, 0
        %v2954 = vsel %vm428, %v2901, 0
        %v2957 = vsel %vm483, %v2863, 0
        %2959 = vmatpush.bf16.msra.mxu0 0
        %2960 = vmatpush.bf16.msra.mxu0 0
        %2961 = vmatpush.bf16.msra.mxu0 0
        %2962 = vmatpush.bf16.msra.mxu0 0
        %2963 = vmatpush.bf16.msra.mxu0 0
        %2964 = vmatpush.bf16.msra.mxu0 0
        %2965 = vmatpush.bf16.msra.mxu0 0
        %2966 = vmatpush.bf16.msra.mxu0 %v2957
        %2967 = vmatmul.bf16.gmra.mxu0 %v2903
        %v2968 = vpop.f32.mrf.mxu0
        %v2969 = vadd.f32 0.0, %v2968
        %v2970 = vpop.f32.mrf.mxu0
        %v2971 = vadd.f32 0.0, %v2970
        %2972 = vmatmul.bf16.gmra.mxu0 %v2906
        %v2973 = vpop.f32.mrf.mxu0
        %v2974 = vadd.f32 0.0, %v2973
        %v2975 = vpop.f32.mrf.mxu0
        %v2976 = vadd.f32 0.0, %v2975
        %2977 = vmatmul.bf16.gmra.mxu0 %v2909
        %v2978 = vpop.f32.mrf.mxu0
        %v2979 = vadd.f32 0.0, %v2978
        %v2980 = vpop.f32.mrf.mxu0
        %v2981 = vadd.f32 0.0, %v2980
        %2982 = vmatmul.bf16.gmra.mxu0 %v2912
        %v2983 = vpop.f32.mrf.mxu0
        %v2984 = vadd.f32 0.0, %v2983
        %v2985 = vpop.f32.mrf.mxu0
        %v2986 = vadd.f32 0.0, %v2985
        %2987 = vmatmul.bf16.gmra.mxu0 %v2915
        %v2988 = vpop.f32.mrf.mxu0
        %v2989 = vadd.f32 0.0, %v2988
        %v2990 = vpop.f32.mrf.mxu0
        %v2991 = vadd.f32 0.0, %v2990
        %2992 = vmatmul.bf16.gmra.mxu0 %v2918
        %v2993 = vpop.f32.mrf.mxu0
        %v2994 = vadd.f32 0.0, %v2993
        %v2995 = vpop.f32.mrf.mxu0
        %v2996 = vadd.f32 0.0, %v2995
        %2997 = vmatmul.bf16.gmra.mxu0 %v2921
        %v2998 = vpop.f32.mrf.mxu0
        %v2999 = vadd.f32 0.0, %v2998
        %v3000 = vpop.f32.mrf.mxu0
        %v3001 = vadd.f32 0.0, %v3000
        %3002 = vmatmul.bf16.gmra.mxu0 %v2924
        %v3003 = vpop.f32.mrf.mxu0
        %v3004 = vadd.f32 0.0, %v3003
        %v3005 = vpop.f32.mrf.mxu0
        %v3006 = vadd.f32 0.0, %v3005
        %3007 = vmatmul.bf16.gmra.mxu0 %v2927
        %v3008 = vpop.f32.mrf.mxu0
        %v3009 = vadd.f32 0.0, %v3008
        %v3010 = vpop.f32.mrf.mxu0
        %v3011 = vadd.f32 0.0, %v3010
        %3012 = vmatmul.bf16.gmra.mxu0 %v2930
        %v3013 = vpop.f32.mrf.mxu0
        %v3014 = vadd.f32 0.0, %v3013
        %v3015 = vpop.f32.mrf.mxu0
        %v3016 = vadd.f32 0.0, %v3015
        %3017 = vmatmul.bf16.gmra.mxu0 %v2933
        %v3018 = vpop.f32.mrf.mxu0
        %v3019 = vadd.f32 0.0, %v3018
        %v3020 = vpop.f32.mrf.mxu0
        %v3021 = vadd.f32 0.0, %v3020
        %3022 = vmatmul.bf16.gmra.mxu0 %v2936
        %v3023 = vpop.f32.mrf.mxu0
        %v3024 = vadd.f32 0.0, %v3023
        %v3025 = vpop.f32.mrf.mxu0
        %v3026 = vadd.f32 0.0, %v3025
        %3027 = vmatmul.bf16.gmra.mxu0 %v2939
        %v3028 = vpop.f32.mrf.mxu0
        %v3029 = vadd.f32 0.0, %v3028
        %v3030 = vpop.f32.mrf.mxu0
        %v3031 = vadd.f32 0.0, %v3030
        %3032 = vmatmul.bf16.gmra.mxu0 %v2942
        %v3033 = vpop.f32.mrf.mxu0
        %v3034 = vadd.f32 0.0, %v3033
        %v3035 = vpop.f32.mrf.mxu0
        %v3036 = vadd.f32 0.0, %v3035
        %3037 = vmatmul.bf16.gmra.mxu0 %v2945
        %v3038 = vpop.f32.mrf.mxu0
        %v3039 = vadd.f32 0.0, %v3038
        %v3040 = vpop.f32.mrf.mxu0
        %v3041 = vadd.f32 0.0, %v3040
        %3042 = vmatmul.bf16.gmra.mxu0 %v2948
        %v3043 = vpop.f32.mrf.mxu0
        %v3044 = vadd.f32 0.0, %v3043
        %v3045 = vpop.f32.mrf.mxu0
        %v3046 = vadd.f32 0.0, %v3045
        %3047 = vmatmul.bf16.gmra.mxu0 %v2951
        %v3048 = vpop.f32.mrf.mxu0
        %v3049 = vadd.f32 0.0, %v3048
        %v3050 = vpop.f32.mrf.mxu0
        %v3051 = vadd.f32 0.0, %v3050
        %3052 = vmatmul.bf16.gmra.mxu0 %v2954
        %v3053 = vpop.f32.mrf.mxu0
        %v3054 = vadd.f32 0.0, %v3053
        %v3055 = vpop.f32.mrf.mxu0
        %v3056 = vadd.f32 0.0, %v3055
        %3057 = vdwg.mxu0
        %v3058 = vadd.f32 %v2826, %v2969
        %v3059 = vadd.f32 %v2827, %v2971
        %v3060 = vadd.f32 %v2828, %v2974
        %v3061 = vadd.f32 %v2829, %v2976
        %v3062 = vadd.f32 %v2830, %v2979
        %v3063 = vadd.f32 %v2831, %v2981
        %v3064 = vadd.f32 %v2832, %v2984
        %v3065 = vadd.f32 %v2833, %v2986
        %v3066 = vadd.f32 %v2834, %v2989
        %v3067 = vadd.f32 %v2835, %v2991
        %v3068 = vadd.f32 %v2836, %v2994
        %v3069 = vadd.f32 %v2837, %v2996
        %v3070 = vadd.f32 %v2838, %v2999
        %v3071 = vadd.f32 %v2839, %v3001
        %v3072 = vadd.f32 %v2840, %v3004
        %v3073 = vadd.f32 %v2841, %v3006
        %v3074 = vadd.f32 %v2842, %v3009
        %v3075 = vadd.f32 %v2843, %v3011
        %v3076 = vadd.f32 %v2844, %v3014
        %v3077 = vadd.f32 %v2845, %v3016
        %v3078 = vadd.f32 %v2846, %v3019
        %v3079 = vadd.f32 %v2847, %v3021
        %v3080 = vadd.f32 %v2848, %v3024
        %v3081 = vadd.f32 %v2849, %v3026
        %v3082 = vadd.f32 %v2850, %v3029
        %v3083 = vadd.f32 %v2851, %v3031
        %v3084 = vadd.f32 %v2852, %v3034
        %v3085 = vadd.f32 %v2853, %v3036
        %v3086 = vadd.f32 %v2854, %v3039
        %v3087 = vadd.f32 %v2855, %v3041
        %v3088 = vadd.f32 %v2856, %v3044
        %v3089 = vadd.f32 %v2857, %v3046
        %v3090 = vadd.f32 %v2858, %v3049
        %v3091 = vadd.f32 %v2859, %v3051
        %v3092 = vadd.f32 %v2860, %v3054
        %v3093 = vadd.f32 %v2861, %v3056
        %3094 = vst [vmem:[#allocation2] sm:$0xff] %v3058
        %3095 = vst [vmem:[#allocation2 + $0x8] sm:$0xff] %v3059
        %3096 = vst [vmem:[#allocation2 + $0x10] sm:$0xff] %v3060
        %3097 = vst [vmem:[#allocation2 + $0x18] sm:$0xff] %v3061
        %3098 = vst [vmem:[#allocation2 + $0x20] sm:$0xff] %v3062
        %3099 = vst [vmem:[#allocation2 + $0x28] sm:$0xff] %v3063
        %3100 = vst [vmem:[#allocation2 + $0x30] sm:$0xff] %v3064
        %3101 = vst [vmem:[#allocation2 + $0x38] sm:$0xff] %v3065
        %3102 = vst [vmem:[#allocation2 + $0x40] sm:$0xff] %v3066
        %3103 = vst [vmem:[#allocation2 + $0x48] sm:$0xff] %v3067
        %3104 = vst [vmem:[#allocation2 + $0x50] sm:$0xff] %v3068
        %3105 = vst [vmem:[#allocation2 + $0x58] sm:$0xff] %v3069
        %3106 = vst [vmem:[#allocation2 + $0x60] sm:$0xff] %v3070
        %3107 = vst [vmem:[#allocation2 + $0x68] sm:$0xff] %v3071
        %3108 = vst [vmem:[#allocation2 + $0x70] sm:$0xff] %v3072
        %3109 = vst [vmem:[#allocation2 + $0x78] sm:$0xff] %v3073
        %3110 = vst [vmem:[#allocation2 + $0x80] sm:$0xff] %v3074
        %3111 = vst [vmem:[#allocation2 + $0x88] sm:$0xff] %v3075
        %3112 = vst [vmem:[#allocation2 + $0x90] sm:$0xff] %v3076
        %3113 = vst [vmem:[#allocation2 + $0x98] sm:$0xff] %v3077
        %3114 = vst [vmem:[#allocation2 + $0xa0] sm:$0xff] %v3078
        %3115 = vst [vmem:[#allocation2 + $0xa8] sm:$0xff] %v3079
        %3116 = vst [vmem:[#allocation2 + $0xb0] sm:$0xff] %v3080
        %3117 = vst [vmem:[#allocation2 + $0xb8] sm:$0xff] %v3081
        %3118 = vst [vmem:[#allocation2 + $0xc0] sm:$0xff] %v3082
        %3119 = vst [vmem:[#allocation2 + $0xc8] sm:$0xff] %v3083
        %3120 = vst [vmem:[#allocation2 + $0xd0] sm:$0xff] %v3084
        %3121 = vst [vmem:[#allocation2 + $0xd8] sm:$0xff] %v3085
        %3122 = vst [vmem:[#allocation2 + $0xe0] sm:$0xff] %v3086
        %3123 = vst [vmem:[#allocation2 + $0xe8] sm:$0xff] %v3087
        %3124 = vst [vmem:[#allocation2 + $0xf0] sm:$0xff] %v3088
        %3125 = vst [vmem:[#allocation2 + $0xf8] sm:$0xff] %v3089
        %3126 = vst [vmem:[#allocation2 + $0x100] sm:$0xff] %v3090
        %3127 = vst [vmem:[#allocation2 + $0x108] sm:$0xff] %v3091
        %3128 = vst [vmem:[#allocation2 + $0x110] sm:$0xff] %v3092
        %3129 = vst [vmem:[#allocation2 + $0x118] sm:$0xff] %v3093
        %v3130 = vld [vmem:[#allocation2] sm:$0xff]
        %v3131 = vld [vmem:[#allocation2 + $0x8] sm:$0xff]
        %v3132 = vld [vmem:[#allocation2 + $0x10] sm:$0xff]
        %v3133 = vld [vmem:[#allocation2 + $0x18] sm:$0xff]
        %v3134 = vld [vmem:[#allocation2 + $0x20] sm:$0xff]
        %v3135 = vld [vmem:[#allocation2 + $0x28] sm:$0xff]
        %v3136 = vld [vmem:[#allocation2 + $0x30] sm:$0xff]
        %v3137 = vld [vmem:[#allocation2 + $0x38] sm:$0xff]
        %v3138 = vld [vmem:[#allocation2 + $0x40] sm:$0xff]
        %v3139 = vld [vmem:[#allocation2 + $0x48] sm:$0xff]
        %v3140 = vld [vmem:[#allocation2 + $0x50] sm:$0xff]
        %v3141 = vld [vmem:[#allocation2 + $0x58] sm:$0xff]
        %v3142 = vld [vmem:[#allocation2 + $0x60] sm:$0xff]
        %v3143 = vld [vmem:[#allocation2 + $0x68] sm:$0xff]
        %v3144 = vld [vmem:[#allocation2 + $0x70] sm:$0xff]
        %v3145 = vld [vmem:[#allocation2 + $0x78] sm:$0xff]
        %v3146 = vld [vmem:[#allocation2 + $0x80] sm:$0xff]
        %v3147 = vld [vmem:[#allocation2 + $0x88] sm:$0xff]
        %v3148 = vld [vmem:[#allocation2 + $0x90] sm:$0xff]
        %v3149 = vld [vmem:[#allocation2 + $0x98] sm:$0xff]
        %v3150 = vld [vmem:[#allocation2 + $0xa0] sm:$0xff]
        %v3151 = vld [vmem:[#allocation2 + $0xa8] sm:$0xff]
        %v3152 = vld [vmem:[#allocation2 + $0xb0] sm:$0xff]
        %v3153 = vld [vmem:[#allocation2 + $0xb8] sm:$0xff]
        %v3154 = vld [vmem:[#allocation2 + $0xc0] sm:$0xff]
        %v3155 = vld [vmem:[#allocation2 + $0xc8] sm:$0xff]
        %v3156 = vld [vmem:[#allocation2 + $0xd0] sm:$0xff]
        %v3157 = vld [vmem:[#allocation2 + $0xd8] sm:$0xff]
        %v3158 = vld [vmem:[#allocation2 + $0xe0] sm:$0xff]
        %v3159 = vld [vmem:[#allocation2 + $0xe8] sm:$0xff]
        %v3160 = vld [vmem:[#allocation2 + $0xf0] sm:$0xff]
        %v3161 = vld [vmem:[#allocation2 + $0xf8] sm:$0xff]
        %v3162 = vld [vmem:[#allocation2 + $0x100] sm:$0xff]
        %v3163 = vld [vmem:[#allocation2 + $0x108] sm:$0xff]
        %v3164 = vld [vmem:[#allocation2 + $0x110] sm:$0xff]
        %v3165 = vld [vmem:[#allocation2 + $0x118] sm:$0xff]
        %v3166 = vld [vmem:[%s2] sm:$0x1]
        %v3168 = vperm.slane %v3166, 0
        %v3170 = vadd.f32 %v3130, %v3168
        %v3171 = vadd.f32 %v3131, %v3168
        %v3172 = vadd.f32 %v3132, %v3168
        %v3173 = vadd.f32 %v3133, %v3168
        %v3174 = vadd.f32 %v3134, %v3168
        %v3175 = vadd.f32 %v3135, %v3168
        %v3176 = vadd.f32 %v3136, %v3168
        %v3177 = vadd.f32 %v3137, %v3168
        %v3178 = vadd.f32 %v3138, %v3168
        %v3179 = vadd.f32 %v3139, %v3168
        %v3180 = vadd.f32 %v3140, %v3168
        %v3181 = vadd.f32 %v3141, %v3168
        %v3182 = vadd.f32 %v3142, %v3168
        %v3183 = vadd.f32 %v3143, %v3168
        %v3184 = vadd.f32 %v3144, %v3168
        %v3185 = vadd.f32 %v3145, %v3168
        %v3186 = vadd.f32 %v3146, %v3168
        %v3187 = vadd.f32 %v3147, %v3168
        %v3188 = vadd.f32 %v3148, %v3168
        %v3189 = vadd.f32 %v3149, %v3168
        %v3190 = vadd.f32 %v3150, %v3168
        %v3191 = vadd.f32 %v3151, %v3168
        %v3192 = vadd.f32 %v3152, %v3168
        %v3193 = vadd.f32 %v3153, %v3168
        %v3194 = vadd.f32 %v3154, %v3168
        %v3195 = vadd.f32 %v3155, %v3168
        %v3196 = vadd.f32 %v3156, %v3168
        %v3197 = vadd.f32 %v3157, %v3168
        %v3198 = vadd.f32 %v3158, %v3168
        %v3199 = vadd.f32 %v3159, %v3168
        %v3200 = vadd.f32 %v3160, %v3168
        %v3201 = vadd.f32 %v3161, %v3168
        %v3202 = vadd.f32 %v3162, %v3168
        %v3203 = vadd.f32 %v3163, %v3168
        %v3204 = vadd.f32 %v3164, %v3168
        %v3205 = vadd.f32 %v3165, %v3168
        %vm3206 = vcmp.gt.f32.partialorder %v3170, 0.0
        %vm3207 = vcmp.gt.f32.partialorder %v3171, 0.0
        %vm3208 = vcmp.gt.f32.partialorder %v3172, 0.0
        %vm3209 = vcmp.gt.f32.partialorder %v3173, 0.0
        %vm3210 = vcmp.gt.f32.partialorder %v3174, 0.0
        %vm3211 = vcmp.gt.f32.partialorder %v3175, 0.0
        %vm3212 = vcmp.gt.f32.partialorder %v3176, 0.0
        %vm3213 = vcmp.gt.f32.partialorder %v3177, 0.0
        %vm3214 = vcmp.gt.f32.partialorder %v3178, 0.0
        %vm3215 = vcmp.gt.f32.partialorder %v3179, 0.0
        %vm3216 = vcmp.gt.f32.partialorder %v3180, 0.0
        %vm3217 = vcmp.gt.f32.partialorder %v3181, 0.0
        %vm3218 = vcmp.gt.f32.partialorder %v3182, 0.0
        %vm3219 = vcmp.gt.f32.partialorder %v3183, 0.0
        %vm3220 = vcmp.gt.f32.partialorder %v3184, 0.0
        %vm3221 = vcmp.gt.f32.partialorder %v3185, 0.0
        %vm3222 = vcmp.gt.f32.partialorder %v3186, 0.0
        %vm3223 = vcmp.gt.f32.partialorder %v3187, 0.0
        %vm3224 = vcmp.gt.f32.partialorder %v3188, 0.0
        %vm3225 = vcmp.gt.f32.partialorder %v3189, 0.0
        %vm3226 = vcmp.gt.f32.partialorder %v3190, 0.0
        %vm3227 = vcmp.gt.f32.partialorder %v3191, 0.0
        %vm3228 = vcmp.gt.f32.partialorder %v3192, 0.0
        %vm3229 = vcmp.gt.f32.partialorder %v3193, 0.0
        %vm3230 = vcmp.gt.f32.partialorder %v3194, 0.0
        %vm3231 = vcmp.gt.f32.partialorder %v3195, 0.0
        %vm3232 = vcmp.gt.f32.partialorder %v3196, 0.0
        %vm3233 = vcmp.gt.f32.partialorder %v3197, 0.0
        %vm3234 = vcmp.gt.f32.partialorder %v3198, 0.0
        %vm3235 = vcmp.gt.f32.partialorder %v3199, 0.0
        %vm3236 = vcmp.gt.f32.partialorder %v3200, 0.0
        %vm3237 = vcmp.gt.f32.partialorder %v3201, 0.0
        %vm3238 = vcmp.gt.f32.partialorder %v3202, 0.0
        %vm3239 = vcmp.gt.f32.partialorder %v3203, 0.0
        %vm3240 = vcmp.gt.f32.partialorder %v3204, 0.0
        %vm3241 = vcmp.gt.f32.partialorder %v3205, 0.0
        %v3242 = vmul.f32 %v3170, 0.1
        %v3243 = vmul.f32 %v3171, 0.1
        %v3244 = vmul.f32 %v3172, 0.1
        %v3245 = vmul.f32 %v3173, 0.1
        %v3246 = vmul.f32 %v3174, 0.1
        %v3247 = vmul.f32 %v3175, 0.1
        %v3248 = vmul.f32 %v3176, 0.1
        %v3249 = vmul.f32 %v3177, 0.1
        %v3250 = vmul.f32 %v3178, 0.1
        %v3251 = vmul.f32 %v3179, 0.1
        %v3252 = vmul.f32 %v3180, 0.1
        %v3253 = vmul.f32 %v3181, 0.1
        %v3254 = vmul.f32 %v3182, 0.1
        %v3255 = vmul.f32 %v3183, 0.1
        %v3256 = vmul.f32 %v3184, 0.1
        %v3257 = vmul.f32 %v3185, 0.1
        %v3258 = vmul.f32 %v3186, 0.1
        %v3259 = vmul.f32 %v3187, 0.1
        %v3260 = vmul.f32 %v3188, 0.1
        %v3261 = vmul.f32 %v3189, 0.1
        %v3262 = vmul.f32 %v3190, 0.1
        %v3263 = vmul.f32 %v3191, 0.1
        %v3264 = vmul.f32 %v3192, 0.1
        %v3265 = vmul.f32 %v3193, 0.1
        %v3266 = vmul.f32 %v3194, 0.1
        %v3267 = vmul.f32 %v3195, 0.1
        %v3268 = vmul.f32 %v3196, 0.1
        %v3269 = vmul.f32 %v3197, 0.1
        %v3270 = vmul.f32 %v3198, 0.1
        %v3271 = vmul.f32 %v3199, 0.1
        %v3272 = vmul.f32 %v3200, 0.1
        %v3273 = vmul.f32 %v3201, 0.1
        %v3274 = vmul.f32 %v3202, 0.1
        %v3275 = vmul.f32 %v3203, 0.1
        %v3276 = vmul.f32 %v3204, 0.1
        %v3277 = vmul.f32 %v3205, 0.1
        %v3278 = vsel %vm3206, %v3170, %v3242
        %v3279 = vsel %vm3207, %v3171, %v3243
        %v3280 = vsel %vm3208, %v3172, %v3244
        %v3281 = vsel %vm3209, %v3173, %v3245
        %v3282 = vsel %vm3210, %v3174, %v3246
        %v3283 = vsel %vm3211, %v3175, %v3247
        %v3284 = vsel %vm3212, %v3176, %v3248
        %v3285 = vsel %vm3213, %v3177, %v3249
        %v3286 = vsel %vm3214, %v3178, %v3250
        %v3287 = vsel %vm3215, %v3179, %v3251
        %v3288 = vsel %vm3216, %v3180, %v3252
        %v3289 = vsel %vm3217, %v3181, %v3253
        %v3290 = vsel %vm3218, %v3182, %v3254
        %v3291 = vsel %vm3219, %v3183, %v3255
        %v3292 = vsel %vm3220, %v3184, %v3256
        %v3293 = vsel %vm3221, %v3185, %v3257
        %v3294 = vsel %vm3222, %v3186, %v3258
        %v3295 = vsel %vm3223, %v3187, %v3259
        %v3296 = vsel %vm3224, %v3188, %v3260
        %v3297 = vsel %vm3225, %v3189, %v3261
        %v3298 = vsel %vm3226, %v3190, %v3262
        %v3299 = vsel %vm3227, %v3191, %v3263
        %v3300 = vsel %vm3228, %v3192, %v3264
        %v3301 = vsel %vm3229, %v3193, %v3265
        %v3302 = vsel %vm3230, %v3194, %v3266
        %v3303 = vsel %vm3231, %v3195, %v3267
        %v3304 = vsel %vm3232, %v3196, %v3268
        %v3305 = vsel %vm3233, %v3197, %v3269
        %v3306 = vsel %vm3234, %v3198, %v3270
        %v3307 = vsel %vm3235, %v3199, %v3271
        %v3308 = vsel %vm3236, %v3200, %v3272
        %v3309 = vsel %vm3237, %v3201, %v3273
        %v3310 = vsel %vm3238, %v3202, %v3274
        %v3311 = vsel %vm3239, %v3203, %v3275
        %v3312 = vsel %vm3240, %v3204, %v3276
        %v3313 = vsel %vm3241, %v3205, %v3277
        %v3314 = vpack.c.bf16 %v3279, %v3278
        %v3315 = vpack.c.bf16 %v3281, %v3280
        %v3316 = vpack.c.bf16 %v3283, %v3282
        %v3317 = vpack.c.bf16 %v3285, %v3284
        %v3318 = vpack.c.bf16 %v3287, %v3286
        %v3319 = vpack.c.bf16 %v3289, %v3288
        %v3320 = vpack.c.bf16 %v3291, %v3290
        %v3321 = vpack.c.bf16 %v3293, %v3292
        %v3322 = vpack.c.bf16 %v3295, %v3294
        %v3323 = vpack.c.bf16 %v3297, %v3296
        %v3324 = vpack.c.bf16 %v3299, %v3298
        %v3325 = vpack.c.bf16 %v3301, %v3300
        %v3326 = vpack.c.bf16 %v3303, %v3302
        %v3327 = vpack.c.bf16 %v3305, %v3304
        %v3328 = vpack.c.bf16 %v3307, %v3306
        %v3329 = vpack.c.bf16 %v3309, %v3308
        %v3330 = vpack.c.bf16 %v3311, %v3310
        %v3331 = vpack.c.bf16 %v3313, %v3312
        %v3332 = vld [vmem:[%s3] sm:$0xf]
        %v3333 = vld [vmem:[%s3 + $0x4] sm:$0xf]
        %v3334 = vld [vmem:[%s3 + $0x8] sm:$0xf]
        %v3335 = vld [vmem:[%s3 + $0xc] sm:$0xf]
        %v3336 = vld [vmem:[%s3 + $0x10] sm:$0xf]
        %v3337 = vld [vmem:[%s3 + $0x14] sm:$0xf]
        %v3338 = vld [vmem:[%s3 + $0x18] sm:$0xf]
        %v3339 = vld [vmem:[%s3 + $0x1c] sm:$0xf]
        %v3340 = vld [vmem:[%s3 + $0x20] sm:$0xf]
        %v3341 = vld [vmem:[%s3 + $0x24] sm:$0xf]
        %v3342 = vld [vmem:[%s3 + $0x28] sm:$0xf]
        %v3343 = vld [vmem:[%s3 + $0x2c] sm:$0xf]
        %v3344 = vld [vmem:[%s3 + $0x30] sm:$0xf]
        %v3345 = vld [vmem:[%s3 + $0x34] sm:$0xf]
        %v3346 = vld [vmem:[%s3 + $0x38] sm:$0xf]
        %v3347 = vld [vmem:[%s3 + $0x3c] sm:$0xf]
        %v3348 = vld [vmem:[%s4] sm:$0x1]
        %v3350 = vperm.slane %v3348, 0
        %v3368 = vunpack.c.l.b16 %v3332
        %v3369 = vunpack.c.l.b16 %v3333
        %v3370 = vunpack.c.l.b16 %v3334
        %v3371 = vunpack.c.l.b16 %v3335
        %v3372 = vunpack.c.l.b16 %v3336
        %v3373 = vunpack.c.l.b16 %v3337
        %v3374 = vunpack.c.l.b16 %v3338
        %v3375 = vunpack.c.l.b16 %v3339
        %v3376 = vunpack.c.l.b16 %v3340
        %v3377 = vunpack.c.l.b16 %v3341
        %v3378 = vunpack.c.l.b16 %v3342
        %v3379 = vunpack.c.l.b16 %v3343
        %v3380 = vunpack.c.l.b16 %v3344
        %v3381 = vunpack.c.l.b16 %v3345
        %v3382 = vunpack.c.l.b16 %v3346
        %v3383 = vunpack.c.l.b16 %v3347
        %v3384 = vpack.c.b16 %v3369, %v3368
        %v3385 = vpack.c.b16 %v3371, %v3370
        %v3386 = vpack.c.b16 %v3373, %v3372
        %v3387 = vpack.c.b16 %v3375, %v3374
        %v3388 = vpack.c.b16 %v3377, %v3376
        %v3389 = vpack.c.b16 %v3379, %v3378
        %v3390 = vpack.c.b16 %v3381, %v3380
        %v3391 = vpack.c.b16 %v3383, %v3382
        %3400 = vmatpush.bf16.msra.mxu0 %v3391
        %3401 = vmatpush.bf16.msra.mxu0 %v3390
        %3402 = vmatpush.bf16.msra.mxu0 %v3389
        %3403 = vmatpush.bf16.msra.mxu0 %v3388
        %3404 = vmatpush.bf16.msra.mxu0 %v3387
        %3405 = vmatpush.bf16.msra.mxu0 %v3386
        %3406 = vmatpush.bf16.msra.mxu0 %v3385
        %3407 = vmatpush.bf16.msra.mxu0 %v3384
        %3408 = vmatmul.bf16.gmra.mxu0 %v3314
        %v3409 = vpop.f32.mrf.mxu0
        %v3410 = vadd.f32 %v3350, %v3409
        %v3411 = vpop.f32.mrf.mxu0
        %v3412 = vadd.f32 %v3350, %v3411
        %3413 = vmatmul.bf16.gmra.mxu0 %v3315
        %v3414 = vpop.f32.mrf.mxu0
        %v3415 = vadd.f32 %v3350, %v3414
        %v3416 = vpop.f32.mrf.mxu0
        %v3417 = vadd.f32 %v3350, %v3416
        %3418 = vmatmul.bf16.gmra.mxu0 %v3316
        %v3419 = vpop.f32.mrf.mxu0
        %v3420 = vadd.f32 %v3350, %v3419
        %v3421 = vpop.f32.mrf.mxu0
        %v3422 = vadd.f32 %v3350, %v3421
        %3423 = vmatmul.bf16.gmra.mxu0 %v3317
        %v3424 = vpop.f32.mrf.mxu0
        %v3425 = vadd.f32 %v3350, %v3424
        %v3426 = vpop.f32.mrf.mxu0
        %v3427 = vadd.f32 %v3350, %v3426
        %3428 = vmatmul.bf16.gmra.mxu0 %v3318
        %v3429 = vpop.f32.mrf.mxu0
        %v3430 = vadd.f32 %v3350, %v3429
        %v3431 = vpop.f32.mrf.mxu0
        %v3432 = vadd.f32 %v3350, %v3431
        %3433 = vmatmul.bf16.gmra.mxu0 %v3319
        %v3434 = vpop.f32.mrf.mxu0
        %v3435 = vadd.f32 %v3350, %v3434
        %v3436 = vpop.f32.mrf.mxu0
        %v3437 = vadd.f32 %v3350, %v3436
        %3438 = vmatmul.bf16.gmra.mxu0 %v3320
        %v3439 = vpop.f32.mrf.mxu0
        %v3440 = vadd.f32 %v3350, %v3439
        %v3441 = vpop.f32.mrf.mxu0
        %v3442 = vadd.f32 %v3350, %v3441
        %3443 = vmatmul.bf16.gmra.mxu0 %v3321
        %v3444 = vpop.f32.mrf.mxu0
        %v3445 = vadd.f32 %v3350, %v3444
        %v3446 = vpop.f32.mrf.mxu0
        %v3447 = vadd.f32 %v3350, %v3446
        %3448 = vmatmul.bf16.gmra.mxu0 %v3322
        %v3449 = vpop.f32.mrf.mxu0
        %v3450 = vadd.f32 %v3350, %v3449
        %v3451 = vpop.f32.mrf.mxu0
        %v3452 = vadd.f32 %v3350, %v3451
        %3453 = vmatmul.bf16.gmra.mxu0 %v3323
        %v3454 = vpop.f32.mrf.mxu0
        %v3455 = vadd.f32 %v3350, %v3454
        %v3456 = vpop.f32.mrf.mxu0
        %v3457 = vadd.f32 %v3350, %v3456
        %3458 = vmatmul.bf16.gmra.mxu0 %v3324
        %v3459 = vpop.f32.mrf.mxu0
        %v3460 = vadd.f32 %v3350, %v3459
        %v3461 = vpop.f32.mrf.mxu0
        %v3462 = vadd.f32 %v3350, %v3461
        %3463 = vmatmul.bf16.gmra.mxu0 %v3325
        %v3464 = vpop.f32.mrf.mxu0
        %v3465 = vadd.f32 %v3350, %v3464
        %v3466 = vpop.f32.mrf.mxu0
        %v3467 = vadd.f32 %v3350, %v3466
        %3468 = vmatmul.bf16.gmra.mxu0 %v3326
        %v3469 = vpop.f32.mrf.mxu0
        %v3470 = vadd.f32 %v3350, %v3469
        %v3471 = vpop.f32.mrf.mxu0
        %v3472 = vadd.f32 %v3350, %v3471
        %3473 = vmatmul.bf16.gmra.mxu0 %v3327
        %v3474 = vpop.f32.mrf.mxu0
        %v3475 = vadd.f32 %v3350, %v3474
        %v3476 = vpop.f32.mrf.mxu0
        %v3477 = vadd.f32 %v3350, %v3476
        %3478 = vmatmul.bf16.gmra.mxu0 %v3328
        %v3479 = vpop.f32.mrf.mxu0
        %v3480 = vadd.f32 %v3350, %v3479
        %v3481 = vpop.f32.mrf.mxu0
        %v3482 = vadd.f32 %v3350, %v3481
        %3483 = vmatmul.bf16.gmra.mxu0 %v3329
        %v3484 = vpop.f32.mrf.mxu0
        %v3485 = vadd.f32 %v3350, %v3484
        %v3486 = vpop.f32.mrf.mxu0
        %v3487 = vadd.f32 %v3350, %v3486
        %3488 = vmatmul.bf16.gmra.mxu0 %v3330
        %v3489 = vpop.f32.mrf.mxu0
        %v3490 = vadd.f32 %v3350, %v3489
        %v3491 = vpop.f32.mrf.mxu0
        %v3492 = vadd.f32 %v3350, %v3491
        %3493 = vmatmul.bf16.gmra.mxu0 %v3331
        %v3494 = vpop.f32.mrf.mxu0
        %v3495 = vadd.f32 %v3350, %v3494
        %v3496 = vpop.f32.mrf.mxu0
        %v3497 = vadd.f32 %v3350, %v3496
        %3498 = vdwg.mxu0
        %3499 = vst [vmem:[%s217] sm:$0xff] %v3410
        %3500 = vst [vmem:[%s217 + $0x8] sm:$0xff] %v3412
        %3501 = vst [vmem:[%s217 + $0x10] sm:$0xff] %v3415
        %3502 = vst [vmem:[%s217 + $0x18] sm:$0xff] %v3417
        %3503 = vst [vmem:[%s217 + $0x20] sm:$0xff] %v3420
        %3504 = vst [vmem:[%s217 + $0x28] sm:$0xff] %v3422
        %3505 = vst [vmem:[%s217 + $0x30] sm:$0xff] %v3425
        %3506 = vst [vmem:[%s217 + $0x38] sm:$0xff] %v3427
        %3507 = vst [vmem:[%s217 + $0x40] sm:$0xff] %v3430
        %3508 = vst [vmem:[%s217 + $0x48] sm:$0xff] %v3432
        %3509 = vst [vmem:[%s217 + $0x50] sm:$0xff] %v3435
        %3510 = vst [vmem:[%s217 + $0x58] sm:$0xff] %v3437
        %3511 = vst [vmem:[%s217 + $0x60] sm:$0xff] %v3440
        %3512 = vst [vmem:[%s217 + $0x68] sm:$0xff] %v3442
        %3513 = vst [vmem:[%s217 + $0x70] sm:$0xff] %v3445
        %3514 = vst [vmem:[%s217 + $0x78] sm:$0xff] %v3447
        %3515 = vst [vmem:[%s217 + $0x80] sm:$0xff] %v3450
        %3516 = vst [vmem:[%s217 + $0x88] sm:$0xff] %v3452
        %3517 = vst [vmem:[%s217 + $0x90] sm:$0xff] %v3455
        %3518 = vst [vmem:[%s217 + $0x98] sm:$0xff] %v3457
        %3519 = vst [vmem:[%s217 + $0xa0] sm:$0xff] %v3460
        %3520 = vst [vmem:[%s217 + $0xa8] sm:$0xff] %v3462
        %3521 = vst [vmem:[%s217 + $0xb0] sm:$0xff] %v3465
        %3522 = vst [vmem:[%s217 + $0xb8] sm:$0xff] %v3467
        %3523 = vst [vmem:[%s217 + $0xc0] sm:$0xff] %v3470
        %3524 = vst [vmem:[%s217 + $0xc8] sm:$0xff] %v3472
        %3525 = vst [vmem:[%s217 + $0xd0] sm:$0xff] %v3475
        %3526 = vst [vmem:[%s217 + $0xd8] sm:$0xff] %v3477
        %3527 = vst [vmem:[%s217 + $0xe0] sm:$0xff] %v3480
        %3528 = vst [vmem:[%s217 + $0xe8] sm:$0xff] %v3482
        %3529 = vst [vmem:[%s217 + $0xf0] sm:$0xff] %v3485
        %3530 = vst [vmem:[%s217 + $0xf8] sm:$0xff] %v3487
        %3531 = vst [vmem:[%s217 + $0x100] sm:$0xff] %v3490
        %3532 = vst [vmem:[%s217 + $0x108] sm:$0xff] %v3492
        %3533 = vst [vmem:[%s217 + $0x110] sm:$0xff] %v3495
        %3534 = vst [vmem:[%s217 + $0x118] sm:$0xff] %v3497
        %s3535 = sand.u32 %s137, 1
        %s3536 = scalar_lea.sflag [#allocation4], %s3535
        %s3537 = sand.u32 %s137, 1
        %s3538 = smul.addr %s3537, 288
        %s3539 = scalar_lea.vmem [#allocation3], %s3538
        // Predicated region
        $region41: #{tpu_custom_call.1} parent=39 // pred_check
          %p3540 = pneg %p147
        $region42: #{tpu_custom_call.1} parent=39 // pred_check_branch
          %3542 = sbr.rel (%p3540) target = $region44
        $region43: #{tpu_custom_call.1} parent=39 // pred_region
          %3544 = vsyncadd %s3536, 0
          %s3545 = smul.addr %s19, 36
          %s3546 = smul.addr %s3545, 8
          %s3547 = scalar_lea.hbm %s5, %s3546
          %s3548 = sshll.u32 %s3539, 4
          %s3549 = int_to_ptr.vmem [resolvable:$true] %s3548
          %s3550 = sshll.u32 %s3547, 4
          %s3551 = int_to_ptr.hbm [resolvable:$true] %s3550
          %3556 = dma.vmem_to_hbm [thread:$0]  %s3549, 4608, %s3551, %s3536, 128, 128, 8
        $region44: #{tpu_custom_call.1} parent=39 // pred_fallthru
          _
      $region40: #{tpu_custom_call.1} parent=5 // pred_fallthru
        _
      %p3557 = scmp.le.s32.totalorder 2, %s14
      // Predicated region
      $region45: #{tpu_custom_call.1} parent=5 // pred_check
        %p3558 = pneg %p3557
      $region46: #{tpu_custom_call.1} parent=5 // pred_check_branch
        %3560 = sbr.rel (%p3558) target = $region48
      $region47: #{tpu_custom_call.1} parent=5 // pred_region
        %s3561 = ssub.s32 %s14, 2
        // Predicated region
        $region49: #{tpu_custom_call.1} parent=47 // pred_check
          %p3562 = pneg %p153
        $region50: #{tpu_custom_call.1} parent=47 // pred_check_branch
          %3564 = sbr.rel (%p3562) target = $region52
        $region51: #{tpu_custom_call.1} parent=47 // pred_region
          %s3565 = sand.u32 %s138, 1
          %s3566 = scalar_lea.sflag [#allocation4], %s3565
          %s3567 = sand.u32 %s138, 1
          %s3568 = smul.addr %s3567, 288
          %s3569 = scalar_lea.vmem [#allocation3], %s3568
          %3571 = dma.done %s3566, 4608
        $region52: #{tpu_custom_call.1} parent=47 // pred_fallthru
          _
      $region48: #{tpu_custom_call.1} parent=5 // pred_fallthru
        _
    $region6: #{tpu_custom_call.1} parent=1 // loop_footer
      %s18 = sadd.s32 1, %s14
    $region7: #{tpu_custom_call.1} parent=1 // loop_footer_branch
      %13 = sbr.rel target = $region3
    $region8: #{tpu_custom_call.1} parent=1 // loop_exit
      _
    %3572 = vsyncpa [#allocation4], 1
    %s3573 = scalar_lea.sflag [#allocation4], 1
    %3574 = vsyncpa %s3573, 1

</llo_original>
